<compile_context>
chip_gen: v7x
topology: tpu7x:2x2x1
jax: 0.10.0
libtpu: 0.0.40
codegen_flags: <defaults>
</compile_context>

<pallas_src>
import functools

import jax
import jax.numpy as jnp
from jax.experimental import pallas as pl
from jax.experimental.pallas import tpu as pltpu


def autoencoder_kernel(
    x_ref,
    w1_ref, b1_ref,
    w2_ref, b2_ref,
    w34_ref, b34_ref,
    w5_ref, b5_ref,
    w6_ref, b6_ref,
    out_ref,
):
    # Cast to bf16 on-chip (MXU-native operand format); accumulate / bias /
    # activations stay in f32.
    x = x_ref[...].astype(jnp.bfloat16)                              # (tb, 784)

    # ---- encoder ----
    h = jnp.dot(x, w1_ref[...], preferred_element_type=jnp.float32) + b1_ref[...]
    h = jnp.maximum(h, 0.0).astype(jnp.bfloat16)                     # (tb, 256)
    h = jnp.dot(h, w2_ref[...], preferred_element_type=jnp.float32) + b2_ref[...]
    h = jnp.maximum(h, 0.0).astype(jnp.bfloat16)                     # (tb, 32)

    # ---- fused bottleneck (Linear 32->2 then Linear 2->32, no activation
    #      in between == one 32x32 affine map), then decoder ----
    d = jnp.dot(h, w34_ref[...], preferred_element_type=jnp.float32) + b34_ref[...]
    d = jnp.maximum(d, 0.0).astype(jnp.bfloat16)                     # (tb, 32)
    d = jnp.dot(d, w5_ref[...], preferred_element_type=jnp.float32) + b5_ref[...]
    d = jnp.maximum(d, 0.0).astype(jnp.bfloat16)                     # (tb, 256)
    d = jnp.dot(d, w6_ref[...], preferred_element_type=jnp.float32) + b6_ref[...]
    out_ref[...] = jax.nn.sigmoid(d).astype(out_ref.dtype)           # (tb, 784)


def _round_up(n, m):
    return ((n + m - 1) // m) * m


def _pick_tile_b(batch):
    """>=4 grid steps when possible (2 per v7x TensorCore), rows a multiple of
    16 (bf16 sublane packing), capped at 512 rows (good HBM-roofline tile)."""
    tb = _round_up(max(pl.cdiv(batch, 4), 16), 16)
    return min(tb, 512)


def prepare_params(params):
    """One-time weight prep (keep out of the per-call jitted path):
      * exact fusion of the linear bottleneck 32->2->32 into a 32x32 layer,
      * bf16 weights for the MXU, f32 biases for the f32 epilogue.
    NOTE: the fusion is exact only because there is no activation between
    encoder[-1] and decoder[0] in the AutoEncoder module."""
    (w1, b1), (w2, b2), (w3, b3), (w4, b4), (w5, b5), (w6, b6) = params
    w34 = w3 @ w4                 # (32, 32)
    b34 = b3 @ w4 + b4            # (1, 32)
    prepped = []
    for w, b in ((w1, b1), (w2, b2), (w34, b34), (w5, b5), (w6, b6)):
        prepped.append(jnp.asarray(w, jnp.bfloat16))
        prepped.append(jnp.asarray(b, jnp.float32))
    return tuple(prepped)


@functools.partial(jax.jit, static_argnames=("tile_b", "out_dtype"))
def autoencoder_forward(x, prepped_params, *, tile_b=None, out_dtype=jnp.bfloat16):
    """x: (B, D) float32. prepped_params: output of prepare_params()."""
    B, D = x.shape

    tb = tile_b if tile_b is not None else _pick_tile_b(B)
    tb = min(tb, _round_up(B, 16))
    tb = _round_up(tb, 16)
    B_pad = _round_up(B, tb)

    if B_pad != B:
        x = jnp.pad(x, ((0, B_pad - B), (0, 0)))

    # VMEM budget: double-buffered x / out tiles + (double-buffered) weights
    # + margin for temps; no blanket 48 MiB.
    x_tile_bytes = tb * D * x.dtype.itemsize
    out_tile_bytes = tb * D * jnp.dtype(out_dtype).itemsize
    weight_bytes = sum(int(a.size) * a.dtype.itemsize for a in prepped_params)
    vmem_bytes = 2 * (x_tile_bytes + out_tile_bytes) + 2 * weight_bytes + (6 << 20)
    vmem_bytes = int(min(max(vmem_bytes, 16 << 20), 64 << 20))

    def full_spec(a):
        # Constant index map: block stays VMEM-resident across the whole grid.
        return pl.BlockSpec(a.shape, lambda i: (0, 0))

    in_specs = [pl.BlockSpec((tb, D), lambda i: (i, 0))]
    in_specs += [full_spec(a) for a in prepped_params]
    out_spec = pl.BlockSpec((tb, D), lambda i: (i, 0))

    out = pl.pallas_call(
        autoencoder_kernel,
        out_shape=jax.ShapeDtypeStruct((B_pad, D), out_dtype),
        grid_spec=pltpu.PrefetchScalarGridSpec(
            num_scalar_prefetch=0,
            grid=(B_pad // tb,),
            in_specs=in_specs,
            out_specs=out_spec,
        ),
        compiler_params=pltpu.CompilerParams(
            dimension_semantics=("parallel",),
            vmem_limit_bytes=vmem_bytes,
        ),
    )(x, *prepped_params)

    return out[:B] if B_pad != B else out


def init_linear(key, fan_in, fan_out):
    """Deterministic PyTorch-style nn.Linear init: U(-1/sqrt(fan_in), 1/sqrt(fan_in))."""
    kw, kb = jax.random.split(key)
    bound = 1.0 / jnp.sqrt(fan_in)
    # Stored as (in, out) so the kernel computes x @ W (== x @ W_pt.T).
    w = jax.random.uniform(kw, (fan_in, fan_out), jnp.float32, -bound, bound)
    b = jax.random.uniform(kb, (1, fan_out), jnp.float32, -bound, bound)
    return w, b


def init_autoencoder_params(key, input_dim):
    dims = [
        (input_dim, 256),  # encoder.0
        (256, 32),         # encoder.2
        (32, 2),           # encoder.4
        (2, 32),           # decoder.0
        (32, 256),         # decoder.2
        (256, input_dim),  # decoder.4
    ]
    keys = jax.random.split(key, len(dims))
    return [init_linear(k, fi, fo) for k, (fi, fo) in zip(keys, dims)]


def reference_forward(x, params):
    """Pure f32 reference matching the original PyTorch AutoEncoder exactly."""
    (w1, b1), (w2, b2), (w3, b3), (w4, b4), (w5, b5), (w6, b6) = params
    h = jnp.maximum(x @ w1 + b1, 0.0)
    h = jnp.maximum(h @ w2 + b2, 0.0)
    z = h @ w3 + b3
    d = jnp.maximum(z @ w4 + b4, 0.0)
    d = jnp.maximum(d @ w5 + b5, 0.0)
    return jax.nn.sigmoid(d @ w6 + b6)


if __name__ == "__main__":
    key = jax.random.PRNGKey(0)
    k_x, k_p = jax.random.split(key)

    B = 256                  # auto tile -> tile_b=64, grid=4 (>=2 steps per v7x TC)
    INPUT_DIM = 28 * 28      # as the module is instantiated with 28*28

    x = jax.random.normal(k_x, (B, INPUT_DIM), dtype=jnp.float32)
    params = init_autoencoder_params(k_p, INPUT_DIM)
    prepped = prepare_params(params)     # one-time weight prep, outside jitted forward

    out = autoencoder_forward(x, prepped)
    out = jax.block_until_ready(out)

    ref = reference_forward(x, params)
    assert out.shape == (B, INPUT_DIM)
    # bf16 MXU operands + bf16 output of a sigmoid in [0,1]: bf16-appropriate tolerance.
    assert jnp.allclose(out.astype(jnp.float32), ref, atol=2e-2, rtol=0.0)

    print("KERNEL_OK")
</pallas_src>

<mosaic_0001>
module attributes {stable_mosaic.version = 11 : i64} {
  func.func @autoencoder_kernel(%arg0: i32, %arg1: memref<64x784xf32, #tpu.memory_space<vmem>>, %arg2: memref<784x256xbf16, #tpu.memory_space<vmem>>, %arg3: memref<1x256xf32, #tpu.memory_space<vmem>>, %arg4: memref<256x32xbf16, #tpu.memory_space<vmem>>, %arg5: memref<1x32xf32, #tpu.memory_space<vmem>>, %arg6: memref<32x32xbf16, #tpu.memory_space<vmem>>, %arg7: memref<1x32xf32, #tpu.memory_space<vmem>>, %arg8: memref<32x256xbf16, #tpu.memory_space<vmem>>, %arg9: memref<1x256xf32, #tpu.memory_space<vmem>>, %arg10: memref<256x784xbf16, #tpu.memory_space<vmem>>, %arg11: memref<1x784xf32, #tpu.memory_space<vmem>>, %arg12: memref<64x784xbf16, #tpu.memory_space<vmem>>) attributes {dimension_semantics = [#tpu.dimension_semantics<parallel>], iteration_bounds = array<i64: 4>, scalar_prefetch = 0 : i64, scratch_operands = 0 : i64, tpu.core_type = #tpu.core_type<tc>, window_params = [{transform_indices = @transform_0, window_bounds = array<i64: 64, 784>}, {pipeline_mode = #tpu.pipeline_mode<synchronous>, transform_indices = @transform_1, window_bounds = array<i64: 784, 256>}, {pipeline_mode = #tpu.pipeline_mode<synchronous>, transform_indices = @transform_2, window_bounds = array<i64: 1, 256>}, {pipeline_mode = #tpu.pipeline_mode<synchronous>, transform_indices = @transform_3, window_bounds = array<i64: 256, 32>}, {pipeline_mode = #tpu.pipeline_mode<synchronous>, transform_indices = @transform_4, window_bounds = array<i64: 1, 32>}, {pipeline_mode = #tpu.pipeline_mode<synchronous>, transform_indices = @transform_5, window_bounds = array<i64: 32, 32>}, {pipeline_mode = #tpu.pipeline_mode<synchronous>, transform_indices = @transform_6, window_bounds = array<i64: 1, 32>}, {pipeline_mode = #tpu.pipeline_mode<synchronous>, transform_indices = @transform_7, window_bounds = array<i64: 32, 256>}, {pipeline_mode = #tpu.pipeline_mode<synchronous>, transform_indices = @transform_8, window_bounds = array<i64: 1, 256>}, {pipeline_mode = #tpu.pipeline_mode<synchronous>, transform_indices = @transform_9, window_bounds = array<i64: 256, 784>}, {pipeline_mode = #tpu.pipeline_mode<synchronous>, transform_indices = @transform_10, window_bounds = array<i64: 1, 784>}, {transform_indices = @transform_11, window_bounds = array<i64: 64, 784>}]} {
    %c0 = arith.constant 0 : index
    %c0_0 = arith.constant 0 : index
    %0 = vector.load %arg1[%c0, %c0_0] : memref<64x784xf32, #tpu.memory_space<vmem>>, vector<64x784xf32>
    %1 = arith.truncf %0 : vector<64x784xf32> to vector<64x784xbf16>
    %c0_1 = arith.constant 0 : index
    %c0_2 = arith.constant 0 : index
    %2 = vector.load %arg2[%c0_1, %c0_2] : memref<784x256xbf16, #tpu.memory_space<vmem>>, vector<784x256xbf16>
    %cst = arith.constant dense<0.000000e+00> : vector<64x256xf32>
    %3 = tpu.matmul %1, %2, %cst {dimension_numbers = #tpu.dot_dimension_numbers<[1], [0], [0], [1], [0, 0, 1, 1], [], []>} : vector<64x784xbf16>, vector<784x256xbf16>, vector<64x256xf32> -> vector<64x256xf32>
    %c0_3 = arith.constant 0 : index
    %c0_4 = arith.constant 0 : index
    %4 = vector.load %arg3[%c0_3, %c0_4] : memref<1x256xf32, #tpu.memory_space<vmem>>, vector<1x256xf32>
    %5 = vector.broadcast %4 : vector<1x256xf32> to vector<64x256xf32>
    %6 = arith.addf %3, %5 : vector<64x256xf32>
    %cst_5 = arith.constant 0.000000e+00 : f32
    %7 = vector.broadcast %cst_5 : f32 to vector<64x256xf32>
    %8 = arith.maximumf %6, %7 : vector<64x256xf32>
    %9 = arith.truncf %8 : vector<64x256xf32> to vector<64x256xbf16>
    %c0_6 = arith.constant 0 : index
    %c0_7 = arith.constant 0 : index
    %10 = vector.load %arg4[%c0_6, %c0_7] : memref<256x32xbf16, #tpu.memory_space<vmem>>, vector<256x32xbf16>
    %cst_8 = arith.constant dense<0.000000e+00> : vector<64x32xf32>
    %11 = tpu.matmul %9, %10, %cst_8 {dimension_numbers = #tpu.dot_dimension_numbers<[1], [0], [0], [1], [0, 0, 1, 1], [], []>} : vector<64x256xbf16>, vector<256x32xbf16>, vector<64x32xf32> -> vector<64x32xf32>
    %c0_9 = arith.constant 0 : index
    %c0_10 = arith.constant 0 : index
    %12 = vector.load %arg5[%c0_9, %c0_10] : memref<1x32xf32, #tpu.memory_space<vmem>>, vector<1x32xf32>
    %13 = vector.broadcast %12 : vector<1x32xf32> to vector<64x32xf32>
    %14 = arith.addf %11, %13 : vector<64x32xf32>
    %cst_11 = arith.constant 0.000000e+00 : f32
    %15 = vector.broadcast %cst_11 : f32 to vector<64x32xf32>
    %16 = arith.maximumf %14, %15 : vector<64x32xf32>
    %17 = arith.truncf %16 : vector<64x32xf32> to vector<64x32xbf16>
    %c0_12 = arith.constant 0 : index
    %c0_13 = arith.constant 0 : index
    %18 = vector.load %arg6[%c0_12, %c0_13] : memref<32x32xbf16, #tpu.memory_space<vmem>>, vector<32x32xbf16>
    %cst_14 = arith.constant dense<0.000000e+00> : vector<64x32xf32>
    %19 = tpu.matmul %17, %18, %cst_14 {dimension_numbers = #tpu.dot_dimension_numbers<[1], [0], [0], [1], [0, 0, 1, 1], [], []>} : vector<64x32xbf16>, vector<32x32xbf16>, vector<64x32xf32> -> vector<64x32xf32>
    %c0_15 = arith.constant 0 : index
    %c0_16 = arith.constant 0 : index
    %20 = vector.load %arg7[%c0_15, %c0_16] : memref<1x32xf32, #tpu.memory_space<vmem>>, vector<1x32xf32>
    %21 = vector.broadcast %20 : vector<1x32xf32> to vector<64x32xf32>
    %22 = arith.addf %19, %21 : vector<64x32xf32>
    %cst_17 = arith.constant 0.000000e+00 : f32
    %23 = vector.broadcast %cst_17 : f32 to vector<64x32xf32>
    %24 = arith.maximumf %22, %23 : vector<64x32xf32>
    %25 = arith.truncf %24 : vector<64x32xf32> to vector<64x32xbf16>
    %c0_18 = arith.constant 0 : index
    %c0_19 = arith.constant 0 : index
    %26 = vector.load %arg8[%c0_18, %c0_19] : memref<32x256xbf16, #tpu.memory_space<vmem>>, vector<32x256xbf16>
    %cst_20 = arith.constant dense<0.000000e+00> : vector<64x256xf32>
    %27 = tpu.matmul %25, %26, %cst_20 {dimension_numbers = #tpu.dot_dimension_numbers<[1], [0], [0], [1], [0, 0, 1, 1], [], []>} : vector<64x32xbf16>, vector<32x256xbf16>, vector<64x256xf32> -> vector<64x256xf32>
    %c0_21 = arith.constant 0 : index
    %c0_22 = arith.constant 0 : index
    %28 = vector.load %arg9[%c0_21, %c0_22] : memref<1x256xf32, #tpu.memory_space<vmem>>, vector<1x256xf32>
    %29 = vector.broadcast %28 : vector<1x256xf32> to vector<64x256xf32>
    %30 = arith.addf %27, %29 : vector<64x256xf32>
    %cst_23 = arith.constant 0.000000e+00 : f32
    %31 = vector.broadcast %cst_23 : f32 to vector<64x256xf32>
    %32 = arith.maximumf %30, %31 : vector<64x256xf32>
    %33 = arith.truncf %32 : vector<64x256xf32> to vector<64x256xbf16>
    %c0_24 = arith.constant 0 : index
    %c0_25 = arith.constant 0 : index
    %34 = vector.load %arg10[%c0_24, %c0_25] : memref<256x784xbf16, #tpu.memory_space<vmem>>, vector<256x784xbf16>
    %cst_26 = arith.constant dense<0.000000e+00> : vector<64x784xf32>
    %35 = tpu.matmul %33, %34, %cst_26 {dimension_numbers = #tpu.dot_dimension_numbers<[1], [0], [0], [1], [0, 0, 1, 1], [], []>} : vector<64x256xbf16>, vector<256x784xbf16>, vector<64x784xf32> -> vector<64x784xf32>
    %c0_27 = arith.constant 0 : index
    %c0_28 = arith.constant 0 : index
    %36 = vector.load %arg11[%c0_27, %c0_28] : memref<1x784xf32, #tpu.memory_space<vmem>>, vector<1x784xf32>
    %37 = vector.broadcast %36 : vector<1x784xf32> to vector<64x784xf32>
    %38 = arith.addf %35, %37 : vector<64x784xf32>
    %39 = arith.negf %38 : vector<64x784xf32>
    %40 = math.exp %39 : vector<64x784xf32>
    %cst_29 = arith.constant 1.000000e+00 : f32
    %41 = vector.broadcast %cst_29 : f32 to vector<64x784xf32>
    %42 = arith.addf %41, %40 : vector<64x784xf32>
    %43 = arith.divf %41, %42 : vector<64x784xf32>
    %44 = arith.truncf %43 : vector<64x784xf32> to vector<64x784xbf16>
    %c0_30 = arith.constant 0 : index
    %c0_31 = arith.constant 0 : index
    %45 = vector.load %arg12[%c0_30, %c0_31] : memref<64x784xbf16, #tpu.memory_space<vmem>>, vector<64x784xbf16>
    tpu.vector_store %arg12[%c0_30, %c0_31], %44 {strides = array<i32>} : memref<64x784xbf16, #tpu.memory_space<vmem>>, vector<64x784xbf16>,
    return
  }
  func.func @transform_0(%arg0: i32) -> (i32, i32) {
    %c0_i32 = arith.constant 0 : i32
    %c0_i32_0 = arith.constant 0 : i32
    return %arg0, %c0_i32 : i32, i32
  }
  func.func @transform_1(%arg0: i32) -> (i32, i32) {
    %c0_i32 = arith.constant 0 : i32
    %c0_i32_0 = arith.constant 0 : i32
    %c0_i32_1 = arith.constant 0 : i32
    return %c0_i32, %c0_i32_0 : i32, i32
  }
  func.func @transform_2(%arg0: i32) -> (i32, i32) {
    %c0_i32 = arith.constant 0 : i32
    %c0_i32_0 = arith.constant 0 : i32
    %c0_i32_1 = arith.constant 0 : i32
    return %c0_i32, %c0_i32_0 : i32, i32
  }
  func.func @transform_3(%arg0: i32) -> (i32, i32) {
    %c0_i32 = arith.constant 0 : i32
    %c0_i32_0 = arith.constant 0 : i32
    %c0_i32_1 = arith.constant 0 : i32
    return %c0_i32, %c0_i32_0 : i32, i32
  }
  func.func @transform_4(%arg0: i32) -> (i32, i32) {
    %c0_i32 = arith.constant 0 : i32
    %c0_i32_0 = arith.constant 0 : i32
    %c0_i32_1 = arith.constant 0 : i32
    return %c0_i32, %c0_i32_0 : i32, i32
  }
  func.func @transform_5(%arg0: i32) -> (i32, i32) {
    %c0_i32 = arith.constant 0 : i32
    %c0_i32_0 = arith.constant 0 : i32
    %c0_i32_1 = arith.constant 0 : i32
    return %c0_i32, %c0_i32_0 : i32, i32
  }
  func.func @transform_6(%arg0: i32) -> (i32, i32) {
    %c0_i32 = arith.constant 0 : i32
    %c0_i32_0 = arith.constant 0 : i32
    %c0_i32_1 = arith.constant 0 : i32
    return %c0_i32, %c0_i32_0 : i32, i32
  }
  func.func @transform_7(%arg0: i32) -> (i32, i32) {
    %c0_i32 = arith.constant 0 : i32
    %c0_i32_0 = arith.constant 0 : i32
    %c0_i32_1 = arith.constant 0 : i32
    return %c0_i32, %c0_i32_0 : i32, i32
  }
  func.func @transform_8(%arg0: i32) -> (i32, i32) {
    %c0_i32 = arith.constant 0 : i32
    %c0_i32_0 = arith.constant 0 : i32
    %c0_i32_1 = arith.constant 0 : i32
    return %c0_i32, %c0_i32_0 : i32, i32
  }
  func.func @transform_9(%arg0: i32) -> (i32, i32) {
    %c0_i32 = arith.constant 0 : i32
    %c0_i32_0 = arith.constant 0 : i32
    %c0_i32_1 = arith.constant 0 : i32
    return %c0_i32, %c0_i32_0 : i32, i32
  }
  func.func @transform_10(%arg0: i32) -> (i32, i32) {
    %c0_i32 = arith.constant 0 : i32
    %c0_i32_0 = arith.constant 0 : i32
    %c0_i32_1 = arith.constant 0 : i32
    return %c0_i32, %c0_i32_0 : i32, i32
  }
  func.func @transform_11(%arg0: i32) -> (i32, i32) {
    %c0_i32 = arith.constant 0 : i32
    %c0_i32_0 = arith.constant 0 : i32
    return %arg0, %c0_i32 : i32, i32
  }
}

</mosaic_0001>

<llo_original>
// kernel: autoencoder_forward.1
$region0: #{autoencoder_forward.1}
  #allocation0 [shape = 'u32[]', space=smem, size = 0x4, offset = 0x4, fixed_abs, tag = 'smem constant byte address 0x4 - core index']
  #allocation1 [shape = 'u32[144,128]{1,0:T(1,128)}', space=vmem, size = 0x12000, scoped, tag = 'internal scratch']
  %s0 = inlined_call_operand.vmem [shape: f32[256,784], index: 0, kind: input, shape index: {}]
  %s1 = inlined_call_operand.vmem [shape: bf16[784,256], index: 1, kind: input, shape index: {}]
  %s2 = inlined_call_operand.vmem [shape: f32[1,256], index: 2, kind: input, shape index: {}]
  %s3 = inlined_call_operand.vmem [shape: bf16[256,32], index: 3, kind: input, shape index: {}]
  %s4 = inlined_call_operand.vmem [shape: f32[1,32], index: 4, kind: input, shape index: {}]
  %s5 = inlined_call_operand.vmem [shape: bf16[32,32], index: 5, kind: input, shape index: {}]
  %s6 = inlined_call_operand.vmem [shape: f32[1,32], index: 6, kind: input, shape index: {}]
  %s7 = inlined_call_operand.vmem [shape: bf16[32,256], index: 7, kind: input, shape index: {}]
  %s8 = inlined_call_operand.vmem [shape: f32[1,256], index: 8, kind: input, shape index: {}]
  %s9 = inlined_call_operand.vmem [shape: bf16[256,784], index: 9, kind: input, shape index: {}]
  %s10 = inlined_call_operand.vmem [shape: f32[1,784], index: 10, kind: input, shape index: {}]
  %s11 = inlined_call_operand.vmem [shape: bf16[256,784], index: 11, kind: output, shape index: {}]
  %s12 = sld [smem:[#allocation0]]
  $region77: #{autoencoder_forward.1} parent=0
    _
  %s14 = ssub.s32 1, %s12
  %s15 = scalar_select 0, %s14, %s12
  loop: start=0, step=1, limit=6
  $region2: #{autoencoder_forward.1} parent=0 // loop_pre_header
    _
  $region3: #{autoencoder_forward.1} parent=0 // loop_header
    %s17 = sphi 0, %s21
    %p18 = scmp.ge.s32.totalorder %s17, 6
    %s27 = sphi 0, %s29
    %s30 = sphi 0, %s27
    %s31 = sphi 0, %s30
    %s47 = sphi 0, %s31
    %s51 = sphi 0, %s51
    %s53 = sphi 0, %s51
    %s54 = sphi 0, %s53
    %s68 = sphi 0, %s54
    %s72 = sphi 0, %s72
    %s74 = sphi 0, %s72
    %s75 = sphi 0, %s74
    %s89 = sphi 0, %s75
    %s93 = sphi 0, %s93
    %s95 = sphi 0, %s93
    %s96 = sphi 0, %s95
    %s110 = sphi 0, %s96
    %s114 = sphi 0, %s114
    %s116 = sphi 0, %s114
    %s117 = sphi 0, %s116
    %s131 = sphi 0, %s117
    %s135 = sphi 0, %s135
    %s137 = sphi 0, %s135
    %s138 = sphi 0, %s137
    %s152 = sphi 0, %s138
    %s156 = sphi 0, %s156
    %s158 = sphi 0, %s156
    %s159 = sphi 0, %s158
    %s173 = sphi 0, %s159
    %s177 = sphi 0, %s177
    %s179 = sphi 0, %s177
    %s180 = sphi 0, %s179
    %s194 = sphi 0, %s180
    %s198 = sphi 0, %s198
    %s200 = sphi 0, %s198
    %s201 = sphi 0, %s200
    %s215 = sphi 0, %s201
    %s219 = sphi 0, %s219
    %s221 = sphi 0, %s219
    %s222 = sphi 0, %s221
    %s236 = sphi 0, %s222
    %s240 = sphi 0, %s240
    %s242 = sphi 0, %s240
    %s243 = sphi 0, %s242
    %s257 = sphi 0, %s243
    %s263 = sphi 0, %s265
    %s266 = sphi 0, %s263
    %s267 = sphi 0, %s266
    %s283 = sphi 0, %s267
  $region4: #{autoencoder_forward.1} parent=0 // loop_header_branch
    %20 = sbr.rel (%p18) target = $region8
  $region5: #{autoencoder_forward.1} parent=0 // loop_body
    %s22 = ssub.s32 %s17, 1
    %s23 = ssub.s32 %s17, 2
    %s24 = sadd.s32 %s17, 1
    %s25 = ssub.s32 %s17, %s24
    %p26 = scmp.eq.s32.totalorder %s25, 0
    %s28 = sadd.s32 %s27, 1
    %s29 = scalar_select %p26, %s27, %s28
    %p32 = pneg %p26
    %p33 = scmp.eq.s32.totalorder %s17, 3
    %p34 = por %p32, %p33
    %p35 = scmp.ne.s32.totalorder %s27, %s30
    %p36 = scmp.eq.s32.totalorder %s17, 0
    %p37 = por %p35, %p36
    %p38 = scmp.ne.s32.totalorder %s27, %s30
    %p39 = scmp.eq.s32.totalorder %s22, 3
    %p40 = por %p38, %p39
    %p41 = scmp.ne.s32.totalorder %s30, %s31
    %p42 = scmp.eq.s32.totalorder %s22, 0
    %p43 = por %p41, %p42
    %p44 = scmp.ne.s32.totalorder %s30, %s31
    %p45 = scmp.eq.s32.totalorder %s23, 3
    %p46 = por %p44, %p45
    %p48 = scmp.ne.s32.totalorder %s31, %s47
    %p49 = scmp.eq.s32.totalorder %s23, 0
    %p50 = por %p48, %p49
    %s52 = sadd.s32 %s51, 1
    %p55 = scmp.eq.s32.totalorder %s17, 3
    %p56 = scmp.ne.s32.totalorder %s51, %s53
    %p57 = scmp.eq.s32.totalorder %s17, 0
    %p58 = por %p56, %p57
    %p59 = scmp.ne.s32.totalorder %s51, %s53
    %p60 = scmp.eq.s32.totalorder %s22, 3
    %p61 = por %p59, %p60
    %p62 = scmp.ne.s32.totalorder %s53, %s54
    %p63 = scmp.eq.s32.totalorder %s22, 0
    %p64 = por %p62, %p63
    %p65 = scmp.ne.s32.totalorder %s53, %s54
    %p66 = scmp.eq.s32.totalorder %s23, 3
    %p67 = por %p65, %p66
    %p69 = scmp.ne.s32.totalorder %s54, %s68
    %p70 = scmp.eq.s32.totalorder %s23, 0
    %p71 = por %p69, %p70
    %s73 = sadd.s32 %s72, 1
    %p76 = scmp.eq.s32.totalorder %s17, 3
    %p77 = scmp.ne.s32.totalorder %s72, %s74
    %p78 = scmp.eq.s32.totalorder %s17, 0
    %p79 = por %p77, %p78
    %p80 = scmp.ne.s32.totalorder %s72, %s74
    %p81 = scmp.eq.s32.totalorder %s22, 3
    %p82 = por %p80, %p81
    %p83 = scmp.ne.s32.totalorder %s74, %s75
    %p84 = scmp.eq.s32.totalorder %s22, 0
    %p85 = por %p83, %p84
    %p86 = scmp.ne.s32.totalorder %s74, %s75
    %p87 = scmp.eq.s32.totalorder %s23, 3
    %p88 = por %p86, %p87
    %p90 = scmp.ne.s32.totalorder %s75, %s89
    %p91 = scmp.eq.s32.totalorder %s23, 0
    %p92 = por %p90, %p91
    %s94 = sadd.s32 %s93, 1
    %p97 = scmp.eq.s32.totalorder %s17, 3
    %p98 = scmp.ne.s32.totalorder %s93, %s95
    %p99 = scmp.eq.s32.totalorder %s17, 0
    %p100 = por %p98, %p99
    %p101 = scmp.ne.s32.totalorder %s93, %s95
    %p102 = scmp.eq.s32.totalorder %s22, 3
    %p103 = por %p101, %p102
    %p104 = scmp.ne.s32.totalorder %s95, %s96
    %p105 = scmp.eq.s32.totalorder %s22, 0
    %p106 = por %p104, %p105
    %p107 = scmp.ne.s32.totalorder %s95, %s96
    %p108 = scmp.eq.s32.totalorder %s23, 3
    %p109 = por %p107, %p108
    %p111 = scmp.ne.s32.totalorder %s96, %s110
    %p112 = scmp.eq.s32.totalorder %s23, 0
    %p113 = por %p111, %p112
    %s115 = sadd.s32 %s114, 1
    %p118 = scmp.eq.s32.totalorder %s17, 3
    %p119 = scmp.ne.s32.totalorder %s114, %s116
    %p120 = scmp.eq.s32.totalorder %s17, 0
    %p121 = por %p119, %p120
    %p122 = scmp.ne.s32.totalorder %s114, %s116
    %p123 = scmp.eq.s32.totalorder %s22, 3
    %p124 = por %p122, %p123
    %p125 = scmp.ne.s32.totalorder %s116, %s117
    %p126 = scmp.eq.s32.totalorder %s22, 0
    %p127 = por %p125, %p126
    %p128 = scmp.ne.s32.totalorder %s116, %s117
    %p129 = scmp.eq.s32.totalorder %s23, 3
    %p130 = por %p128, %p129
    %p132 = scmp.ne.s32.totalorder %s117, %s131
    %p133 = scmp.eq.s32.totalorder %s23, 0
    %p134 = por %p132, %p133
    %s136 = sadd.s32 %s135, 1
    %p139 = scmp.eq.s32.totalorder %s17, 3
    %p140 = scmp.ne.s32.totalorder %s135, %s137
    %p141 = scmp.eq.s32.totalorder %s17, 0
    %p142 = por %p140, %p141
    %p143 = scmp.ne.s32.totalorder %s135, %s137
    %p144 = scmp.eq.s32.totalorder %s22, 3
    %p145 = por %p143, %p144
    %p146 = scmp.ne.s32.totalorder %s137, %s138
    %p147 = scmp.eq.s32.totalorder %s22, 0
    %p148 = por %p146, %p147
    %p149 = scmp.ne.s32.totalorder %s137, %s138
    %p150 = scmp.eq.s32.totalorder %s23, 3
    %p151 = por %p149, %p150
    %p153 = scmp.ne.s32.totalorder %s138, %s152
    %p154 = scmp.eq.s32.totalorder %s23, 0
    %p155 = por %p153, %p154
    %s157 = sadd.s32 %s156, 1
    %p160 = scmp.eq.s32.totalorder %s17, 3
    %p161 = scmp.ne.s32.totalorder %s156, %s158
    %p162 = scmp.eq.s32.totalorder %s17, 0
    %p163 = por %p161, %p162
    %p164 = scmp.ne.s32.totalorder %s156, %s158
    %p165 = scmp.eq.s32.totalorder %s22, 3
    %p166 = por %p164, %p165
    %p167 = scmp.ne.s32.totalorder %s158, %s159
    %p168 = scmp.eq.s32.totalorder %s22, 0
    %p169 = por %p167, %p168
    %p170 = scmp.ne.s32.totalorder %s158, %s159
    %p171 = scmp.eq.s32.totalorder %s23, 3
    %p172 = por %p170, %p171
    %p174 = scmp.ne.s32.totalorder %s159, %s173
    %p175 = scmp.eq.s32.totalorder %s23, 0
    %p176 = por %p174, %p175
    %s178 = sadd.s32 %s177, 1
    %p181 = scmp.eq.s32.totalorder %s17, 3
    %p182 = scmp.ne.s32.totalorder %s177, %s179
    %p183 = scmp.eq.s32.totalorder %s17, 0
    %p184 = por %p182, %p183
    %p185 = scmp.ne.s32.totalorder %s177, %s179
    %p186 = scmp.eq.s32.totalorder %s22, 3
    %p187 = por %p185, %p186
    %p188 = scmp.ne.s32.totalorder %s179, %s180
    %p189 = scmp.eq.s32.totalorder %s22, 0
    %p190 = por %p188, %p189
    %p191 = scmp.ne.s32.totalorder %s179, %s180
    %p192 = scmp.eq.s32.totalorder %s23, 3
    %p193 = por %p191, %p192
    %p195 = scmp.ne.s32.totalorder %s180, %s194
    %p196 = scmp.eq.s32.totalorder %s23, 0
    %p197 = por %p195, %p196
    %s199 = sadd.s32 %s198, 1
    %p202 = scmp.eq.s32.totalorder %s17, 3
    %p203 = scmp.ne.s32.totalorder %s198, %s200
    %p204 = scmp.eq.s32.totalorder %s17, 0
    %p205 = por %p203, %p204
    %p206 = scmp.ne.s32.totalorder %s198, %s200
    %p207 = scmp.eq.s32.totalorder %s22, 3
    %p208 = por %p206, %p207
    %p209 = scmp.ne.s32.totalorder %s200, %s201
    %p210 = scmp.eq.s32.totalorder %s22, 0
    %p211 = por %p209, %p210
    %p212 = scmp.ne.s32.totalorder %s200, %s201
    %p213 = scmp.eq.s32.totalorder %s23, 3
    %p214 = por %p212, %p213
    %p216 = scmp.ne.s32.totalorder %s201, %s215
    %p217 = scmp.eq.s32.totalorder %s23, 0
    %p218 = por %p216, %p217
    %s220 = sadd.s32 %s219, 1
    %p223 = scmp.eq.s32.totalorder %s17, 3
    %p224 = scmp.ne.s32.totalorder %s219, %s221
    %p225 = scmp.eq.s32.totalorder %s17, 0
    %p226 = por %p224, %p225
    %p227 = scmp.ne.s32.totalorder %s219, %s221
    %p228 = scmp.eq.s32.totalorder %s22, 3
    %p229 = por %p227, %p228
    %p230 = scmp.ne.s32.totalorder %s221, %s222
    %p231 = scmp.eq.s32.totalorder %s22, 0
    %p232 = por %p230, %p231
    %p233 = scmp.ne.s32.totalorder %s221, %s222
    %p234 = scmp.eq.s32.totalorder %s23, 3
    %p235 = por %p233, %p234
    %p237 = scmp.ne.s32.totalorder %s222, %s236
    %p238 = scmp.eq.s32.totalorder %s23, 0
    %p239 = por %p237, %p238
    %s241 = sadd.s32 %s240, 1
    %p244 = scmp.eq.s32.totalorder %s17, 3
    %p245 = scmp.ne.s32.totalorder %s240, %s242
    %p246 = scmp.eq.s32.totalorder %s17, 0
    %p247 = por %p245, %p246
    %p248 = scmp.ne.s32.totalorder %s240, %s242
    %p249 = scmp.eq.s32.totalorder %s22, 3
    %p250 = por %p248, %p249
    %p251 = scmp.ne.s32.totalorder %s242, %s243
    %p252 = scmp.eq.s32.totalorder %s22, 0
    %p253 = por %p251, %p252
    %p254 = scmp.ne.s32.totalorder %s242, %s243
    %p255 = scmp.eq.s32.totalorder %s23, 3
    %p256 = por %p254, %p255
    %p258 = scmp.ne.s32.totalorder %s243, %s257
    %p259 = scmp.eq.s32.totalorder %s23, 0
    %p260 = por %p258, %p259
    %s261 = ssub.s32 %s17, %s24
    %p262 = scmp.eq.s32.totalorder %s261, 0
    %s264 = sadd.s32 %s263, 1
    %s265 = scalar_select %p262, %s263, %s264
    %p268 = pneg %p262
    %p269 = scmp.eq.s32.totalorder %s17, 3
    %p270 = por %p268, %p269
    %p271 = scmp.ne.s32.totalorder %s263, %s266
    %p272 = scmp.eq.s32.totalorder %s17, 0
    %p273 = por %p271, %p272
    %p274 = scmp.ne.s32.totalorder %s263, %s266
    %p275 = scmp.eq.s32.totalorder %s22, 3
    %p276 = por %p274, %p275
    %p277 = scmp.ne.s32.totalorder %s266, %s267
    %p278 = scmp.eq.s32.totalorder %s22, 0
    %p279 = por %p277, %p278
    %p280 = scmp.ne.s32.totalorder %s266, %s267
    %p281 = scmp.eq.s32.totalorder %s23, 3
    %p282 = por %p280, %p281
    %p284 = scmp.ne.s32.totalorder %s267, %s283
    %p285 = scmp.eq.s32.totalorder %s23, 0
    %p286 = por %p284, %p285
    %p287 = scmp.le.s32.totalorder 1, %s17
    %p288 = scmp.lt.s32.totalorder %s17, 5
    %p289 = pnand %p287, %p288
    %p290 = pneg %p289
    // Predicated region
    $region9: #{autoencoder_forward.1} parent=5 // pred_check
      _
    $region10: #{autoencoder_forward.1} parent=5 // pred_check_branch
      %292 = sbr.rel (%p289) target = $region12
    $region11: #{autoencoder_forward.1} parent=5 // pred_region
      %s293 = ssub.s32 %s17, 1
      // Predicated region
      $region13: #{autoencoder_forward.1} parent=11 // pred_check
        %p294 = pneg %p64
      $region14: #{autoencoder_forward.1} parent=11 // pred_check_branch
        %296 = sbr.rel (%p294) target = $region16
      $region15: #{autoencoder_forward.1} parent=11 // pred_region
        _
      $region16: #{autoencoder_forward.1} parent=11 // pred_fallthru
        _
      // Predicated region
      $region17: #{autoencoder_forward.1} parent=11 // pred_check
        %p297 = pneg %p85
      $region18: #{autoencoder_forward.1} parent=11 // pred_check_branch
        %299 = sbr.rel (%p297) target = $region20
      $region19: #{autoencoder_forward.1} parent=11 // pred_region
        _
      $region20: #{autoencoder_forward.1} parent=11 // pred_fallthru
        _
      // Predicated region
      $region21: #{autoencoder_forward.1} parent=11 // pred_check
        %p300 = pneg %p106
      $region22: #{autoencoder_forward.1} parent=11 // pred_check_branch
        %302 = sbr.rel (%p300) target = $region24
      $region23: #{autoencoder_forward.1} parent=11 // pred_region
        _
      $region24: #{autoencoder_forward.1} parent=11 // pred_fallthru
        _
      // Predicated region
      $region25: #{autoencoder_forward.1} parent=11 // pred_check
        %p303 = pneg %p127
      $region26: #{autoencoder_forward.1} parent=11 // pred_check_branch
        %305 = sbr.rel (%p303) target = $region28
      $region27: #{autoencoder_forward.1} parent=11 // pred_region
        _
      $region28: #{autoencoder_forward.1} parent=11 // pred_fallthru
        _
      // Predicated region
      $region29: #{autoencoder_forward.1} parent=11 // pred_check
        %p306 = pneg %p148
      $region30: #{autoencoder_forward.1} parent=11 // pred_check_branch
        %308 = sbr.rel (%p306) target = $region32
      $region31: #{autoencoder_forward.1} parent=11 // pred_region
        _
      $region32: #{autoencoder_forward.1} parent=11 // pred_fallthru
        _
      // Predicated region
      $region33: #{autoencoder_forward.1} parent=11 // pred_check
        %p309 = pneg %p169
      $region34: #{autoencoder_forward.1} parent=11 // pred_check_branch
        %311 = sbr.rel (%p309) target = $region36
      $region35: #{autoencoder_forward.1} parent=11 // pred_region
        _
      $region36: #{autoencoder_forward.1} parent=11 // pred_fallthru
        _
      // Predicated region
      $region37: #{autoencoder_forward.1} parent=11 // pred_check
        %p312 = pneg %p190
      $region38: #{autoencoder_forward.1} parent=11 // pred_check_branch
        %314 = sbr.rel (%p312) target = $region40
      $region39: #{autoencoder_forward.1} parent=11 // pred_region
        _
      $region40: #{autoencoder_forward.1} parent=11 // pred_fallthru
        _
      // Predicated region
      $region41: #{autoencoder_forward.1} parent=11 // pred_check
        %p315 = pneg %p211
      $region42: #{autoencoder_forward.1} parent=11 // pred_check_branch
        %317 = sbr.rel (%p315) target = $region44
      $region43: #{autoencoder_forward.1} parent=11 // pred_region
        _
      $region44: #{autoencoder_forward.1} parent=11 // pred_fallthru
        _
      // Predicated region
      $region45: #{autoencoder_forward.1} parent=11 // pred_check
        %p318 = pneg %p232
      $region46: #{autoencoder_forward.1} parent=11 // pred_check_branch
        %320 = sbr.rel (%p318) target = $region48
      $region47: #{autoencoder_forward.1} parent=11 // pred_region
        _
      $region48: #{autoencoder_forward.1} parent=11 // pred_fallthru
        _
      // Predicated region
      $region49: #{autoencoder_forward.1} parent=11 // pred_check
        %p321 = pneg %p253
      $region50: #{autoencoder_forward.1} parent=11 // pred_check_branch
        %323 = sbr.rel (%p321) target = $region52
      $region51: #{autoencoder_forward.1} parent=11 // pred_region
        _
      $region52: #{autoencoder_forward.1} parent=11 // pred_fallthru
        _
    $region12: #{autoencoder_forward.1} parent=5 // pred_fallthru
      _
    %p324 = scmp.lt.s32.totalorder %s17, 4
    // Predicated region
    $region53: #{autoencoder_forward.1} parent=5 // pred_check
      %p325 = pneg %p324
    $region54: #{autoencoder_forward.1} parent=5 // pred_check_branch
      %327 = sbr.rel (%p325) target = $region56
    $region55: #{autoencoder_forward.1} parent=5 // pred_region
      // Predicated region
      $region57: #{autoencoder_forward.1} parent=55 // pred_check
        %p328 = pneg %p37
      $region58: #{autoencoder_forward.1} parent=55 // pred_check_branch
        %330 = sbr.rel (%p328) target = $region60
      $region59: #{autoencoder_forward.1} parent=55 // pred_region
        %s331 = smul.u32 8, %s17
        %p332 = scmp.lt.s32.totalorder %s331, 31
        %s333 = scalar_select %p332, %s331, 31
        %s334 = smul.addr %s333, 7
        %s335 = smul.addr %s334, 8
        %s336 = scalar_lea.vmem %s0, %s335
        %s337 = smul.u32 8, %s17
      $region60: #{autoencoder_forward.1} parent=55 // pred_fallthru
        _
    $region56: #{autoencoder_forward.1} parent=5 // pred_fallthru
      _
    %p338 = scmp.le.s32.totalorder 1, %s17
    %p339 = scmp.lt.s32.totalorder %s17, 5
    %p340 = pnand %p338, %p339
    %p341 = pneg %p340
    // Predicated region
    $region61: #{autoencoder_forward.1} parent=5 // pred_check
      _
    $region62: #{autoencoder_forward.1} parent=5 // pred_check_branch
      %343 = sbr.rel (%p340) target = $region64
    $region63: #{autoencoder_forward.1} parent=5 // pred_region
      %s344 = ssub.s32 %s17, 1
      %s345 = smul.u32 8, %s22
      %p346 = scmp.lt.s32.totalorder %s345, 31
      %s347 = scalar_select %p346, %s345, 31
      %s348 = smul.addr %s347, 7
      %s349 = smul.addr %s348, 8
      %s350 = scalar_lea.vmem %s0, %s349
      %p351 = pneg %p43
      %p352 = pneg %p40
      %p353 = pneg %p64
      %p354 = pneg %p61
      %p355 = pneg %p85
      %p356 = pneg %p82
      %p357 = pneg %p106
      %p358 = pneg %p103
      %p359 = pneg %p127
      %p360 = pneg %p124
      %p361 = pneg %p148
      %p362 = pneg %p145
      %p363 = pneg %p169
      %p364 = pneg %p166
      %p365 = pneg %p190
      %p366 = pneg %p187
      %p367 = pneg %p211
      %p368 = pneg %p208
      %p369 = pneg %p232
      %p370 = pneg %p229
      %p371 = pneg %p253
      %p372 = pneg %p250
      %p373 = pneg %p279
      %p374 = pneg %p276
      %s375 = smul.u32 8, %s22
      %p376 = scmp.lt.s32.totalorder %s375, 31
      %s377 = scalar_select %p376, %s375, 31
      %s378 = smul.addr %s377, 7
      %s379 = smul.addr %s378, 4
      %s380 = scalar_lea.vmem %s11, %s379
      %s381 = smul.u32 8, %s22
      %p382 = scmp.lt.s32.totalorder %s381, 31
      %s383 = scalar_select %p382, %s381, 31
      %s384 = smul.addr %s383, 7
      %s385 = smul.addr %s384, 8
      %s386 = scalar_lea.vmem %s0, %s385
      %s387 = smul.u32 8, %s22
      %s388 = smul.u32 8, %s22
      %p389 = scmp.lt.s32.totalorder %s388, 31
      %s390 = scalar_select %p389, %s388, 31
      %s391 = smul.addr %s390, 7
      %s392 = smul.addr %s391, 4
      %s393 = scalar_lea.vmem %s11, %s392
      %s394 = smul.u32 8, %s22
      %v396 = vld [vmem:[%s386] sm:$0xff]
      %v397 = vld [vmem:[%s386 + $0x8] sm:$0xff]
      %v398 = vld [vmem:[%s386 + $0x10] sm:$0xff]
      %v399 = vld [vmem:[%s386 + $0x18] sm:$0xff]
      %v400 = vld [vmem:[%s386 + $0x20] sm:$0xff]
      %v401 = vld [vmem:[%s386 + $0x28] sm:$0xff]
      %v402 = vld [vmem:[%s386 + $0x30] sm:$0xff]
      %v403 = vld [vmem:[%s386 + $0x38] sm:$0xff]
      %v404 = vld [vmem:[%s386 + $0x40] sm:$0xff]
      %v405 = vld [vmem:[%s386 + $0x48] sm:$0xff]
      %v406 = vld [vmem:[%s386 + $0x50] sm:$0xff]
      %v407 = vld [vmem:[%s386 + $0x58] sm:$0xff]
      %v408 = vld [vmem:[%s386 + $0x60] sm:$0xff]
      %v409 = vld [vmem:[%s386 + $0x68] sm:$0xff]
      %v410 = vld [vmem:[%s386 + $0x70] sm:$0xff]
      %v411 = vld [vmem:[%s386 + $0x78] sm:$0xff]
      %v412 = vld [vmem:[%s386 + $0x80] sm:$0xff]
      %v413 = vld [vmem:[%s386 + $0x88] sm:$0xff]
      %v414 = vld [vmem:[%s386 + $0x90] sm:$0xff]
      %v415 = vld [vmem:[%s386 + $0x98] sm:$0xff]
      %v416 = vld [vmem:[%s386 + $0xa0] sm:$0xff]
      %v417 = vld [vmem:[%s386 + $0xa8] sm:$0xff]
      %v418 = vld [vmem:[%s386 + $0xb0] sm:$0xff]
      %v419 = vld [vmem:[%s386 + $0xb8] sm:$0xff]
      %v420 = vld [vmem:[%s386 + $0xc0] sm:$0xff]
      %v421 = vld [vmem:[%s386 + $0xc8] sm:$0xff]
      %v422 = vld [vmem:[%s386 + $0xd0] sm:$0xff]
      %v423 = vld [vmem:[%s386 + $0xd8] sm:$0xff]
      %v424 = vld [vmem:[%s386 + $0xe0] sm:$0xff]
      %v425 = vld [vmem:[%s386 + $0xe8] sm:$0xff]
      %v426 = vld [vmem:[%s386 + $0xf0] sm:$0xff]
      %v427 = vld [vmem:[%s386 + $0xf8] sm:$0xff]
      %v428 = vld [vmem:[%s386 + $0x100] sm:$0xff]
      %v429 = vld [vmem:[%s386 + $0x108] sm:$0xff]
      %v430 = vld [vmem:[%s386 + $0x110] sm:$0xff]
      %v431 = vld [vmem:[%s386 + $0x118] sm:$0xff]
      %v432 = vld [vmem:[%s386 + $0x120] sm:$0xff]
      %v433 = vld [vmem:[%s386 + $0x128] sm:$0xff]
      %v434 = vld [vmem:[%s386 + $0x130] sm:$0xff]
      %v435 = vld [vmem:[%s386 + $0x138] sm:$0xff]
      %v436 = vld [vmem:[%s386 + $0x140] sm:$0xff]
      %v437 = vld [vmem:[%s386 + $0x148] sm:$0xff]
      %v438 = vld [vmem:[%s386 + $0x150] sm:$0xff]
      %v439 = vld [vmem:[%s386 + $0x158] sm:$0xff]
      %v440 = vld [vmem:[%s386 + $0x160] sm:$0xff]
      %v441 = vld [vmem:[%s386 + $0x168] sm:$0xff]
      %v442 = vld [vmem:[%s386 + $0x170] sm:$0xff]
      %v443 = vld [vmem:[%s386 + $0x178] sm:$0xff]
      %v444 = vld [vmem:[%s386 + $0x180] sm:$0xff]
      %v445 = vld [vmem:[%s386 + $0x188] sm:$0xff]
      %v446 = vld [vmem:[%s386 + $0x190] sm:$0xff]
      %v447 = vld [vmem:[%s386 + $0x198] sm:$0xff]
      %v448 = vld [vmem:[%s386 + $0x1a0] sm:$0xff]
      %v449 = vld [vmem:[%s386 + $0x1a8] sm:$0xff]
      %v450 = vld [vmem:[%s386 + $0x1b0] sm:$0xff]
      %v451 = vld [vmem:[%s386 + $0x1b8] sm:$0xff]
      %v452 = vpack.c.bf16 %v403, %v396
      %v453 = vpack.c.bf16 %v404, %v397
      %v454 = vpack.c.bf16 %v405, %v398
      %v455 = vpack.c.bf16 %v406, %v399
      %v456 = vpack.c.bf16 %v407, %v400
      %v457 = vpack.c.bf16 %v408, %v401
      %v458 = vpack.c.bf16 %v409, %v402
      %v459 = vpack.c.bf16 %v417, %v410
      %v460 = vpack.c.bf16 %v418, %v411
      %v461 = vpack.c.bf16 %v419, %v412
      %v462 = vpack.c.bf16 %v420, %v413
      %v463 = vpack.c.bf16 %v421, %v414
      %v464 = vpack.c.bf16 %v422, %v415
      %v465 = vpack.c.bf16 %v423, %v416
      %v466 = vpack.c.bf16 %v431, %v424
      %v467 = vpack.c.bf16 %v432, %v425
      %v468 = vpack.c.bf16 %v433, %v426
      %v469 = vpack.c.bf16 %v434, %v427
      %v470 = vpack.c.bf16 %v435, %v428
      %v471 = vpack.c.bf16 %v436, %v429
      %v472 = vpack.c.bf16 %v437, %v430
      %v473 = vpack.c.bf16 %v445, %v438
      %v474 = vpack.c.bf16 %v446, %v439
      %v475 = vpack.c.bf16 %v447, %v440
      %v476 = vpack.c.bf16 %v448, %v441
      %v477 = vpack.c.bf16 %v449, %v442
      %v478 = vpack.c.bf16 %v450, %v443
      %v479 = vpack.c.bf16 %v451, %v444
      %v480 = vld [vmem:[%s1] sm:$0xff]
      %v481 = vld [vmem:[%s1 + $0x8] sm:$0xff]
      %v482 = vld [vmem:[%s1 + $0x10] sm:$0xff]
      %v483 = vld [vmem:[%s1 + $0x18] sm:$0xff]
      %v484 = vld [vmem:[%s1 + $0x20] sm:$0xff]
      %v485 = vld [vmem:[%s1 + $0x28] sm:$0xff]
      %v486 = vld [vmem:[%s1 + $0x30] sm:$0xff]
      %v487 = vld [vmem:[%s1 + $0x38] sm:$0xff]
      %v488 = vld [vmem:[%s1 + $0x40] sm:$0xff]
      %v489 = vld [vmem:[%s1 + $0x48] sm:$0xff]
      %v490 = vld [vmem:[%s1 + $0x50] sm:$0xff]
      %v491 = vld [vmem:[%s1 + $0x58] sm:$0xff]
      %v492 = vld [vmem:[%s1 + $0x60] sm:$0xff]
      %v493 = vld [vmem:[%s1 + $0x68] sm:$0xff]
      %v494 = vld [vmem:[%s1 + $0x70] sm:$0xff]
      %v495 = vld [vmem:[%s1 + $0x78] sm:$0xff]
      %v496 = vld [vmem:[%s1 + $0x80] sm:$0xff]
      %v497 = vld [vmem:[%s1 + $0x88] sm:$0xff]
      %v498 = vld [vmem:[%s1 + $0x90] sm:$0xff]
      %v499 = vld [vmem:[%s1 + $0x98] sm:$0xff]
      %v500 = vld [vmem:[%s1 + $0xa0] sm:$0xff]
      %v501 = vld [vmem:[%s1 + $0xa8] sm:$0xff]
      %v502 = vld [vmem:[%s1 + $0xb0] sm:$0xff]
      %v503 = vld [vmem:[%s1 + $0xb8] sm:$0xff]
      %v504 = vld [vmem:[%s1 + $0xc0] sm:$0xff]
      %v505 = vld [vmem:[%s1 + $0xc8] sm:$0xff]
      %v506 = vld [vmem:[%s1 + $0xd0] sm:$0xff]
      %v507 = vld [vmem:[%s1 + $0xd8] sm:$0xff]
      %v508 = vld [vmem:[%s1 + $0xe0] sm:$0xff]
      %v509 = vld [vmem:[%s1 + $0xe8] sm:$0xff]
      %v510 = vld [vmem:[%s1 + $0xf0] sm:$0xff]
      %v511 = vld [vmem:[%s1 + $0xf8] sm:$0xff]
      %v512 = vld [vmem:[%s1 + $0x100] sm:$0xff]
      %v513 = vld [vmem:[%s1 + $0x108] sm:$0xff]
      %v514 = vld [vmem:[%s1 + $0x110] sm:$0xff]
      %v515 = vld [vmem:[%s1 + $0x118] sm:$0xff]
      %v516 = vld [vmem:[%s1 + $0x120] sm:$0xff]
      %v517 = vld [vmem:[%s1 + $0x128] sm:$0xff]
      %v518 = vld [vmem:[%s1 + $0x130] sm:$0xff]
      %v519 = vld [vmem:[%s1 + $0x138] sm:$0xff]
      %v520 = vld [vmem:[%s1 + $0x140] sm:$0xff]
      %v521 = vld [vmem:[%s1 + $0x148] sm:$0xff]
      %v522 = vld [vmem:[%s1 + $0x150] sm:$0xff]
      %v523 = vld [vmem:[%s1 + $0x158] sm:$0xff]
      %v524 = vld [vmem:[%s1 + $0x160] sm:$0xff]
      %v525 = vld [vmem:[%s1 + $0x168] sm:$0xff]
      %v526 = vld [vmem:[%s1 + $0x170] sm:$0xff]
      %v527 = vld [vmem:[%s1 + $0x178] sm:$0xff]
      %v528 = vld [vmem:[%s1 + $0x180] sm:$0xff]
      %v529 = vld [vmem:[%s1 + $0x188] sm:$0xff]
      %v530 = vld [vmem:[%s1 + $0x190] sm:$0xff]
      %v531 = vld [vmem:[%s1 + $0x198] sm:$0xff]
      %v532 = vld [vmem:[%s1 + $0x1a0] sm:$0xff]
      %v533 = vld [vmem:[%s1 + $0x1a8] sm:$0xff]
      %v534 = vld [vmem:[%s1 + $0x1b0] sm:$0xff]
      %v535 = vld [vmem:[%s1 + $0x1b8] sm:$0xff]
      %v536 = vld [vmem:[%s1 + $0x1c0] sm:$0xff]
      %v537 = vld [vmem:[%s1 + $0x1c8] sm:$0xff]
      %v538 = vld [vmem:[%s1 + $0x1d0] sm:$0xff]
      %v539 = vld [vmem:[%s1 + $0x1d8] sm:$0xff]
      %v540 = vld [vmem:[%s1 + $0x1e0] sm:$0xff]
      %v541 = vld [vmem:[%s1 + $0x1e8] sm:$0xff]
      %v542 = vld [vmem:[%s1 + $0x1f0] sm:$0xff]
      %v543 = vld [vmem:[%s1 + $0x1f8] sm:$0xff]
      %v544 = vld [vmem:[%s1 + $0x200] sm:$0xff]
      %v545 = vld [vmem:[%s1 + $0x208] sm:$0xff]
      %v546 = vld [vmem:[%s1 + $0x210] sm:$0xff]
      %v547 = vld [vmem:[%s1 + $0x218] sm:$0xff]
      %v548 = vld [vmem:[%s1 + $0x220] sm:$0xff]
      %v549 = vld [vmem:[%s1 + $0x228] sm:$0xff]
      %v550 = vld [vmem:[%s1 + $0x230] sm:$0xff]
      %v551 = vld [vmem:[%s1 + $0x238] sm:$0xff]
      %v552 = vld [vmem:[%s1 + $0x240] sm:$0xff]
      %v553 = vld [vmem:[%s1 + $0x248] sm:$0xff]
      %v554 = vld [vmem:[%s1 + $0x250] sm:$0xff]
      %v555 = vld [vmem:[%s1 + $0x258] sm:$0xff]
      %v556 = vld [vmem:[%s1 + $0x260] sm:$0xff]
      %v557 = vld [vmem:[%s1 + $0x268] sm:$0xff]
      %v558 = vld [vmem:[%s1 + $0x270] sm:$0xff]
      %v559 = vld [vmem:[%s1 + $0x278] sm:$0xff]
      %v560 = vld [vmem:[%s1 + $0x280] sm:$0xff]
      %v561 = vld [vmem:[%s1 + $0x288] sm:$0xff]
      %v562 = vld [vmem:[%s1 + $0x290] sm:$0xff]
      %v563 = vld [vmem:[%s1 + $0x298] sm:$0xff]
      %v564 = vld [vmem:[%s1 + $0x2a0] sm:$0xff]
      %v565 = vld [vmem:[%s1 + $0x2a8] sm:$0xff]
      %v566 = vld [vmem:[%s1 + $0x2b0] sm:$0xff]
      %v567 = vld [vmem:[%s1 + $0x2b8] sm:$0xff]
      %v568 = vld [vmem:[%s1 + $0x2c0] sm:$0xff]
      %v569 = vld [vmem:[%s1 + $0x2c8] sm:$0xff]
      %v570 = vld [vmem:[%s1 + $0x2d0] sm:$0xff]
      %v571 = vld [vmem:[%s1 + $0x2d8] sm:$0xff]
      %v572 = vld [vmem:[%s1 + $0x2e0] sm:$0xff]
      %v573 = vld [vmem:[%s1 + $0x2e8] sm:$0xff]
      %v574 = vld [vmem:[%s1 + $0x2f0] sm:$0xff]
      %v575 = vld [vmem:[%s1 + $0x2f8] sm:$0xff]
      %v576 = vld [vmem:[%s1 + $0x300] sm:$0xff]
      %v577 = vld [vmem:[%s1 + $0x308] sm:$0xff]
      %v578 = vld [vmem:[%s2] sm:$0x3]
      %v580 = vlaneseq
      %v581 = vshrl.u32 %v580, 7
      %v582 = vsub.s32 0, %v581
      %v583 = vrot.slane %v578, %v582
      %v584 = vlaneseq
      %v585 = vshrl.u32 %v584, 7
      %v586 = vsub.s32 1, %v585
      %v587 = vrot.slane %v578, %v586
      %v688 = vunpack.c.l.b16 %v480
      %v689 = vunpack.c.h.b16 %v480
      %v690 = vunpack.c.l.b16 %v481
      %v691 = vunpack.c.h.b16 %v481
      %v692 = vunpack.c.l.b16 %v482
      %v693 = vunpack.c.h.b16 %v482
      %v694 = vunpack.c.l.b16 %v483
      %v695 = vunpack.c.h.b16 %v483
      %v696 = vunpack.c.l.b16 %v484
      %v697 = vunpack.c.h.b16 %v484
      %v698 = vunpack.c.l.b16 %v485
      %v699 = vunpack.c.h.b16 %v485
      %v700 = vunpack.c.l.b16 %v486
      %v701 = vunpack.c.h.b16 %v486
      %v702 = vunpack.c.l.b16 %v487
      %v703 = vunpack.c.h.b16 %v487
      %v704 = vunpack.c.l.b16 %v488
      %v705 = vunpack.c.h.b16 %v488
      %v706 = vunpack.c.l.b16 %v489
      %v707 = vunpack.c.h.b16 %v489
      %v708 = vunpack.c.l.b16 %v490
      %v709 = vunpack.c.h.b16 %v490
      %v710 = vunpack.c.l.b16 %v491
      %v711 = vunpack.c.h.b16 %v491
      %v712 = vunpack.c.l.b16 %v492
      %v713 = vunpack.c.h.b16 %v492
      %v714 = vunpack.c.l.b16 %v493
      %v715 = vunpack.c.h.b16 %v493
      %v716 = vunpack.c.l.b16 %v494
      %v717 = vunpack.c.h.b16 %v494
      %v718 = vunpack.c.l.b16 %v495
      %v719 = vunpack.c.h.b16 %v495
      %v720 = vunpack.c.l.b16 %v496
      %v721 = vunpack.c.h.b16 %v496
      %v722 = vunpack.c.l.b16 %v497
      %v723 = vunpack.c.h.b16 %v497
      %v724 = vunpack.c.l.b16 %v498
      %v725 = vunpack.c.h.b16 %v498
      %v726 = vunpack.c.l.b16 %v499
      %v727 = vunpack.c.h.b16 %v499
      %v728 = vunpack.c.l.b16 %v500
      %v729 = vunpack.c.h.b16 %v500
      %v730 = vunpack.c.l.b16 %v501
      %v731 = vunpack.c.h.b16 %v501
      %v732 = vunpack.c.l.b16 %v502
      %v733 = vunpack.c.h.b16 %v502
      %v734 = vunpack.c.l.b16 %v503
      %v735 = vunpack.c.h.b16 %v503
      %v736 = vunpack.c.l.b16 %v504
      %v737 = vunpack.c.h.b16 %v504
      %v738 = vunpack.c.l.b16 %v505
      %v739 = vunpack.c.h.b16 %v505
      %v740 = vunpack.c.l.b16 %v506
      %v741 = vunpack.c.h.b16 %v506
      %v742 = vunpack.c.l.b16 %v507
      %v743 = vunpack.c.h.b16 %v507
      %v744 = vunpack.c.l.b16 %v508
      %v745 = vunpack.c.h.b16 %v508
      %v746 = vunpack.c.l.b16 %v509
      %v747 = vunpack.c.h.b16 %v509
      %v748 = vunpack.c.l.b16 %v510
      %v749 = vunpack.c.h.b16 %v510
      %v750 = vunpack.c.l.b16 %v511
      %v751 = vunpack.c.h.b16 %v511
      %v752 = vunpack.c.l.b16 %v512
      %v753 = vunpack.c.h.b16 %v512
      %v754 = vunpack.c.l.b16 %v513
      %v755 = vunpack.c.h.b16 %v513
      %v756 = vunpack.c.l.b16 %v514
      %v757 = vunpack.c.h.b16 %v514
      %v758 = vunpack.c.l.b16 %v515
      %v759 = vunpack.c.h.b16 %v515
      %v760 = vunpack.c.l.b16 %v516
      %v761 = vunpack.c.h.b16 %v516
      %v762 = vunpack.c.l.b16 %v517
      %v763 = vunpack.c.h.b16 %v517
      %v764 = vunpack.c.l.b16 %v518
      %v765 = vunpack.c.h.b16 %v518
      %v766 = vunpack.c.l.b16 %v519
      %v767 = vunpack.c.h.b16 %v519
      %v768 = vunpack.c.l.b16 %v520
      %v769 = vunpack.c.h.b16 %v520
      %v770 = vunpack.c.l.b16 %v521
      %v771 = vunpack.c.h.b16 %v521
      %v772 = vunpack.c.l.b16 %v522
      %v773 = vunpack.c.h.b16 %v522
      %v774 = vunpack.c.l.b16 %v523
      %v775 = vunpack.c.h.b16 %v523
      %v776 = vunpack.c.l.b16 %v524
      %v777 = vunpack.c.h.b16 %v524
      %v778 = vunpack.c.l.b16 %v525
      %v779 = vunpack.c.h.b16 %v525
      %v780 = vunpack.c.l.b16 %v526
      %v781 = vunpack.c.h.b16 %v526
      %v782 = vunpack.c.l.b16 %v527
      %v783 = vunpack.c.h.b16 %v527
      %v784 = vunpack.c.l.b16 %v528
      %v785 = vunpack.c.h.b16 %v528
      %v786 = vunpack.c.l.b16 %v529
      %v787 = vunpack.c.h.b16 %v529
      %v788 = vunpack.c.l.b16 %v530
      %v789 = vunpack.c.h.b16 %v530
      %v790 = vunpack.c.l.b16 %v531
      %v791 = vunpack.c.h.b16 %v531
      %v792 = vunpack.c.l.b16 %v532
      %v793 = vunpack.c.h.b16 %v532
      %v794 = vunpack.c.l.b16 %v533
      %v795 = vunpack.c.h.b16 %v533
      %v796 = vunpack.c.l.b16 %v534
      %v797 = vunpack.c.h.b16 %v534
      %v798 = vunpack.c.l.b16 %v535
      %v799 = vunpack.c.h.b16 %v535
      %v800 = vunpack.c.l.b16 %v536
      %v801 = vunpack.c.h.b16 %v536
      %v802 = vunpack.c.l.b16 %v537
      %v803 = vunpack.c.h.b16 %v537
      %v804 = vunpack.c.l.b16 %v538
      %v805 = vunpack.c.h.b16 %v538
      %v806 = vunpack.c.l.b16 %v539
      %v807 = vunpack.c.h.b16 %v539
      %v808 = vunpack.c.l.b16 %v540
      %v809 = vunpack.c.h.b16 %v540
      %v810 = vunpack.c.l.b16 %v541
      %v811 = vunpack.c.h.b16 %v541
      %v812 = vunpack.c.l.b16 %v542
      %v813 = vunpack.c.h.b16 %v542
      %v814 = vunpack.c.l.b16 %v543
      %v815 = vunpack.c.h.b16 %v543
      %v816 = vunpack.c.l.b16 %v544
      %v817 = vunpack.c.h.b16 %v544
      %v818 = vunpack.c.l.b16 %v545
      %v819 = vunpack.c.h.b16 %v545
      %v820 = vunpack.c.l.b16 %v546
      %v821 = vunpack.c.h.b16 %v546
      %v822 = vunpack.c.l.b16 %v547
      %v823 = vunpack.c.h.b16 %v547
      %v824 = vunpack.c.l.b16 %v548
      %v825 = vunpack.c.h.b16 %v548
      %v826 = vunpack.c.l.b16 %v549
      %v827 = vunpack.c.h.b16 %v549
      %v828 = vunpack.c.l.b16 %v550
      %v829 = vunpack.c.h.b16 %v550
      %v830 = vunpack.c.l.b16 %v551
      %v831 = vunpack.c.h.b16 %v551
      %v832 = vunpack.c.l.b16 %v552
      %v833 = vunpack.c.h.b16 %v552
      %v834 = vunpack.c.l.b16 %v553
      %v835 = vunpack.c.h.b16 %v553
      %v836 = vunpack.c.l.b16 %v554
      %v837 = vunpack.c.h.b16 %v554
      %v838 = vunpack.c.l.b16 %v555
      %v839 = vunpack.c.h.b16 %v555
      %v840 = vunpack.c.l.b16 %v556
      %v841 = vunpack.c.h.b16 %v556
      %v842 = vunpack.c.l.b16 %v557
      %v843 = vunpack.c.h.b16 %v557
      %v844 = vunpack.c.l.b16 %v558
      %v845 = vunpack.c.h.b16 %v558
      %v846 = vunpack.c.l.b16 %v559
      %v847 = vunpack.c.h.b16 %v559
      %v848 = vunpack.c.l.b16 %v560
      %v849 = vunpack.c.h.b16 %v560
      %v850 = vunpack.c.l.b16 %v561
      %v851 = vunpack.c.h.b16 %v561
      %v852 = vunpack.c.l.b16 %v562
      %v853 = vunpack.c.h.b16 %v562
      %v854 = vunpack.c.l.b16 %v563
      %v855 = vunpack.c.h.b16 %v563
      %v856 = vunpack.c.l.b16 %v564
      %v857 = vunpack.c.h.b16 %v564
      %v858 = vunpack.c.l.b16 %v565
      %v859 = vunpack.c.h.b16 %v565
      %v860 = vunpack.c.l.b16 %v566
      %v861 = vunpack.c.h.b16 %v566
      %v862 = vunpack.c.l.b16 %v567
      %v863 = vunpack.c.h.b16 %v567
      %v864 = vunpack.c.l.b16 %v568
      %v865 = vunpack.c.h.b16 %v568
      %v866 = vunpack.c.l.b16 %v569
      %v867 = vunpack.c.h.b16 %v569
      %v868 = vunpack.c.l.b16 %v570
      %v869 = vunpack.c.h.b16 %v570
      %v870 = vunpack.c.l.b16 %v571
      %v871 = vunpack.c.h.b16 %v571
      %v872 = vunpack.c.l.b16 %v572
      %v873 = vunpack.c.h.b16 %v572
      %v874 = vunpack.c.l.b16 %v573
      %v875 = vunpack.c.h.b16 %v573
      %v876 = vunpack.c.l.b16 %v574
      %v877 = vunpack.c.h.b16 %v574
      %v878 = vunpack.c.l.b16 %v575
      %v879 = vunpack.c.h.b16 %v575
      %v880 = vunpack.c.l.b16 %v576
      %v881 = vunpack.c.h.b16 %v576
      %v882 = vunpack.c.l.b16 %v577
      %v883 = vunpack.c.h.b16 %v577
      %v884 = vpack.c.b16 %v690, %v688
      %v885 = vpack.c.b16 %v691, %v689
      %v886 = vpack.c.b16 %v694, %v692
      %v887 = vpack.c.b16 %v695, %v693
      %v888 = vpack.c.b16 %v698, %v696
      %v889 = vpack.c.b16 %v699, %v697
      %v890 = vpack.c.b16 %v702, %v700
      %v891 = vpack.c.b16 %v703, %v701
      %v892 = vpack.c.b16 %v706, %v704
      %v893 = vpack.c.b16 %v707, %v705
      %v894 = vpack.c.b16 %v710, %v708
      %v895 = vpack.c.b16 %v711, %v709
      %v896 = vpack.c.b16 %v714, %v712
      %v897 = vpack.c.b16 %v715, %v713
      %v898 = vpack.c.b16 %v718, %v716
      %v899 = vpack.c.b16 %v719, %v717
      %v900 = vpack.c.b16 %v722, %v720
      %v901 = vpack.c.b16 %v723, %v721
      %v902 = vpack.c.b16 %v726, %v724
      %v903 = vpack.c.b16 %v727, %v725
      %v904 = vpack.c.b16 %v730, %v728
      %v905 = vpack.c.b16 %v731, %v729
      %v906 = vpack.c.b16 %v734, %v732
      %v907 = vpack.c.b16 %v735, %v733
      %v908 = vpack.c.b16 %v738, %v736
      %v909 = vpack.c.b16 %v739, %v737
      %v910 = vpack.c.b16 %v742, %v740
      %v911 = vpack.c.b16 %v743, %v741
      %v912 = vpack.c.b16 %v746, %v744
      %v913 = vpack.c.b16 %v747, %v745
      %v914 = vpack.c.b16 %v750, %v748
      %v915 = vpack.c.b16 %v751, %v749
      %v916 = vpack.c.b16 %v754, %v752
      %v917 = vpack.c.b16 %v755, %v753
      %v918 = vpack.c.b16 %v758, %v756
      %v919 = vpack.c.b16 %v759, %v757
      %v920 = vpack.c.b16 %v762, %v760
      %v921 = vpack.c.b16 %v763, %v761
      %v922 = vpack.c.b16 %v766, %v764
      %v923 = vpack.c.b16 %v767, %v765
      %v924 = vpack.c.b16 %v770, %v768
      %v925 = vpack.c.b16 %v771, %v769
      %v926 = vpack.c.b16 %v774, %v772
      %v927 = vpack.c.b16 %v775, %v773
      %v928 = vpack.c.b16 %v778, %v776
      %v929 = vpack.c.b16 %v779, %v777
      %v930 = vpack.c.b16 %v782, %v780
      %v931 = vpack.c.b16 %v783, %v781
      %v932 = vpack.c.b16 %v786, %v784
      %v933 = vpack.c.b16 %v787, %v785
      %v934 = vpack.c.b16 %v790, %v788
      %v935 = vpack.c.b16 %v791, %v789
      %v936 = vpack.c.b16 %v794, %v792
      %v937 = vpack.c.b16 %v795, %v793
      %v938 = vpack.c.b16 %v798, %v796
      %v939 = vpack.c.b16 %v799, %v797
      %v940 = vpack.c.b16 %v802, %v800
      %v941 = vpack.c.b16 %v803, %v801
      %v942 = vpack.c.b16 %v806, %v804
      %v943 = vpack.c.b16 %v807, %v805
      %v944 = vpack.c.b16 %v810, %v808
      %v945 = vpack.c.b16 %v811, %v809
      %v946 = vpack.c.b16 %v814, %v812
      %v947 = vpack.c.b16 %v815, %v813
      %v948 = vpack.c.b16 %v818, %v816
      %v949 = vpack.c.b16 %v819, %v817
      %v950 = vpack.c.b16 %v822, %v820
      %v951 = vpack.c.b16 %v823, %v821
      %v952 = vpack.c.b16 %v826, %v824
      %v953 = vpack.c.b16 %v827, %v825
      %v954 = vpack.c.b16 %v830, %v828
      %v955 = vpack.c.b16 %v831, %v829
      %v956 = vpack.c.b16 %v834, %v832
      %v957 = vpack.c.b16 %v835, %v833
      %v958 = vpack.c.b16 %v838, %v836
      %v959 = vpack.c.b16 %v839, %v837
      %v960 = vpack.c.b16 %v842, %v840
      %v961 = vpack.c.b16 %v843, %v841
      %v962 = vpack.c.b16 %v846, %v844
      %v963 = vpack.c.b16 %v847, %v845
      %v964 = vpack.c.b16 %v850, %v848
      %v965 = vpack.c.b16 %v851, %v849
      %v966 = vpack.c.b16 %v854, %v852
      %v967 = vpack.c.b16 %v855, %v853
      %v968 = vpack.c.b16 %v858, %v856
      %v969 = vpack.c.b16 %v859, %v857
      %v970 = vpack.c.b16 %v862, %v860
      %v971 = vpack.c.b16 %v863, %v861
      %v972 = vpack.c.b16 %v866, %v864
      %v973 = vpack.c.b16 %v867, %v865
      %v974 = vpack.c.b16 %v870, %v868
      %v975 = vpack.c.b16 %v871, %v869
      %v976 = vpack.c.b16 %v874, %v872
      %v977 = vpack.c.b16 %v875, %v873
      %v978 = vpack.c.b16 %v878, %v876
      %v979 = vpack.c.b16 %v879, %v877
      %v980 = vpack.c.b16 %v882, %v880
      %v981 = vpack.c.b16 %v883, %v881
      %vm1080 = vcmask 130048
      %v1082 = vsel %vm1080, %v458, 0
      %v1085 = vsel %vm1080, %v465, 0
      %v1088 = vsel %vm1080, %v472, 0
      %v1091 = vsel %vm1080, %v479, 0
      %1093 = vmatprep.subr.bf16.mxu0 %v885
      %1094 = vmatpush1.bf16.msra.mxu0 %v884
      %1095 = vmatprep.subr.bf16.mxu0 %v887
      %1096 = vmatpush1.bf16.msra.mxu0 %v886
      %1097 = vmatprep.subr.bf16.mxu0 %v889
      %1098 = vmatpush1.bf16.msra.mxu0 %v888
      %1099 = vmatprep.subr.bf16.mxu0 %v891
      %1100 = vmatpush1.bf16.msra.mxu0 %v890
      %1101 = vmatprep.subr.bf16.mxu0 %v893
      %1102 = vmatpush1.bf16.msra.mxu0 %v892
      %1103 = vmatprep.subr.bf16.mxu0 %v895
      %1104 = vmatpush1.bf16.msra.mxu0 %v894
      %1105 = vmatprep.subr.bf16.mxu0 %v897
      %1106 = vmatpush1.bf16.msra.mxu0 %v896
      %1107 = vmatprep.subr.bf16.mxu0 %v899
      %1108 = vmatpush1.bf16.msra.mxu0 %v898
      %1109 = vmatprep.subr.bf16.mxu0 %v901
      %1110 = vmatpush1.bf16.msra.mxu0 %v900
      %1111 = vmatprep.subr.bf16.mxu0 %v903
      %1112 = vmatpush1.bf16.msra.mxu0 %v902
      %1113 = vmatprep.subr.bf16.mxu0 %v905
      %1114 = vmatpush1.bf16.msra.mxu0 %v904
      %1115 = vmatprep.subr.bf16.mxu0 %v907
      %1116 = vmatpush1.bf16.msra.mxu0 %v906
      %1117 = vmatprep.subr.bf16.mxu0 %v909
      %1118 = vmatpush1.bf16.msra.mxu0 %v908
      %1119 = vmatprep.subr.bf16.mxu0 %v911
      %1120 = vmatpush1.bf16.msra.mxu0 %v910
      %1121 = vmatprep.subr.bf16.mxu0 %v913
      %1122 = vmatpush1.bf16.msra.mxu0 %v912
      %1123 = vmatprep.subr.bf16.mxu0 %v915
      %1124 = vmatpush1.bf16.msra.mxu0 %v914
      %1125 = vmatprep.mubr.bf16.mxu0 %v453
      %1126 = vmatmul.mubr.bf16.gmra.mrb[0].mxu0 %v452
      %v1127 = vpop.f32.mrb[0].mxu0
      %v1128 = vadd.f32 %v583, %v1127
      %v1129 = vpop.f32.mrb[0].mxu0
      %v1130 = vadd.f32 %v587, %v1129
      %v1131 = vpop.f32.mrb[0].mxu0
      %v1132 = vadd.f32 %v583, %v1131
      %v1133 = vpop.f32.mrb[0].mxu0
      %v1134 = vadd.f32 %v587, %v1133
      %1135 = vmatprep.mubr.bf16.mxu0 %v460
      %1136 = vmatmul.mubr.bf16.gmra.mrb[0].mxu0 %v459
      %v1137 = vpop.f32.mrb[0].mxu0
      %v1138 = vadd.f32 %v583, %v1137
      %v1139 = vpop.f32.mrb[0].mxu0
      %v1140 = vadd.f32 %v587, %v1139
      %v1141 = vpop.f32.mrb[0].mxu0
      %v1142 = vadd.f32 %v583, %v1141
      %v1143 = vpop.f32.mrb[0].mxu0
      %v1144 = vadd.f32 %v587, %v1143
      %1145 = vmatprep.mubr.bf16.mxu0 %v467
      %1146 = vmatmul.mubr.bf16.gmra.mrb[0].mxu0 %v466
      %v1147 = vpop.f32.mrb[0].mxu0
      %v1148 = vadd.f32 %v583, %v1147
      %v1149 = vpop.f32.mrb[0].mxu0
      %v1150 = vadd.f32 %v587, %v1149
      %v1151 = vpop.f32.mrb[0].mxu0
      %v1152 = vadd.f32 %v583, %v1151
      %v1153 = vpop.f32.mrb[0].mxu0
      %v1154 = vadd.f32 %v587, %v1153
      %1155 = vmatprep.mubr.bf16.mxu0 %v474
      %1156 = vmatmul.mubr.bf16.gmra.mrb[0].mxu0 %v473
      %v1157 = vpop.f32.mrb[0].mxu0
      %v1158 = vadd.f32 %v583, %v1157
      %v1159 = vpop.f32.mrb[0].mxu0
      %v1160 = vadd.f32 %v587, %v1159
      %v1161 = vpop.f32.mrb[0].mxu0
      %v1162 = vadd.f32 %v583, %v1161
      %v1163 = vpop.f32.mrb[0].mxu0
      %v1164 = vadd.f32 %v587, %v1163
      %1165 = vdwg.mxu0
      %1166 = vmatprep.subr.bf16.mxu0 %v917
      %1167 = vmatpush1.bf16.msra.mxu0 %v916
      %1168 = vmatprep.subr.bf16.mxu0 %v919
      %1169 = vmatpush1.bf16.msra.mxu0 %v918
      %1170 = vmatprep.subr.bf16.mxu0 %v921
      %1171 = vmatpush1.bf16.msra.mxu0 %v920
      %1172 = vmatprep.subr.bf16.mxu0 %v923
      %1173 = vmatpush1.bf16.msra.mxu0 %v922
      %1174 = vmatprep.subr.bf16.mxu0 %v925
      %1175 = vmatpush1.bf16.msra.mxu0 %v924
      %1176 = vmatprep.subr.bf16.mxu0 %v927
      %1177 = vmatpush1.bf16.msra.mxu0 %v926
      %1178 = vmatprep.subr.bf16.mxu0 %v929
      %1179 = vmatpush1.bf16.msra.mxu0 %v928
      %1180 = vmatprep.subr.bf16.mxu0 %v931
      %1181 = vmatpush1.bf16.msra.mxu0 %v930
      %1182 = vmatprep.subr.bf16.mxu0 %v933
      %1183 = vmatpush1.bf16.msra.mxu0 %v932
      %1184 = vmatprep.subr.bf16.mxu0 %v935
      %1185 = vmatpush1.bf16.msra.mxu0 %v934
      %1186 = vmatprep.subr.bf16.mxu0 %v937
      %1187 = vmatpush1.bf16.msra.mxu0 %v936
      %1188 = vmatprep.subr.bf16.mxu0 %v939
      %1189 = vmatpush1.bf16.msra.mxu0 %v938
      %1190 = vmatprep.subr.bf16.mxu0 %v941
      %1191 = vmatpush1.bf16.msra.mxu0 %v940
      %1192 = vmatprep.subr.bf16.mxu0 %v943
      %1193 = vmatpush1.bf16.msra.mxu0 %v942
      %1194 = vmatprep.subr.bf16.mxu0 %v945
      %1195 = vmatpush1.bf16.msra.mxu0 %v944
      %1196 = vmatprep.subr.bf16.mxu0 %v947
      %1197 = vmatpush1.bf16.msra.mxu0 %v946
      %1198 = vmatprep.mubr.bf16.mxu0 %v455
      %1199 = vmatmul.mubr.bf16.gmra.mrb[0].mxu0 %v454
      %v1200 = vpop.f32.mrb[0].mxu0
      %v1201 = vadd.f32 %v1128, %v1200
      %v1202 = vpop.f32.mrb[0].mxu0
      %v1203 = vadd.f32 %v1130, %v1202
      %v1204 = vpop.f32.mrb[0].mxu0
      %v1205 = vadd.f32 %v1132, %v1204
      %v1206 = vpop.f32.mrb[0].mxu0
      %v1207 = vadd.f32 %v1134, %v1206
      %1208 = vmatprep.mubr.bf16.mxu0 %v462
      %1209 = vmatmul.mubr.bf16.gmra.mrb[0].mxu0 %v461
      %v1210 = vpop.f32.mrb[0].mxu0
      %v1211 = vadd.f32 %v1138, %v1210
      %v1212 = vpop.f32.mrb[0].mxu0
      %v1213 = vadd.f32 %v1140, %v1212
      %v1214 = vpop.f32.mrb[0].mxu0
      %v1215 = vadd.f32 %v1142, %v1214
      %v1216 = vpop.f32.mrb[0].mxu0
      %v1217 = vadd.f32 %v1144, %v1216
      %1218 = vmatprep.mubr.bf16.mxu0 %v469
      %1219 = vmatmul.mubr.bf16.gmra.mrb[0].mxu0 %v468
      %v1220 = vpop.f32.mrb[0].mxu0
      %v1221 = vadd.f32 %v1148, %v1220
      %v1222 = vpop.f32.mrb[0].mxu0
      %v1223 = vadd.f32 %v1150, %v1222
      %v1224 = vpop.f32.mrb[0].mxu0
      %v1225 = vadd.f32 %v1152, %v1224
      %v1226 = vpop.f32.mrb[0].mxu0
      %v1227 = vadd.f32 %v1154, %v1226
      %1228 = vmatprep.mubr.bf16.mxu0 %v476
      %1229 = vmatmul.mubr.bf16.gmra.mrb[0].mxu0 %v475
      %v1230 = vpop.f32.mrb[0].mxu0
      %v1231 = vadd.f32 %v1158, %v1230
      %v1232 = vpop.f32.mrb[0].mxu0
      %v1233 = vadd.f32 %v1160, %v1232
      %v1234 = vpop.f32.mrb[0].mxu0
      %v1235 = vadd.f32 %v1162, %v1234
      %v1236 = vpop.f32.mrb[0].mxu0
      %v1237 = vadd.f32 %v1164, %v1236
      %1238 = vdwg.mxu0
      %1239 = vmatprep.subr.bf16.mxu0 %v949
      %1240 = vmatpush1.bf16.msra.mxu0 %v948
      %1241 = vmatprep.subr.bf16.mxu0 %v951
      %1242 = vmatpush1.bf16.msra.mxu0 %v950
      %1243 = vmatprep.subr.bf16.mxu0 %v953
      %1244 = vmatpush1.bf16.msra.mxu0 %v952
      %1245 = vmatprep.subr.bf16.mxu0 %v955
      %1246 = vmatpush1.bf16.msra.mxu0 %v954
      %1247 = vmatprep.subr.bf16.mxu0 %v957
      %1248 = vmatpush1.bf16.msra.mxu0 %v956
      %1249 = vmatprep.subr.bf16.mxu0 %v959
      %1250 = vmatpush1.bf16.msra.mxu0 %v958
      %1251 = vmatprep.subr.bf16.mxu0 %v961
      %1252 = vmatpush1.bf16.msra.mxu0 %v960
      %1253 = vmatprep.subr.bf16.mxu0 %v963
      %1254 = vmatpush1.bf16.msra.mxu0 %v962
      %1255 = vmatprep.subr.bf16.mxu0 %v965
      %1256 = vmatpush1.bf16.msra.mxu0 %v964
      %1257 = vmatprep.subr.bf16.mxu0 %v967
      %1258 = vmatpush1.bf16.msra.mxu0 %v966
      %1259 = vmatprep.subr.bf16.mxu0 %v969
      %1260 = vmatpush1.bf16.msra.mxu0 %v968
      %1261 = vmatprep.subr.bf16.mxu0 %v971
      %1262 = vmatpush1.bf16.msra.mxu0 %v970
      %1263 = vmatprep.subr.bf16.mxu0 %v973
      %1264 = vmatpush1.bf16.msra.mxu0 %v972
      %1265 = vmatprep.subr.bf16.mxu0 %v975
      %1266 = vmatpush1.bf16.msra.mxu0 %v974
      %1267 = vmatprep.subr.bf16.mxu0 %v977
      %1268 = vmatpush1.bf16.msra.mxu0 %v976
      %1269 = vmatprep.subr.bf16.mxu0 %v979
      %1270 = vmatpush1.bf16.msra.mxu0 %v978
      %1271 = vmatprep.mubr.bf16.mxu0 %v457
      %1272 = vmatmul.mubr.bf16.gmra.mrb[0].mxu0 %v456
      %v1273 = vpop.f32.mrb[0].mxu0
      %v1274 = vadd.f32 %v1201, %v1273
      %v1275 = vpop.f32.mrb[0].mxu0
      %v1276 = vadd.f32 %v1203, %v1275
      %v1277 = vpop.f32.mrb[0].mxu0
      %v1278 = vadd.f32 %v1205, %v1277
      %v1279 = vpop.f32.mrb[0].mxu0
      %v1280 = vadd.f32 %v1207, %v1279
      %1281 = vmatprep.mubr.bf16.mxu0 %v464
      %1282 = vmatmul.mubr.bf16.gmra.mrb[0].mxu0 %v463
      %v1283 = vpop.f32.mrb[0].mxu0
      %v1284 = vadd.f32 %v1211, %v1283
      %v1285 = vpop.f32.mrb[0].mxu0
      %v1286 = vadd.f32 %v1213, %v1285
      %v1287 = vpop.f32.mrb[0].mxu0
      %v1288 = vadd.f32 %v1215, %v1287
      %v1289 = vpop.f32.mrb[0].mxu0
      %v1290 = vadd.f32 %v1217, %v1289
      %1291 = vmatprep.mubr.bf16.mxu0 %v471
      %1292 = vmatmul.mubr.bf16.gmra.mrb[0].mxu0 %v470
      %v1293 = vpop.f32.mrb[0].mxu0
      %v1294 = vadd.f32 %v1221, %v1293
      %v1295 = vpop.f32.mrb[0].mxu0
      %v1296 = vadd.f32 %v1223, %v1295
      %v1297 = vpop.f32.mrb[0].mxu0
      %v1298 = vadd.f32 %v1225, %v1297
      %v1299 = vpop.f32.mrb[0].mxu0
      %v1300 = vadd.f32 %v1227, %v1299
      %1301 = vmatprep.mubr.bf16.mxu0 %v478
      %1302 = vmatmul.mubr.bf16.gmra.mrb[0].mxu0 %v477
      %v1303 = vpop.f32.mrb[0].mxu0
      %v1304 = vadd.f32 %v1231, %v1303
      %v1305 = vpop.f32.mrb[0].mxu0
      %v1306 = vadd.f32 %v1233, %v1305
      %v1307 = vpop.f32.mrb[0].mxu0
      %v1308 = vadd.f32 %v1235, %v1307
      %v1309 = vpop.f32.mrb[0].mxu0
      %v1310 = vadd.f32 %v1237, %v1309
      %1311 = vdwg.mxu0
      %1312 = vmatprep.subr.bf16.mxu0 %v981
      %1313 = vmatpush1.bf16.msra.mxu0 %v980
      %1314 = vmatprep.subr.bf16.mxu0 0
      %1315 = vmatpush1.bf16.msra.mxu0 0
      %1316 = vmatprep.subr.bf16.mxu0 0
      %1317 = vmatpush1.bf16.msra.mxu0 0
      %1318 = vmatprep.subr.bf16.mxu0 0
      %1319 = vmatpush1.bf16.msra.mxu0 0
      %1320 = vmatprep.subr.bf16.mxu0 0
      %1321 = vmatpush1.bf16.msra.mxu0 0
      %1322 = vmatprep.subr.bf16.mxu0 0
      %1323 = vmatpush1.bf16.msra.mxu0 0
      %1324 = vmatprep.subr.bf16.mxu0 0
      %1325 = vmatpush1.bf16.msra.mxu0 0
      %1326 = vmatprep.subr.bf16.mxu0 0
      %1327 = vmatpush1.bf16.msra.mxu0 0
      %1328 = vmatprep.subr.bf16.mxu0 0
      %1329 = vmatpush1.bf16.msra.mxu0 0
      %1330 = vmatprep.subr.bf16.mxu0 0
      %1331 = vmatpush1.bf16.msra.mxu0 0
      %1332 = vmatprep.subr.bf16.mxu0 0
      %1333 = vmatpush1.bf16.msra.mxu0 0
      %1334 = vmatprep.subr.bf16.mxu0 0
      %1335 = vmatpush1.bf16.msra.mxu0 0
      %1336 = vmatprep.subr.bf16.mxu0 0
      %1337 = vmatpush1.bf16.msra.mxu0 0
      %1338 = vmatprep.subr.bf16.mxu0 0
      %1339 = vmatpush1.bf16.msra.mxu0 0
      %1340 = vmatprep.subr.bf16.mxu0 0
      %1341 = vmatpush1.bf16.msra.mxu0 0
      %1342 = vmatprep.subr.bf16.mxu0 0
      %1343 = vmatpush1.bf16.msra.mxu0 0
      %1344 = vmatprep.mubr.bf16.mxu0 0
      %1345 = vmatmul.mubr.bf16.gmra.mrb[0].mxu0 %v1082
      %v1346 = vpop.f32.mrb[0].mxu0
      %v1347 = vadd.f32 %v1274, %v1346
      %v1348 = vpop.f32.mrb[0].mxu0
      %v1349 = vadd.f32 %v1276, %v1348
      %v1350 = vpop.f32.mrb[0].mxu0
      %v1351 = vadd.f32 %v1278, %v1350
      %v1352 = vpop.f32.mrb[0].mxu0
      %v1353 = vadd.f32 %v1280, %v1352
      %1354 = vmatprep.mubr.bf16.mxu0 0
      %1355 = vmatmul.mubr.bf16.gmra.mrb[0].mxu0 %v1085
      %v1356 = vpop.f32.mrb[0].mxu0
      %v1357 = vadd.f32 %v1284, %v1356
      %v1358 = vpop.f32.mrb[0].mxu0
      %v1359 = vadd.f32 %v1286, %v1358
      %v1360 = vpop.f32.mrb[0].mxu0
      %v1361 = vadd.f32 %v1288, %v1360
      %v1362 = vpop.f32.mrb[0].mxu0
      %v1363 = vadd.f32 %v1290, %v1362
      %1364 = vmatprep.mubr.bf16.mxu0 0
      %1365 = vmatmul.mubr.bf16.gmra.mrb[0].mxu0 %v1088
      %v1366 = vpop.f32.mrb[0].mxu0
      %v1367 = vadd.f32 %v1294, %v1366
      %v1368 = vpop.f32.mrb[0].mxu0
      %v1369 = vadd.f32 %v1296, %v1368
      %v1370 = vpop.f32.mrb[0].mxu0
      %v1371 = vadd.f32 %v1298, %v1370
      %v1372 = vpop.f32.mrb[0].mxu0
      %v1373 = vadd.f32 %v1300, %v1372
      %1374 = vmatprep.mubr.bf16.mxu0 0
      %1375 = vmatmul.mubr.bf16.gmra.mrb[0].mxu0 %v1091
      %v1376 = vpop.f32.mrb[0].mxu0
      %v1377 = vadd.f32 %v1304, %v1376
      %v1378 = vpop.f32.mrb[0].mxu0
      %v1379 = vadd.f32 %v1306, %v1378
      %v1380 = vpop.f32.mrb[0].mxu0
      %v1381 = vadd.f32 %v1308, %v1380
      %v1382 = vpop.f32.mrb[0].mxu0
      %v1383 = vadd.f32 %v1310, %v1382
      %1384 = vdwg.mxu0
      %v1385 = vmax.f32 %v1347, 0.0
      %v1386 = vmax.f32 %v1349, 0.0
      %v1387 = vmax.f32 %v1351, 0.0
      %v1388 = vmax.f32 %v1353, 0.0
      %v1389 = vmax.f32 %v1357, 0.0
      %v1390 = vmax.f32 %v1359, 0.0
      %v1391 = vmax.f32 %v1361, 0.0
      %v1392 = vmax.f32 %v1363, 0.0
      %v1393 = vmax.f32 %v1367, 0.0
      %v1394 = vmax.f32 %v1369, 0.0
      %v1395 = vmax.f32 %v1371, 0.0
      %v1396 = vmax.f32 %v1373, 0.0
      %v1397 = vmax.f32 %v1377, 0.0
      %v1398 = vmax.f32 %v1379, 0.0
      %v1399 = vmax.f32 %v1381, 0.0
      %v1400 = vmax.f32 %v1383, 0.0
      %v1401 = vpack.c.bf16 %v1387, %v1385
      %v1402 = vpack.c.bf16 %v1388, %v1386
      %v1403 = vpack.c.bf16 %v1391, %v1389
      %v1404 = vpack.c.bf16 %v1392, %v1390
      %v1405 = vpack.c.bf16 %v1395, %v1393
      %v1406 = vpack.c.bf16 %v1396, %v1394
      %v1407 = vpack.c.bf16 %v1399, %v1397
      %v1408 = vpack.c.bf16 %v1400, %v1398
      %v1409 = vld [vmem:[%s3] sm:$0xf]
      %v1410 = vld [vmem:[%s3 + $0x4] sm:$0xf]
      %v1411 = vld [vmem:[%s3 + $0x8] sm:$0xf]
      %v1412 = vld [vmem:[%s3 + $0xc] sm:$0xf]
      %v1413 = vld [vmem:[%s3 + $0x10] sm:$0xf]
      %v1414 = vld [vmem:[%s3 + $0x14] sm:$0xf]
      %v1415 = vld [vmem:[%s3 + $0x18] sm:$0xf]
      %v1416 = vld [vmem:[%s3 + $0x1c] sm:$0xf]
      %v1417 = vld [vmem:[%s3 + $0x20] sm:$0xf]
      %v1418 = vld [vmem:[%s3 + $0x24] sm:$0xf]
      %v1419 = vld [vmem:[%s3 + $0x28] sm:$0xf]
      %v1420 = vld [vmem:[%s3 + $0x2c] sm:$0xf]
      %v1421 = vld [vmem:[%s3 + $0x30] sm:$0xf]
      %v1422 = vld [vmem:[%s3 + $0x34] sm:$0xf]
      %v1423 = vld [vmem:[%s3 + $0x38] sm:$0xf]
      %v1424 = vld [vmem:[%s3 + $0x3c] sm:$0xf]
      %v1425 = vld [vmem:[%s3 + $0x40] sm:$0xf]
      %v1426 = vld [vmem:[%s3 + $0x44] sm:$0xf]
      %v1427 = vld [vmem:[%s3 + $0x48] sm:$0xf]
      %v1428 = vld [vmem:[%s3 + $0x4c] sm:$0xf]
      %v1429 = vld [vmem:[%s3 + $0x50] sm:$0xf]
      %v1430 = vld [vmem:[%s3 + $0x54] sm:$0xf]
      %v1431 = vld [vmem:[%s3 + $0x58] sm:$0xf]
      %v1432 = vld [vmem:[%s3 + $0x5c] sm:$0xf]
      %v1433 = vld [vmem:[%s3 + $0x60] sm:$0xf]
      %v1434 = vld [vmem:[%s3 + $0x64] sm:$0xf]
      %v1435 = vld [vmem:[%s3 + $0x68] sm:$0xf]
      %v1436 = vld [vmem:[%s3 + $0x6c] sm:$0xf]
      %v1437 = vld [vmem:[%s3 + $0x70] sm:$0xf]
      %v1438 = vld [vmem:[%s3 + $0x74] sm:$0xf]
      %v1439 = vld [vmem:[%s3 + $0x78] sm:$0xf]
      %v1440 = vld [vmem:[%s3 + $0x7c] sm:$0xf]
      %v1441 = vld [vmem:[%s4] sm:$0x1]
      %v1443 = vlaneseq
      %v1444 = vshrl.u32 %v1443, 7
      %v1445 = vsub.s32 0, %v1444
      %v1446 = vrot.slane %v1441, %v1445
      %v1480 = vunpack.c.l.b16 %v1409
      %v1481 = vunpack.c.l.b16 %v1410
      %v1482 = vunpack.c.l.b16 %v1411
      %v1483 = vunpack.c.l.b16 %v1412
      %v1484 = vunpack.c.l.b16 %v1413
      %v1485 = vunpack.c.l.b16 %v1414
      %v1486 = vunpack.c.l.b16 %v1415
      %v1487 = vunpack.c.l.b16 %v1416
      %v1488 = vunpack.c.l.b16 %v1417
      %v1489 = vunpack.c.l.b16 %v1418
      %v1490 = vunpack.c.l.b16 %v1419
      %v1491 = vunpack.c.l.b16 %v1420
      %v1492 = vunpack.c.l.b16 %v1421
      %v1493 = vunpack.c.l.b16 %v1422
      %v1494 = vunpack.c.l.b16 %v1423
      %v1495 = vunpack.c.l.b16 %v1424
      %v1496 = vunpack.c.l.b16 %v1425
      %v1497 = vunpack.c.l.b16 %v1426
      %v1498 = vunpack.c.l.b16 %v1427
      %v1499 = vunpack.c.l.b16 %v1428
      %v1500 = vunpack.c.l.b16 %v1429
      %v1501 = vunpack.c.l.b16 %v1430
      %v1502 = vunpack.c.l.b16 %v1431
      %v1503 = vunpack.c.l.b16 %v1432
      %v1504 = vunpack.c.l.b16 %v1433
      %v1505 = vunpack.c.l.b16 %v1434
      %v1506 = vunpack.c.l.b16 %v1435
      %v1507 = vunpack.c.l.b16 %v1436
      %v1508 = vunpack.c.l.b16 %v1437
      %v1509 = vunpack.c.l.b16 %v1438
      %v1510 = vunpack.c.l.b16 %v1439
      %v1511 = vunpack.c.l.b16 %v1440
      %v1512 = vpack.c.b16 %v1481, %v1480
      %v1513 = vpack.c.b16 %v1483, %v1482
      %v1514 = vpack.c.b16 %v1485, %v1484
      %v1515 = vpack.c.b16 %v1487, %v1486
      %v1516 = vpack.c.b16 %v1489, %v1488
      %v1517 = vpack.c.b16 %v1491, %v1490
      %v1518 = vpack.c.b16 %v1493, %v1492
      %v1519 = vpack.c.b16 %v1495, %v1494
      %v1520 = vpack.c.b16 %v1497, %v1496
      %v1521 = vpack.c.b16 %v1499, %v1498
      %v1522 = vpack.c.b16 %v1501, %v1500
      %v1523 = vpack.c.b16 %v1503, %v1502
      %v1524 = vpack.c.b16 %v1505, %v1504
      %v1525 = vpack.c.b16 %v1507, %v1506
      %v1526 = vpack.c.b16 %v1509, %v1508
      %v1527 = vpack.c.b16 %v1511, %v1510
      %1544 = vmatprep.subr.bf16.mxu0 0
      %1545 = vmatpush1.bf16.msra.mxu0 %v1512
      %1546 = vmatprep.subr.bf16.mxu0 0
      %1547 = vmatpush1.bf16.msra.mxu0 %v1513
      %1548 = vmatprep.subr.bf16.mxu0 0
      %1549 = vmatpush1.bf16.msra.mxu0 %v1514
      %1550 = vmatprep.subr.bf16.mxu0 0
      %1551 = vmatpush1.bf16.msra.mxu0 %v1515
      %1552 = vmatprep.subr.bf16.mxu0 0
      %1553 = vmatpush1.bf16.msra.mxu0 %v1516
      %1554 = vmatprep.subr.bf16.mxu0 0
      %1555 = vmatpush1.bf16.msra.mxu0 %v1517
      %1556 = vmatprep.subr.bf16.mxu0 0
      %1557 = vmatpush1.bf16.msra.mxu0 %v1518
      %1558 = vmatprep.subr.bf16.mxu0 0
      %1559 = vmatpush1.bf16.msra.mxu0 %v1519
      %1560 = vmatprep.subr.bf16.mxu0 0
      %1561 = vmatpush1.bf16.msra.mxu0 %v1520
      %1562 = vmatprep.subr.bf16.mxu0 0
      %1563 = vmatpush1.bf16.msra.mxu0 %v1521
      %1564 = vmatprep.subr.bf16.mxu0 0
      %1565 = vmatpush1.bf16.msra.mxu0 %v1522
      %1566 = vmatprep.subr.bf16.mxu0 0
      %1567 = vmatpush1.bf16.msra.mxu0 %v1523
      %1568 = vmatprep.subr.bf16.mxu0 0
      %1569 = vmatpush1.bf16.msra.mxu0 %v1524
      %1570 = vmatprep.subr.bf16.mxu0 0
      %1571 = vmatpush1.bf16.msra.mxu0 %v1525
      %1572 = vmatprep.subr.bf16.mxu0 0
      %1573 = vmatpush1.bf16.msra.mxu0 %v1526
      %1574 = vmatprep.subr.bf16.mxu0 0
      %1575 = vmatpush1.bf16.msra.mxu0 %v1527
      %1576 = vmatprep.mubr.bf16.mxu0 %v1402
      %1577 = vmatmul.mubr.bf16.gmra.mrb[0].mxu0 %v1401
      %v1578 = vpop.f32.mrb[0].mxu0
      %v1579 = vadd.f32 %v1446, %v1578
      %v1580 = vpop.f32.mrb[0].mxu0
      %v1581 = vpop.f32.mrb[0].mxu0
      %v1582 = vadd.f32 %v1446, %v1581
      %v1583 = vpop.f32.mrb[0].mxu0
      %1584 = vmatprep.mubr.bf16.mxu0 %v1404
      %1585 = vmatmul.mubr.bf16.gmra.mrb[0].mxu0 %v1403
      %v1586 = vpop.f32.mrb[0].mxu0
      %v1587 = vadd.f32 %v1446, %v1586
      %v1588 = vpop.f32.mrb[0].mxu0
      %v1589 = vpop.f32.mrb[0].mxu0
      %v1590 = vadd.f32 %v1446, %v1589
      %v1591 = vpop.f32.mrb[0].mxu0
      %1592 = vmatprep.mubr.bf16.mxu0 %v1406
      %1593 = vmatmul.mubr.bf16.gmra.mrb[0].mxu0 %v1405
      %v1594 = vpop.f32.mrb[0].mxu0
      %v1595 = vadd.f32 %v1446, %v1594
      %v1596 = vpop.f32.mrb[0].mxu0
      %v1597 = vpop.f32.mrb[0].mxu0
      %v1598 = vadd.f32 %v1446, %v1597
      %v1599 = vpop.f32.mrb[0].mxu0
      %1600 = vmatprep.mubr.bf16.mxu0 %v1408
      %1601 = vmatmul.mubr.bf16.gmra.mrb[0].mxu0 %v1407
      %v1602 = vpop.f32.mrb[0].mxu0
      %v1603 = vadd.f32 %v1446, %v1602
      %v1604 = vpop.f32.mrb[0].mxu0
      %v1605 = vpop.f32.mrb[0].mxu0
      %v1606 = vadd.f32 %v1446, %v1605
      %v1607 = vpop.f32.mrb[0].mxu0
      %1608 = vdwg.mxu0
      %v1609 = vmax.f32 %v1579, 0.0
      %v1610 = vmax.f32 %v1582, 0.0
      %v1611 = vmax.f32 %v1587, 0.0
      %v1612 = vmax.f32 %v1590, 0.0
      %v1613 = vmax.f32 %v1595, 0.0
      %v1614 = vmax.f32 %v1598, 0.0
      %v1615 = vmax.f32 %v1603, 0.0
      %v1616 = vmax.f32 %v1606, 0.0
      %v1617 = vpack.c.bf16 %v1610, %v1609
      %v1618 = vpack.c.bf16 %v1612, %v1611
      %v1619 = vpack.c.bf16 %v1614, %v1613
      %v1620 = vpack.c.bf16 %v1616, %v1615
      %v1621 = vld [vmem:[%s5] sm:$0xf]
      %v1622 = vld [vmem:[%s5 + $0x4] sm:$0xf]
      %v1623 = vld [vmem:[%s5 + $0x8] sm:$0xf]
      %v1624 = vld [vmem:[%s5 + $0xc] sm:$0xf]
      %v1625 = vld [vmem:[%s6] sm:$0x1]
      %v1627 = vlaneseq
      %v1628 = vshrl.u32 %v1627, 7
      %v1629 = vsub.s32 0, %v1628
      %v1630 = vrot.slane %v1625, %v1629
      %v1636 = vunpack.c.l.b16 %v1621
      %v1637 = vunpack.c.l.b16 %v1622
      %v1638 = vunpack.c.l.b16 %v1623
      %v1639 = vunpack.c.l.b16 %v1624
      %v1640 = vpack.c.b16 %v1637, %v1636
      %v1641 = vpack.c.b16 %v1639, %v1638
      %vm1644 = vcmask 261120
      %v1646 = vsel %vm1644, %v1617, 0
      %v1649 = vsel %vm1644, %v1618, 0
      %v1652 = vsel %vm1644, %v1619, 0
      %v1655 = vsel %vm1644, %v1620, 0
      %1657 = vmatprep.subr.bf16.mxu0 0
      %1658 = vmatpush1.bf16.msra.mxu0 %v1640
      %1659 = vmatprep.subr.bf16.mxu0 0
      %1660 = vmatpush1.bf16.msra.mxu0 %v1641
      %1661 = vmatprep.subr.bf16.mxu0 0
      %1662 = vmatpush1.bf16.msra.mxu0 0
      %1663 = vmatprep.subr.bf16.mxu0 0
      %1664 = vmatpush1.bf16.msra.mxu0 0
      %1665 = vmatprep.subr.bf16.mxu0 0
      %1666 = vmatpush1.bf16.msra.mxu0 0
      %1667 = vmatprep.subr.bf16.mxu0 0
      %1668 = vmatpush1.bf16.msra.mxu0 0
      %1669 = vmatprep.subr.bf16.mxu0 0
      %1670 = vmatpush1.bf16.msra.mxu0 0
      %1671 = vmatprep.subr.bf16.mxu0 0
      %1672 = vmatpush1.bf16.msra.mxu0 0
      %1673 = vmatprep.subr.bf16.mxu0 0
      %1674 = vmatpush1.bf16.msra.mxu0 0
      %1675 = vmatprep.subr.bf16.mxu0 0
      %1676 = vmatpush1.bf16.msra.mxu0 0
      %1677 = vmatprep.subr.bf16.mxu0 0
      %1678 = vmatpush1.bf16.msra.mxu0 0
      %1679 = vmatprep.subr.bf16.mxu0 0
      %1680 = vmatpush1.bf16.msra.mxu0 0
      %1681 = vmatprep.subr.bf16.mxu0 0
      %1682 = vmatpush1.bf16.msra.mxu0 0
      %1683 = vmatprep.subr.bf16.mxu0 0
      %1684 = vmatpush1.bf16.msra.mxu0 0
      %1685 = vmatprep.subr.bf16.mxu0 0
      %1686 = vmatpush1.bf16.msra.mxu0 0
      %1687 = vmatprep.subr.bf16.mxu0 0
      %1688 = vmatpush1.bf16.msra.mxu0 0
      %1689 = vmatprep.mubr.bf16.mxu0 0
      %1690 = vmatmul.mubr.bf16.gmra.mrb[0].mxu0 %v1646
      %v1691 = vpop.f32.mrb[0].mxu0
      %v1692 = vadd.f32 %v1630, %v1691
      %v1693 = vpop.f32.mrb[0].mxu0
      %v1694 = vpop.f32.mrb[0].mxu0
      %v1695 = vadd.f32 %v1630, %v1694
      %v1696 = vpop.f32.mrb[0].mxu0
      %1697 = vmatprep.mubr.bf16.mxu0 0
      %1698 = vmatmul.mubr.bf16.gmra.mrb[0].mxu0 %v1649
      %v1699 = vpop.f32.mrb[0].mxu0
      %v1700 = vadd.f32 %v1630, %v1699
      %v1701 = vpop.f32.mrb[0].mxu0
      %v1702 = vpop.f32.mrb[0].mxu0
      %v1703 = vadd.f32 %v1630, %v1702
      %v1704 = vpop.f32.mrb[0].mxu0
      %1705 = vmatprep.mubr.bf16.mxu0 0
      %1706 = vmatmul.mubr.bf16.gmra.mrb[0].mxu0 %v1652
      %v1707 = vpop.f32.mrb[0].mxu0
      %v1708 = vadd.f32 %v1630, %v1707
      %v1709 = vpop.f32.mrb[0].mxu0
      %v1710 = vpop.f32.mrb[0].mxu0
      %v1711 = vadd.f32 %v1630, %v1710
      %v1712 = vpop.f32.mrb[0].mxu0
      %1713 = vmatprep.mubr.bf16.mxu0 0
      %1714 = vmatmul.mubr.bf16.gmra.mrb[0].mxu0 %v1655
      %v1715 = vpop.f32.mrb[0].mxu0
      %v1716 = vadd.f32 %v1630, %v1715
      %v1717 = vpop.f32.mrb[0].mxu0
      %v1718 = vpop.f32.mrb[0].mxu0
      %v1719 = vadd.f32 %v1630, %v1718
      %v1720 = vpop.f32.mrb[0].mxu0
      %1721 = vdwg.mxu0
      %v1722 = vmax.f32 %v1692, 0.0
      %v1723 = vmax.f32 %v1695, 0.0
      %v1724 = vmax.f32 %v1700, 0.0
      %v1725 = vmax.f32 %v1703, 0.0
      %v1726 = vmax.f32 %v1708, 0.0
      %v1727 = vmax.f32 %v1711, 0.0
      %v1728 = vmax.f32 %v1716, 0.0
      %v1729 = vmax.f32 %v1719, 0.0
      %v1730 = vpack.c.bf16 %v1723, %v1722
      %v1731 = vpack.c.bf16 %v1725, %v1724
      %v1732 = vpack.c.bf16 %v1727, %v1726
      %v1733 = vpack.c.bf16 %v1729, %v1728
      %v1734 = vld [vmem:[%s7] sm:$0xff]
      %v1735 = vld [vmem:[%s7 + $0x8] sm:$0xff]
      %v1736 = vld [vmem:[%s7 + $0x10] sm:$0xff]
      %v1737 = vld [vmem:[%s7 + $0x18] sm:$0xff]
      %v1738 = vld [vmem:[%s8] sm:$0x3]
      %v1740 = vlaneseq
      %v1741 = vshrl.u32 %v1740, 7
      %v1742 = vsub.s32 0, %v1741
      %v1743 = vrot.slane %v1738, %v1742
      %v1744 = vlaneseq
      %v1745 = vshrl.u32 %v1744, 7
      %v1746 = vsub.s32 1, %v1745
      %v1747 = vrot.slane %v1738, %v1746
      %v1754 = vunpack.c.l.b16 %v1734
      %v1755 = vunpack.c.h.b16 %v1734
      %v1756 = vunpack.c.l.b16 %v1735
      %v1757 = vunpack.c.h.b16 %v1735
      %v1758 = vunpack.c.l.b16 %v1736
      %v1759 = vunpack.c.h.b16 %v1736
      %v1760 = vunpack.c.l.b16 %v1737
      %v1761 = vunpack.c.h.b16 %v1737
      %v1762 = vpack.c.b16 %v1756, %v1754
      %v1763 = vpack.c.b16 %v1757, %v1755
      %v1764 = vpack.c.b16 %v1760, %v1758
      %v1765 = vpack.c.b16 %v1761, %v1759
      %v1771 = vsel %vm1644, %v1730, 0
      %v1774 = vsel %vm1644, %v1731, 0
      %v1777 = vsel %vm1644, %v1732, 0
      %v1780 = vsel %vm1644, %v1733, 0
      %1782 = vmatprep.subr.bf16.mxu0 %v1763
      %1783 = vmatpush1.bf16.msra.mxu0 %v1762
      %1784 = vmatprep.subr.bf16.mxu0 %v1765
      %1785 = vmatpush1.bf16.msra.mxu0 %v1764
      %1786 = vmatprep.subr.bf16.mxu0 0
      %1787 = vmatpush1.bf16.msra.mxu0 0
      %1788 = vmatprep.subr.bf16.mxu0 0
      %1789 = vmatpush1.bf16.msra.mxu0 0
      %1790 = vmatprep.subr.bf16.mxu0 0
      %1791 = vmatpush1.bf16.msra.mxu0 0
      %1792 = vmatprep.subr.bf16.mxu0 0
      %1793 = vmatpush1.bf16.msra.mxu0 0
      %1794 = vmatprep.subr.bf16.mxu0 0
      %1795 = vmatpush1.bf16.msra.mxu0 0
      %1796 = vmatprep.subr.bf16.mxu0 0
      %1797 = vmatpush1.bf16.msra.mxu0 0
      %1798 = vmatprep.subr.bf16.mxu0 0
      %1799 = vmatpush1.bf16.msra.mxu0 0
      %1800 = vmatprep.subr.bf16.mxu0 0
      %1801 = vmatpush1.bf16.msra.mxu0 0
      %1802 = vmatprep.subr.bf16.mxu0 0
      %1803 = vmatpush1.bf16.msra.mxu0 0
      %1804 = vmatprep.subr.bf16.mxu0 0
      %1805 = vmatpush1.bf16.msra.mxu0 0
      %1806 = vmatprep.subr.bf16.mxu0 0
      %1807 = vmatpush1.bf16.msra.mxu0 0
      %1808 = vmatprep.subr.bf16.mxu0 0
      %1809 = vmatpush1.bf16.msra.mxu0 0
      %1810 = vmatprep.subr.bf16.mxu0 0
      %1811 = vmatpush1.bf16.msra.mxu0 0
      %1812 = vmatprep.subr.bf16.mxu0 0
      %1813 = vmatpush1.bf16.msra.mxu0 0
      %1814 = vmatprep.mubr.bf16.mxu0 0
      %1815 = vmatmul.mubr.bf16.gmra.mrb[0].mxu0 %v1771
      %v1816 = vpop.f32.mrb[0].mxu0
      %v1817 = vadd.f32 %v1743, %v1816
      %v1818 = vpop.f32.mrb[0].mxu0
      %v1819 = vadd.f32 %v1747, %v1818
      %v1820 = vpop.f32.mrb[0].mxu0
      %v1821 = vadd.f32 %v1743, %v1820
      %v1822 = vpop.f32.mrb[0].mxu0
      %v1823 = vadd.f32 %v1747, %v1822
      %1824 = vmatprep.mubr.bf16.mxu0 0
      %1825 = vmatmul.mubr.bf16.gmra.mrb[0].mxu0 %v1774
      %v1826 = vpop.f32.mrb[0].mxu0
      %v1827 = vadd.f32 %v1743, %v1826
      %v1828 = vpop.f32.mrb[0].mxu0
      %v1829 = vadd.f32 %v1747, %v1828
      %v1830 = vpop.f32.mrb[0].mxu0
      %v1831 = vadd.f32 %v1743, %v1830
      %v1832 = vpop.f32.mrb[0].mxu0
      %v1833 = vadd.f32 %v1747, %v1832
      %1834 = vmatprep.mubr.bf16.mxu0 0
      %1835 = vmatmul.mubr.bf16.gmra.mrb[0].mxu0 %v1777
      %v1836 = vpop.f32.mrb[0].mxu0
      %v1837 = vadd.f32 %v1743, %v1836
      %v1838 = vpop.f32.mrb[0].mxu0
      %v1839 = vadd.f32 %v1747, %v1838
      %v1840 = vpop.f32.mrb[0].mxu0
      %v1841 = vadd.f32 %v1743, %v1840
      %v1842 = vpop.f32.mrb[0].mxu0
      %v1843 = vadd.f32 %v1747, %v1842
      %1844 = vmatprep.mubr.bf16.mxu0 0
      %1845 = vmatmul.mubr.bf16.gmra.mrb[0].mxu0 %v1780
      %v1846 = vpop.f32.mrb[0].mxu0
      %v1847 = vadd.f32 %v1743, %v1846
      %v1848 = vpop.f32.mrb[0].mxu0
      %v1849 = vadd.f32 %v1747, %v1848
      %v1850 = vpop.f32.mrb[0].mxu0
      %v1851 = vadd.f32 %v1743, %v1850
      %v1852 = vpop.f32.mrb[0].mxu0
      %v1853 = vadd.f32 %v1747, %v1852
      %1854 = vdwg.mxu0
      %v1855 = vmax.f32 %v1817, 0.0
      %v1856 = vmax.f32 %v1819, 0.0
      %v1857 = vmax.f32 %v1821, 0.0
      %v1858 = vmax.f32 %v1823, 0.0
      %v1859 = vmax.f32 %v1827, 0.0
      %v1860 = vmax.f32 %v1829, 0.0
      %v1861 = vmax.f32 %v1831, 0.0
      %v1862 = vmax.f32 %v1833, 0.0
      %v1863 = vmax.f32 %v1837, 0.0
      %v1864 = vmax.f32 %v1839, 0.0
      %v1865 = vmax.f32 %v1841, 0.0
      %v1866 = vmax.f32 %v1843, 0.0
      %v1867 = vmax.f32 %v1847, 0.0
      %v1868 = vmax.f32 %v1849, 0.0
      %v1869 = vmax.f32 %v1851, 0.0
      %v1870 = vmax.f32 %v1853, 0.0
      %v1871 = vpack.c.bf16 %v1857, %v1855
      %v1872 = vpack.c.bf16 %v1858, %v1856
      %v1873 = vpack.c.bf16 %v1861, %v1859
      %v1874 = vpack.c.bf16 %v1862, %v1860
      %v1875 = vpack.c.bf16 %v1865, %v1863
      %v1876 = vpack.c.bf16 %v1866, %v1864
      %v1877 = vpack.c.bf16 %v1869, %v1867
      %v1878 = vpack.c.bf16 %v1870, %v1868
      %v1879 = vld [vmem:[%s9] sm:$0xff]
      %v1880 = vld [vmem:[%s9 + $0x8] sm:$0xff]
      %v1881 = vld [vmem:[%s9 + $0x10] sm:$0xff]
      %v1882 = vld [vmem:[%s9 + $0x18] sm:$0xf]
      %v1883 = vld [vmem:[%s9 + $0x1c] sm:$0xff]
      %v1884 = vld [vmem:[%s9 + $0x24] sm:$0xff]
      %v1885 = vld [vmem:[%s9 + $0x2c] sm:$0xff]
      %v1886 = vld [vmem:[%s9 + $0x34] sm:$0xf]
      %v1887 = vld [vmem:[%s9 + $0x38] sm:$0xff]
      %v1888 = vld [vmem:[%s9 + $0x40] sm:$0xff]
      %v1889 = vld [vmem:[%s9 + $0x48] sm:$0xff]
      %v1890 = vld [vmem:[%s9 + $0x50] sm:$0xf]
      %v1891 = vld [vmem:[%s9 + $0x54] sm:$0xff]
      %v1892 = vld [vmem:[%s9 + $0x5c] sm:$0xff]
      %v1893 = vld [vmem:[%s9 + $0x64] sm:$0xff]
      %v1894 = vld [vmem:[%s9 + $0x6c] sm:$0xf]
      %v1895 = vld [vmem:[%s9 + $0x70] sm:$0xff]
      %v1896 = vld [vmem:[%s9 + $0x78] sm:$0xff]
      %v1897 = vld [vmem:[%s9 + $0x80] sm:$0xff]
      %v1898 = vld [vmem:[%s9 + $0x88] sm:$0xf]
      %v1899 = vld [vmem:[%s9 + $0x8c] sm:$0xff]
      %v1900 = vld [vmem:[%s9 + $0x94] sm:$0xff]
      %v1901 = vld [vmem:[%s9 + $0x9c] sm:$0xff]
      %v1902 = vld [vmem:[%s9 + $0xa4] sm:$0xf]
      %v1903 = vld [vmem:[%s9 + $0xa8] sm:$0xff]
      %v1904 = vld [vmem:[%s9 + $0xb0] sm:$0xff]
      %v1905 = vld [vmem:[%s9 + $0xb8] sm:$0xff]
      %v1906 = vld [vmem:[%s9 + $0xc0] sm:$0xf]
      %v1907 = vld [vmem:[%s9 + $0xc4] sm:$0xff]
      %v1908 = vld [vmem:[%s9 + $0xcc] sm:$0xff]
      %v1909 = vld [vmem:[%s9 + $0xd4] sm:$0xff]
      %v1910 = vld [vmem:[%s9 + $0xdc] sm:$0xf]
      %v1911 = vld [vmem:[%s9 + $0xe0] sm:$0xff]
      %v1912 = vld [vmem:[%s9 + $0xe8] sm:$0xff]
      %v1913 = vld [vmem:[%s9 + $0xf0] sm:$0xff]
      %v1914 = vld [vmem:[%s9 + $0xf8] sm:$0xf]
      %v1915 = vld [vmem:[%s9 + $0xfc] sm:$0xff]
      %v1916 = vld [vmem:[%s9 + $0x104] sm:$0xff]
      %v1917 = vld [vmem:[%s9 + $0x10c] sm:$0xff]
      %v1918 = vld [vmem:[%s9 + $0x114] sm:$0xf]
      %v1919 = vld [vmem:[%s9 + $0x118] sm:$0xff]
      %v1920 = vld [vmem:[%s9 + $0x120] sm:$0xff]
      %v1921 = vld [vmem:[%s9 + $0x128] sm:$0xff]
      %v1922 = vld [vmem:[%s9 + $0x130] sm:$0xf]
      %v1923 = vld [vmem:[%s9 + $0x134] sm:$0xff]
      %v1924 = vld [vmem:[%s9 + $0x13c] sm:$0xff]
      %v1925 = vld [vmem:[%s9 + $0x144] sm:$0xff]
      %v1926 = vld [vmem:[%s9 + $0x14c] sm:$0xf]
      %v1927 = vld [vmem:[%s9 + $0x150] sm:$0xff]
      %v1928 = vld [vmem:[%s9 + $0x158] sm:$0xff]
      %v1929 = vld [vmem:[%s9 + $0x160] sm:$0xff]
      %v1930 = vld [vmem:[%s9 + $0x168] sm:$0xf]
      %v1931 = vld [vmem:[%s9 + $0x16c] sm:$0xff]
      %v1932 = vld [vmem:[%s9 + $0x174] sm:$0xff]
      %v1933 = vld [vmem:[%s9 + $0x17c] sm:$0xff]
      %v1934 = vld [vmem:[%s9 + $0x184] sm:$0xf]
      %v1935 = vld [vmem:[%s9 + $0x188] sm:$0xff]
      %v1936 = vld [vmem:[%s9 + $0x190] sm:$0xff]
      %v1937 = vld [vmem:[%s9 + $0x198] sm:$0xff]
      %v1938 = vld [vmem:[%s9 + $0x1a0] sm:$0xf]
      %v1939 = vld [vmem:[%s9 + $0x1a4] sm:$0xff]
      %v1940 = vld [vmem:[%s9 + $0x1ac] sm:$0xff]
      %v1941 = vld [vmem:[%s9 + $0x1b4] sm:$0xff]
      %v1942 = vld [vmem:[%s9 + $0x1bc] sm:$0xf]
      %v1943 = vld [vmem:[%s9 + $0x1c0] sm:$0xff]
      %v1944 = vld [vmem:[%s9 + $0x1c8] sm:$0xff]
      %v1945 = vld [vmem:[%s9 + $0x1d0] sm:$0xff]
      %v1946 = vld [vmem:[%s9 + $0x1d8] sm:$0xf]
      %v1947 = vld [vmem:[%s9 + $0x1dc] sm:$0xff]
      %v1948 = vld [vmem:[%s9 + $0x1e4] sm:$0xff]
      %v1949 = vld [vmem:[%s9 + $0x1ec] sm:$0xff]
      %v1950 = vld [vmem:[%s9 + $0x1f4] sm:$0xf]
      %v1951 = vld [vmem:[%s9 + $0x1f8] sm:$0xff]
      %v1952 = vld [vmem:[%s9 + $0x200] sm:$0xff]
      %v1953 = vld [vmem:[%s9 + $0x208] sm:$0xff]
      %v1954 = vld [vmem:[%s9 + $0x210] sm:$0xf]
      %v1955 = vld [vmem:[%s9 + $0x214] sm:$0xff]
      %v1956 = vld [vmem:[%s9 + $0x21c] sm:$0xff]
      %v1957 = vld [vmem:[%s9 + $0x224] sm:$0xff]
      %v1958 = vld [vmem:[%s9 + $0x22c] sm:$0xf]
      %v1959 = vld [vmem:[%s9 + $0x230] sm:$0xff]
      %v1960 = vld [vmem:[%s9 + $0x238] sm:$0xff]
      %v1961 = vld [vmem:[%s9 + $0x240] sm:$0xff]
      %v1962 = vld [vmem:[%s9 + $0x248] sm:$0xf]
      %v1963 = vld [vmem:[%s9 + $0x24c] sm:$0xff]
      %v1964 = vld [vmem:[%s9 + $0x254] sm:$0xff]
      %v1965 = vld [vmem:[%s9 + $0x25c] sm:$0xff]
      %v1966 = vld [vmem:[%s9 + $0x264] sm:$0xf]
      %v1967 = vld [vmem:[%s9 + $0x268] sm:$0xff]
      %v1968 = vld [vmem:[%s9 + $0x270] sm:$0xff]
      %v1969 = vld [vmem:[%s9 + $0x278] sm:$0xff]
      %v1970 = vld [vmem:[%s9 + $0x280] sm:$0xf]
      %v1971 = vld [vmem:[%s9 + $0x284] sm:$0xff]
      %v1972 = vld [vmem:[%s9 + $0x28c] sm:$0xff]
      %v1973 = vld [vmem:[%s9 + $0x294] sm:$0xff]
      %v1974 = vld [vmem:[%s9 + $0x29c] sm:$0xf]
      %v1975 = vld [vmem:[%s9 + $0x2a0] sm:$0xff]
      %v1976 = vld [vmem:[%s9 + $0x2a8] sm:$0xff]
      %v1977 = vld [vmem:[%s9 + $0x2b0] sm:$0xff]
      %v1978 = vld [vmem:[%s9 + $0x2b8] sm:$0xf]
      %v1979 = vld [vmem:[%s9 + $0x2bc] sm:$0xff]
      %v1980 = vld [vmem:[%s9 + $0x2c4] sm:$0xff]
      %v1981 = vld [vmem:[%s9 + $0x2cc] sm:$0xff]
      %v1982 = vld [vmem:[%s9 + $0x2d4] sm:$0xf]
      %v1983 = vld [vmem:[%s9 + $0x2d8] sm:$0xff]
      %v1984 = vld [vmem:[%s9 + $0x2e0] sm:$0xff]
      %v1985 = vld [vmem:[%s9 + $0x2e8] sm:$0xff]
      %v1986 = vld [vmem:[%s9 + $0x2f0] sm:$0xf]
      %v1987 = vld [vmem:[%s9 + $0x2f4] sm:$0xff]
      %v1988 = vld [vmem:[%s9 + $0x2fc] sm:$0xff]
      %v1989 = vld [vmem:[%s9 + $0x304] sm:$0xff]
      %v1990 = vld [vmem:[%s9 + $0x30c] sm:$0xf]
      %v1991 = vld [vmem:[%s9 + $0x310] sm:$0xff]
      %v1992 = vld [vmem:[%s9 + $0x318] sm:$0xff]
      %v1993 = vld [vmem:[%s9 + $0x320] sm:$0xff]
      %v1994 = vld [vmem:[%s9 + $0x328] sm:$0xf]
      %v1995 = vld [vmem:[%s9 + $0x32c] sm:$0xff]
      %v1996 = vld [vmem:[%s9 + $0x334] sm:$0xff]
      %v1997 = vld [vmem:[%s9 + $0x33c] sm:$0xff]
      %v1998 = vld [vmem:[%s9 + $0x344] sm:$0xf]
      %v1999 = vld [vmem:[%s9 + $0x348] sm:$0xff]
      %v2000 = vld [vmem:[%s9 + $0x350] sm:$0xff]
      %v2001 = vld [vmem:[%s9 + $0x358] sm:$0xff]
      %v2002 = vld [vmem:[%s9 + $0x360] sm:$0xf]
      %v2003 = vld [vmem:[%s9 + $0x364] sm:$0xff]
      %v2004 = vld [vmem:[%s9 + $0x36c] sm:$0xff]
      %v2005 = vld [vmem:[%s9 + $0x374] sm:$0xff]
      %v2006 = vld [vmem:[%s9 + $0x37c] sm:$0xf]
      %v2007 = vld [vmem:[%s10] sm:$0x7f]
      %v2009 = vlaneseq
      %v2010 = vshrl.u32 %v2009, 7
      %v2011 = vsub.s32 0, %v2010
      %v2012 = vrot.slane %v2007, %v2011
      %v2013 = vlaneseq
      %v2014 = vshrl.u32 %v2013, 7
      %v2015 = vsub.s32 1, %v2014
      %v2016 = vrot.slane %v2007, %v2015
      %v2017 = vlaneseq
      %v2018 = vshrl.u32 %v2017, 7
      %v2019 = vsub.s32 2, %v2018
      %v2020 = vrot.slane %v2007, %v2019
      %v2021 = vlaneseq
      %v2022 = vshrl.u32 %v2021, 7
      %v2023 = vsub.s32 3, %v2022
      %v2024 = vrot.slane %v2007, %v2023
      %v2025 = vlaneseq
      %v2026 = vshrl.u32 %v2025, 7
      %v2027 = vsub.s32 4, %v2026
      %v2028 = vrot.slane %v2007, %v2027
      %v2029 = vlaneseq
      %v2030 = vshrl.u32 %v2029, 7
      %v2031 = vsub.s32 5, %v2030
      %v2032 = vrot.slane %v2007, %v2031
      %v2033 = vlaneseq
      %v2034 = vshrl.u32 %v2033, 7
      %v2035 = vsub.s32 6, %v2034
      %v2036 = vrot.slane %v2007, %v2035
      %v2172 = vunpack.c.l.b16 %v1879
      %v2173 = vunpack.c.h.b16 %v1879
      %v2174 = vunpack.c.l.b16 %v1880
      %v2175 = vunpack.c.h.b16 %v1880
      %v2176 = vunpack.c.l.b16 %v1881
      %v2177 = vunpack.c.h.b16 %v1881
      %v2178 = vunpack.c.l.b16 %v1882
      %v2179 = vunpack.c.l.b16 %v1883
      %v2180 = vunpack.c.h.b16 %v1883
      %v2181 = vunpack.c.l.b16 %v1884
      %v2182 = vunpack.c.h.b16 %v1884
      %v2183 = vunpack.c.l.b16 %v1885
      %v2184 = vunpack.c.h.b16 %v1885
      %v2185 = vunpack.c.l.b16 %v1886
      %v2186 = vunpack.c.l.b16 %v1887
      %v2187 = vunpack.c.h.b16 %v1887
      %v2188 = vunpack.c.l.b16 %v1888
      %v2189 = vunpack.c.h.b16 %v1888
      %v2190 = vunpack.c.l.b16 %v1889
      %v2191 = vunpack.c.h.b16 %v1889
      %v2192 = vunpack.c.l.b16 %v1890
      %v2193 = vunpack.c.l.b16 %v1891
      %v2194 = vunpack.c.h.b16 %v1891
      %v2195 = vunpack.c.l.b16 %v1892
      %v2196 = vunpack.c.h.b16 %v1892
      %v2197 = vunpack.c.l.b16 %v1893
      %v2198 = vunpack.c.h.b16 %v1893
      %v2199 = vunpack.c.l.b16 %v1894
      %v2200 = vunpack.c.l.b16 %v1895
      %v2201 = vunpack.c.h.b16 %v1895
      %v2202 = vunpack.c.l.b16 %v1896
      %v2203 = vunpack.c.h.b16 %v1896
      %v2204 = vunpack.c.l.b16 %v1897
      %v2205 = vunpack.c.h.b16 %v1897
      %v2206 = vunpack.c.l.b16 %v1898
      %v2207 = vunpack.c.l.b16 %v1899
      %v2208 = vunpack.c.h.b16 %v1899
      %v2209 = vunpack.c.l.b16 %v1900
      %v2210 = vunpack.c.h.b16 %v1900
      %v2211 = vunpack.c.l.b16 %v1901
      %v2212 = vunpack.c.h.b16 %v1901
      %v2213 = vunpack.c.l.b16 %v1902
      %v2214 = vunpack.c.l.b16 %v1903
      %v2215 = vunpack.c.h.b16 %v1903
      %v2216 = vunpack.c.l.b16 %v1904
      %v2217 = vunpack.c.h.b16 %v1904
      %v2218 = vunpack.c.l.b16 %v1905
      %v2219 = vunpack.c.h.b16 %v1905
      %v2220 = vunpack.c.l.b16 %v1906
      %v2221 = vunpack.c.l.b16 %v1907
      %v2222 = vunpack.c.h.b16 %v1907
      %v2223 = vunpack.c.l.b16 %v1908
      %v2224 = vunpack.c.h.b16 %v1908
      %v2225 = vunpack.c.l.b16 %v1909
      %v2226 = vunpack.c.h.b16 %v1909
      %v2227 = vunpack.c.l.b16 %v1910
      %v2228 = vunpack.c.l.b16 %v1911
      %v2229 = vunpack.c.h.b16 %v1911
      %v2230 = vunpack.c.l.b16 %v1912
      %v2231 = vunpack.c.h.b16 %v1912
      %v2232 = vunpack.c.l.b16 %v1913
      %v2233 = vunpack.c.h.b16 %v1913
      %v2234 = vunpack.c.l.b16 %v1914
      %v2235 = vunpack.c.l.b16 %v1915
      %v2236 = vunpack.c.h.b16 %v1915
      %v2237 = vunpack.c.l.b16 %v1916
      %v2238 = vunpack.c.h.b16 %v1916
      %v2239 = vunpack.c.l.b16 %v1917
      %v2240 = vunpack.c.h.b16 %v1917
      %v2241 = vunpack.c.l.b16 %v1918
      %v2242 = vunpack.c.l.b16 %v1919
      %v2243 = vunpack.c.h.b16 %v1919
      %v2244 = vunpack.c.l.b16 %v1920
      %v2245 = vunpack.c.h.b16 %v1920
      %v2246 = vunpack.c.l.b16 %v1921
      %v2247 = vunpack.c.h.b16 %v1921
      %v2248 = vunpack.c.l.b16 %v1922
      %v2249 = vunpack.c.l.b16 %v1923
      %v2250 = vunpack.c.h.b16 %v1923
      %v2251 = vunpack.c.l.b16 %v1924
      %v2252 = vunpack.c.h.b16 %v1924
      %v2253 = vunpack.c.l.b16 %v1925
      %v2254 = vunpack.c.h.b16 %v1925
      %v2255 = vunpack.c.l.b16 %v1926
      %v2256 = vunpack.c.l.b16 %v1927
      %v2257 = vunpack.c.h.b16 %v1927
      %v2258 = vunpack.c.l.b16 %v1928
      %v2259 = vunpack.c.h.b16 %v1928
      %v2260 = vunpack.c.l.b16 %v1929
      %v2261 = vunpack.c.h.b16 %v1929
      %v2262 = vunpack.c.l.b16 %v1930
      %v2263 = vunpack.c.l.b16 %v1931
      %v2264 = vunpack.c.h.b16 %v1931
      %v2265 = vunpack.c.l.b16 %v1932
      %v2266 = vunpack.c.h.b16 %v1932
      %v2267 = vunpack.c.l.b16 %v1933
      %v2268 = vunpack.c.h.b16 %v1933
      %v2269 = vunpack.c.l.b16 %v1934
      %v2270 = vunpack.c.l.b16 %v1935
      %v2271 = vunpack.c.h.b16 %v1935
      %v2272 = vunpack.c.l.b16 %v1936
      %v2273 = vunpack.c.h.b16 %v1936
      %v2274 = vunpack.c.l.b16 %v1937
      %v2275 = vunpack.c.h.b16 %v1937
      %v2276 = vunpack.c.l.b16 %v1938
      %v2277 = vunpack.c.l.b16 %v1939
      %v2278 = vunpack.c.h.b16 %v1939
      %v2279 = vunpack.c.l.b16 %v1940
      %v2280 = vunpack.c.h.b16 %v1940
      %v2281 = vunpack.c.l.b16 %v1941
      %v2282 = vunpack.c.h.b16 %v1941
      %v2283 = vunpack.c.l.b16 %v1942
      %v2284 = vunpack.c.l.b16 %v1943
      %v2285 = vunpack.c.h.b16 %v1943
      %v2286 = vunpack.c.l.b16 %v1944
      %v2287 = vunpack.c.h.b16 %v1944
      %v2288 = vunpack.c.l.b16 %v1945
      %v2289 = vunpack.c.h.b16 %v1945
      %v2290 = vunpack.c.l.b16 %v1946
      %v2291 = vunpack.c.l.b16 %v1947
      %v2292 = vunpack.c.h.b16 %v1947
      %v2293 = vunpack.c.l.b16 %v1948
      %v2294 = vunpack.c.h.b16 %v1948
      %v2295 = vunpack.c.l.b16 %v1949
      %v2296 = vunpack.c.h.b16 %v1949
      %v2297 = vunpack.c.l.b16 %v1950
      %v2298 = vunpack.c.l.b16 %v1951
      %v2299 = vunpack.c.h.b16 %v1951
      %v2300 = vunpack.c.l.b16 %v1952
      %v2301 = vunpack.c.h.b16 %v1952
      %v2302 = vunpack.c.l.b16 %v1953
      %v2303 = vunpack.c.h.b16 %v1953
      %v2304 = vunpack.c.l.b16 %v1954
      %v2305 = vunpack.c.l.b16 %v1955
      %v2306 = vunpack.c.h.b16 %v1955
      %v2307 = vunpack.c.l.b16 %v1956
      %v2308 = vunpack.c.h.b16 %v1956
      %v2309 = vunpack.c.l.b16 %v1957
      %v2310 = vunpack.c.h.b16 %v1957
      %v2311 = vunpack.c.l.b16 %v1958
      %v2312 = vunpack.c.l.b16 %v1959
      %v2313 = vunpack.c.h.b16 %v1959
      %v2314 = vunpack.c.l.b16 %v1960
      %v2315 = vunpack.c.h.b16 %v1960
      %v2316 = vunpack.c.l.b16 %v1961
      %v2317 = vunpack.c.h.b16 %v1961
      %v2318 = vunpack.c.l.b16 %v1962
      %v2319 = vunpack.c.l.b16 %v1963
      %v2320 = vunpack.c.h.b16 %v1963
      %v2321 = vunpack.c.l.b16 %v1964
      %v2322 = vunpack.c.h.b16 %v1964
      %v2323 = vunpack.c.l.b16 %v1965
      %v2324 = vunpack.c.h.b16 %v1965
      %v2325 = vunpack.c.l.b16 %v1966
      %v2326 = vunpack.c.l.b16 %v1967
      %v2327 = vunpack.c.h.b16 %v1967
      %v2328 = vunpack.c.l.b16 %v1968
      %v2329 = vunpack.c.h.b16 %v1968
      %v2330 = vunpack.c.l.b16 %v1969
      %v2331 = vunpack.c.h.b16 %v1969
      %v2332 = vunpack.c.l.b16 %v1970
      %v2333 = vunpack.c.l.b16 %v1971
      %v2334 = vunpack.c.h.b16 %v1971
      %v2335 = vunpack.c.l.b16 %v1972
      %v2336 = vunpack.c.h.b16 %v1972
      %v2337 = vunpack.c.l.b16 %v1973
      %v2338 = vunpack.c.h.b16 %v1973
      %v2339 = vunpack.c.l.b16 %v1974
      %v2340 = vunpack.c.l.b16 %v1975
      %v2341 = vunpack.c.h.b16 %v1975
      %v2342 = vunpack.c.l.b16 %v1976
      %v2343 = vunpack.c.h.b16 %v1976
      %v2344 = vunpack.c.l.b16 %v1977
      %v2345 = vunpack.c.h.b16 %v1977
      %v2346 = vunpack.c.l.b16 %v1978
      %v2347 = vunpack.c.l.b16 %v1979
      %v2348 = vunpack.c.h.b16 %v1979
      %v2349 = vunpack.c.l.b16 %v1980
      %v2350 = vunpack.c.h.b16 %v1980
      %v2351 = vunpack.c.l.b16 %v1981
      %v2352 = vunpack.c.h.b16 %v1981
      %v2353 = vunpack.c.l.b16 %v1982
      %v2354 = vunpack.c.l.b16 %v1983
      %v2355 = vunpack.c.h.b16 %v1983
      %v2356 = vunpack.c.l.b16 %v1984
      %v2357 = vunpack.c.h.b16 %v1984
      %v2358 = vunpack.c.l.b16 %v1985
      %v2359 = vunpack.c.h.b16 %v1985
      %v2360 = vunpack.c.l.b16 %v1986
      %v2361 = vunpack.c.l.b16 %v1987
      %v2362 = vunpack.c.h.b16 %v1987
      %v2363 = vunpack.c.l.b16 %v1988
      %v2364 = vunpack.c.h.b16 %v1988
      %v2365 = vunpack.c.l.b16 %v1989
      %v2366 = vunpack.c.h.b16 %v1989
      %v2367 = vunpack.c.l.b16 %v1990
      %v2368 = vunpack.c.l.b16 %v1991
      %v2369 = vunpack.c.h.b16 %v1991
      %v2370 = vunpack.c.l.b16 %v1992
      %v2371 = vunpack.c.h.b16 %v1992
      %v2372 = vunpack.c.l.b16 %v1993
      %v2373 = vunpack.c.h.b16 %v1993
      %v2374 = vunpack.c.l.b16 %v1994
      %v2375 = vunpack.c.l.b16 %v1995
      %v2376 = vunpack.c.h.b16 %v1995
      %v2377 = vunpack.c.l.b16 %v1996
      %v2378 = vunpack.c.h.b16 %v1996
      %v2379 = vunpack.c.l.b16 %v1997
      %v2380 = vunpack.c.h.b16 %v1997
      %v2381 = vunpack.c.l.b16 %v1998
      %v2382 = vunpack.c.l.b16 %v1999
      %v2383 = vunpack.c.h.b16 %v1999
      %v2384 = vunpack.c.l.b16 %v2000
      %v2385 = vunpack.c.h.b16 %v2000
      %v2386 = vunpack.c.l.b16 %v2001
      %v2387 = vunpack.c.h.b16 %v2001
      %v2388 = vunpack.c.l.b16 %v2002
      %v2389 = vunpack.c.l.b16 %v2003
      %v2390 = vunpack.c.h.b16 %v2003
      %v2391 = vunpack.c.l.b16 %v2004
      %v2392 = vunpack.c.h.b16 %v2004
      %v2393 = vunpack.c.l.b16 %v2005
      %v2394 = vunpack.c.h.b16 %v2005
      %v2395 = vunpack.c.l.b16 %v2006
      %v2396 = vpack.c.b16 %v2179, %v2172
      %v2397 = vpack.c.b16 %v2180, %v2173
      %v2398 = vpack.c.b16 %v2181, %v2174
      %v2399 = vpack.c.b16 %v2182, %v2175
      %v2400 = vpack.c.b16 %v2183, %v2176
      %v2401 = vpack.c.b16 %v2184, %v2177
      %v2402 = vpack.c.b16 %v2185, %v2178
      %v2403 = vpack.c.b16 %v2193, %v2186
      %v2404 = vpack.c.b16 %v2194, %v2187
      %v2405 = vpack.c.b16 %v2195, %v2188
      %v2406 = vpack.c.b16 %v2196, %v2189
      %v2407 = vpack.c.b16 %v2197, %v2190
      %v2408 = vpack.c.b16 %v2198, %v2191
      %v2409 = vpack.c.b16 %v2199, %v2192
      %v2410 = vpack.c.b16 %v2207, %v2200
      %v2411 = vpack.c.b16 %v2208, %v2201
      %v2412 = vpack.c.b16 %v2209, %v2202
      %v2413 = vpack.c.b16 %v2210, %v2203
      %v2414 = vpack.c.b16 %v2211, %v2204
      %v2415 = vpack.c.b16 %v2212, %v2205
      %v2416 = vpack.c.b16 %v2213, %v2206
      %v2417 = vpack.c.b16 %v2221, %v2214
      %v2418 = vpack.c.b16 %v2222, %v2215
      %v2419 = vpack.c.b16 %v2223, %v2216
      %v2420 = vpack.c.b16 %v2224, %v2217
      %v2421 = vpack.c.b16 %v2225, %v2218
      %v2422 = vpack.c.b16 %v2226, %v2219
      %v2423 = vpack.c.b16 %v2227, %v2220
      %v2424 = vpack.c.b16 %v2235, %v2228
      %v2425 = vpack.c.b16 %v2236, %v2229
      %v2426 = vpack.c.b16 %v2237, %v2230
      %v2427 = vpack.c.b16 %v2238, %v2231
      %v2428 = vpack.c.b16 %v2239, %v2232
      %v2429 = vpack.c.b16 %v2240, %v2233
      %v2430 = vpack.c.b16 %v2241, %v2234
      %v2431 = vpack.c.b16 %v2249, %v2242
      %v2432 = vpack.c.b16 %v2250, %v2243
      %v2433 = vpack.c.b16 %v2251, %v2244
      %v2434 = vpack.c.b16 %v2252, %v2245
      %v2435 = vpack.c.b16 %v2253, %v2246
      %v2436 = vpack.c.b16 %v2254, %v2247
      %v2437 = vpack.c.b16 %v2255, %v2248
      %v2438 = vpack.c.b16 %v2263, %v2256
      %v2439 = vpack.c.b16 %v2264, %v2257
      %v2440 = vpack.c.b16 %v2265, %v2258
      %v2441 = vpack.c.b16 %v2266, %v2259
      %v2442 = vpack.c.b16 %v2267, %v2260
      %v2443 = vpack.c.b16 %v2268, %v2261
      %v2444 = vpack.c.b16 %v2269, %v2262
      %v2445 = vpack.c.b16 %v2277, %v2270
      %v2446 = vpack.c.b16 %v2278, %v2271
      %v2447 = vpack.c.b16 %v2279, %v2272
      %v2448 = vpack.c.b16 %v2280, %v2273
      %v2449 = vpack.c.b16 %v2281, %v2274
      %v2450 = vpack.c.b16 %v2282, %v2275
      %v2451 = vpack.c.b16 %v2283, %v2276
      %v2452 = vpack.c.b16 %v2291, %v2284
      %v2453 = vpack.c.b16 %v2292, %v2285
      %v2454 = vpack.c.b16 %v2293, %v2286
      %v2455 = vpack.c.b16 %v2294, %v2287
      %v2456 = vpack.c.b16 %v2295, %v2288
      %v2457 = vpack.c.b16 %v2296, %v2289
      %v2458 = vpack.c.b16 %v2297, %v2290
      %v2459 = vpack.c.b16 %v2305, %v2298
      %v2460 = vpack.c.b16 %v2306, %v2299
      %v2461 = vpack.c.b16 %v2307, %v2300
      %v2462 = vpack.c.b16 %v2308, %v2301
      %v2463 = vpack.c.b16 %v2309, %v2302
      %v2464 = vpack.c.b16 %v2310, %v2303
      %v2465 = vpack.c.b16 %v2311, %v2304
      %v2466 = vpack.c.b16 %v2319, %v2312
      %v2467 = vpack.c.b16 %v2320, %v2313
      %v2468 = vpack.c.b16 %v2321, %v2314
      %v2469 = vpack.c.b16 %v2322, %v2315
      %v2470 = vpack.c.b16 %v2323, %v2316
      %v2471 = vpack.c.b16 %v2324, %v2317
      %v2472 = vpack.c.b16 %v2325, %v2318
      %v2473 = vpack.c.b16 %v2333, %v2326
      %v2474 = vpack.c.b16 %v2334, %v2327
      %v2475 = vpack.c.b16 %v2335, %v2328
      %v2476 = vpack.c.b16 %v2336, %v2329
      %v2477 = vpack.c.b16 %v2337, %v2330
      %v2478 = vpack.c.b16 %v2338, %v2331
      %v2479 = vpack.c.b16 %v2339, %v2332
      %v2480 = vpack.c.b16 %v2347, %v2340
      %v2481 = vpack.c.b16 %v2348, %v2341
      %v2482 = vpack.c.b16 %v2349, %v2342
      %v2483 = vpack.c.b16 %v2350, %v2343
      %v2484 = vpack.c.b16 %v2351, %v2344
      %v2485 = vpack.c.b16 %v2352, %v2345
      %v2486 = vpack.c.b16 %v2353, %v2346
      %v2487 = vpack.c.b16 %v2361, %v2354
      %v2488 = vpack.c.b16 %v2362, %v2355
      %v2489 = vpack.c.b16 %v2363, %v2356
      %v2490 = vpack.c.b16 %v2364, %v2357
      %v2491 = vpack.c.b16 %v2365, %v2358
      %v2492 = vpack.c.b16 %v2366, %v2359
      %v2493 = vpack.c.b16 %v2367, %v2360
      %v2494 = vpack.c.b16 %v2375, %v2368
      %v2495 = vpack.c.b16 %v2376, %v2369
      %v2496 = vpack.c.b16 %v2377, %v2370
      %v2497 = vpack.c.b16 %v2378, %v2371
      %v2498 = vpack.c.b16 %v2379, %v2372
      %v2499 = vpack.c.b16 %v2380, %v2373
      %v2500 = vpack.c.b16 %v2381, %v2374
      %v2501 = vpack.c.b16 %v2389, %v2382
      %v2502 = vpack.c.b16 %v2390, %v2383
      %v2503 = vpack.c.b16 %v2391, %v2384
      %v2504 = vpack.c.b16 %v2392, %v2385
      %v2505 = vpack.c.b16 %v2393, %v2386
      %v2506 = vpack.c.b16 %v2394, %v2387
      %v2507 = vpack.c.b16 %v2395, %v2388
      %2620 = vmatprep.subr.bf16.mxu0 %v2397
      %2621 = vmatpush1.bf16.msra.mxu0 %v2396
      %2622 = vmatprep.subr.bf16.mxu0 %v2404
      %2623 = vmatpush1.bf16.msra.mxu0 %v2403
      %2624 = vmatprep.subr.bf16.mxu0 %v2411
      %2625 = vmatpush1.bf16.msra.mxu0 %v2410
      %2626 = vmatprep.subr.bf16.mxu0 %v2418
      %2627 = vmatpush1.bf16.msra.mxu0 %v2417
      %2628 = vmatprep.subr.bf16.mxu0 %v2425
      %2629 = vmatpush1.bf16.msra.mxu0 %v2424
      %2630 = vmatprep.subr.bf16.mxu0 %v2432
      %2631 = vmatpush1.bf16.msra.mxu0 %v2431
      %2632 = vmatprep.subr.bf16.mxu0 %v2439
      %2633 = vmatpush1.bf16.msra.mxu0 %v2438
      %2634 = vmatprep.subr.bf16.mxu0 %v2446
      %2635 = vmatpush1.bf16.msra.mxu0 %v2445
      %2636 = vmatprep.subr.bf16.mxu0 %v2453
      %2637 = vmatpush1.bf16.msra.mxu0 %v2452
      %2638 = vmatprep.subr.bf16.mxu0 %v2460
      %2639 = vmatpush1.bf16.msra.mxu0 %v2459
      %2640 = vmatprep.subr.bf16.mxu0 %v2467
      %2641 = vmatpush1.bf16.msra.mxu0 %v2466
      %2642 = vmatprep.subr.bf16.mxu0 %v2474
      %2643 = vmatpush1.bf16.msra.mxu0 %v2473
      %2644 = vmatprep.subr.bf16.mxu0 %v2481
      %2645 = vmatpush1.bf16.msra.mxu0 %v2480
      %2646 = vmatprep.subr.bf16.mxu0 %v2488
      %2647 = vmatpush1.bf16.msra.mxu0 %v2487
      %2648 = vmatprep.subr.bf16.mxu0 %v2495
      %2649 = vmatpush1.bf16.msra.mxu0 %v2494
      %2650 = vmatprep.subr.bf16.mxu0 %v2502
      %2651 = vmatpush1.bf16.msra.mxu0 %v2501
      %2652 = vmatprep.mubr.bf16.mxu0 %v1872
      %2653 = vmatmul.mubr.bf16.gmra.mrb[0].mxu0 %v1871
      %v2654 = vpop.f32.mrb[0].mxu0
      %v2655 = vadd.f32 %v2012, %v2654
      %v2656 = vpop.f32.mrb[0].mxu0
      %v2657 = vadd.f32 %v2016, %v2656
      %v2658 = vpop.f32.mrb[0].mxu0
      %v2659 = vadd.f32 %v2012, %v2658
      %v2660 = vpop.f32.mrb[0].mxu0
      %v2661 = vadd.f32 %v2016, %v2660
      %2662 = vmatprep.mubr.bf16.mxu0 %v1874
      %2663 = vmatmul.mubr.bf16.gmra.mrb[0].mxu0 %v1873
      %v2664 = vpop.f32.mrb[0].mxu0
      %v2665 = vadd.f32 %v2012, %v2664
      %v2666 = vpop.f32.mrb[0].mxu0
      %v2667 = vadd.f32 %v2016, %v2666
      %v2668 = vpop.f32.mrb[0].mxu0
      %v2669 = vadd.f32 %v2012, %v2668
      %v2670 = vpop.f32.mrb[0].mxu0
      %v2671 = vadd.f32 %v2016, %v2670
      %2672 = vmatprep.mubr.bf16.mxu0 %v1876
      %2673 = vmatmul.mubr.bf16.gmra.mrb[0].mxu0 %v1875
      %v2674 = vpop.f32.mrb[0].mxu0
      %v2675 = vadd.f32 %v2012, %v2674
      %v2676 = vpop.f32.mrb[0].mxu0
      %v2677 = vadd.f32 %v2016, %v2676
      %v2678 = vpop.f32.mrb[0].mxu0
      %v2679 = vadd.f32 %v2012, %v2678
      %v2680 = vpop.f32.mrb[0].mxu0
      %v2681 = vadd.f32 %v2016, %v2680
      %2682 = vmatprep.mubr.bf16.mxu0 %v1878
      %2683 = vmatmul.mubr.bf16.gmra.mrb[0].mxu0 %v1877
      %v2684 = vpop.f32.mrb[0].mxu0
      %v2685 = vadd.f32 %v2012, %v2684
      %v2686 = vpop.f32.mrb[0].mxu0
      %v2687 = vadd.f32 %v2016, %v2686
      %v2688 = vpop.f32.mrb[0].mxu0
      %v2689 = vadd.f32 %v2012, %v2688
      %v2690 = vpop.f32.mrb[0].mxu0
      %v2691 = vadd.f32 %v2016, %v2690
      %2692 = vdwg.mxu0
      %2693 = vmatprep.subr.bf16.mxu0 %v2399
      %2694 = vmatpush1.bf16.msra.mxu0 %v2398
      %2695 = vmatprep.subr.bf16.mxu0 %v2406
      %2696 = vmatpush1.bf16.msra.mxu0 %v2405
      %2697 = vmatprep.subr.bf16.mxu0 %v2413
      %2698 = vmatpush1.bf16.msra.mxu0 %v2412
      %2699 = vmatprep.subr.bf16.mxu0 %v2420
      %2700 = vmatpush1.bf16.msra.mxu0 %v2419
      %2701 = vmatprep.subr.bf16.mxu0 %v2427
      %2702 = vmatpush1.bf16.msra.mxu0 %v2426
      %2703 = vmatprep.subr.bf16.mxu0 %v2434
      %2704 = vmatpush1.bf16.msra.mxu0 %v2433
      %2705 = vmatprep.subr.bf16.mxu0 %v2441
      %2706 = vmatpush1.bf16.msra.mxu0 %v2440
      %2707 = vmatprep.subr.bf16.mxu0 %v2448
      %2708 = vmatpush1.bf16.msra.mxu0 %v2447
      %2709 = vmatprep.subr.bf16.mxu0 %v2455
      %2710 = vmatpush1.bf16.msra.mxu0 %v2454
      %2711 = vmatprep.subr.bf16.mxu0 %v2462
      %2712 = vmatpush1.bf16.msra.mxu0 %v2461
      %2713 = vmatprep.subr.bf16.mxu0 %v2469
      %2714 = vmatpush1.bf16.msra.mxu0 %v2468
      %2715 = vmatprep.subr.bf16.mxu0 %v2476
      %2716 = vmatpush1.bf16.msra.mxu0 %v2475
      %2717 = vmatprep.subr.bf16.mxu0 %v2483
      %2718 = vmatpush1.bf16.msra.mxu0 %v2482
      %2719 = vmatprep.subr.bf16.mxu0 %v2490
      %2720 = vmatpush1.bf16.msra.mxu0 %v2489
      %2721 = vmatprep.subr.bf16.mxu0 %v2497
      %2722 = vmatpush1.bf16.msra.mxu0 %v2496
      %2723 = vmatprep.subr.bf16.mxu0 %v2504
      %2724 = vmatpush1.bf16.msra.mxu0 %v2503
      %2725 = vmatprep.mubr.bf16.mxu0 %v1872
      %2726 = vmatmul.mubr.bf16.gmra.mrb[0].mxu0 %v1871
      %v2727 = vpop.f32.mrb[0].mxu0
      %v2728 = vadd.f32 %v2020, %v2727
      %v2729 = vpop.f32.mrb[0].mxu0
      %v2730 = vadd.f32 %v2024, %v2729
      %v2731 = vpop.f32.mrb[0].mxu0
      %v2732 = vadd.f32 %v2020, %v2731
      %v2733 = vpop.f32.mrb[0].mxu0
      %v2734 = vadd.f32 %v2024, %v2733
      %2735 = vmatprep.mubr.bf16.mxu0 %v1874
      %2736 = vmatmul.mubr.bf16.gmra.mrb[0].mxu0 %v1873
      %v2737 = vpop.f32.mrb[0].mxu0
      %v2738 = vadd.f32 %v2020, %v2737
      %v2739 = vpop.f32.mrb[0].mxu0
      %v2740 = vadd.f32 %v2024, %v2739
      %v2741 = vpop.f32.mrb[0].mxu0
      %v2742 = vadd.f32 %v2020, %v2741
      %v2743 = vpop.f32.mrb[0].mxu0
      %v2744 = vadd.f32 %v2024, %v2743
      %2745 = vmatprep.mubr.bf16.mxu0 %v1876
      %2746 = vmatmul.mubr.bf16.gmra.mrb[0].mxu0 %v1875
      %v2747 = vpop.f32.mrb[0].mxu0
      %v2748 = vadd.f32 %v2020, %v2747
      %v2749 = vpop.f32.mrb[0].mxu0
      %v2750 = vadd.f32 %v2024, %v2749
      %v2751 = vpop.f32.mrb[0].mxu0
      %v2752 = vadd.f32 %v2020, %v2751
      %v2753 = vpop.f32.mrb[0].mxu0
      %v2754 = vadd.f32 %v2024, %v2753
      %2755 = vmatprep.mubr.bf16.mxu0 %v1878
      %2756 = vmatmul.mubr.bf16.gmra.mrb[0].mxu0 %v1877
      %v2757 = vpop.f32.mrb[0].mxu0
      %v2758 = vadd.f32 %v2020, %v2757
      %v2759 = vpop.f32.mrb[0].mxu0
      %v2760 = vadd.f32 %v2024, %v2759
      %v2761 = vpop.f32.mrb[0].mxu0
      %v2762 = vadd.f32 %v2020, %v2761
      %v2763 = vpop.f32.mrb[0].mxu0
      %v2764 = vadd.f32 %v2024, %v2763
      %2765 = vdwg.mxu0
      %2766 = vmatprep.subr.bf16.mxu0 %v2401
      %2767 = vmatpush1.bf16.msra.mxu0 %v2400
      %2768 = vmatprep.subr.bf16.mxu0 %v2408
      %2769 = vmatpush1.bf16.msra.mxu0 %v2407
      %2770 = vmatprep.subr.bf16.mxu0 %v2415
      %2771 = vmatpush1.bf16.msra.mxu0 %v2414
      %2772 = vmatprep.subr.bf16.mxu0 %v2422
      %2773 = vmatpush1.bf16.msra.mxu0 %v2421
      %2774 = vmatprep.subr.bf16.mxu0 %v2429
      %2775 = vmatpush1.bf16.msra.mxu0 %v2428
      %2776 = vmatprep.subr.bf16.mxu0 %v2436
      %2777 = vmatpush1.bf16.msra.mxu0 %v2435
      %2778 = vmatprep.subr.bf16.mxu0 %v2443
      %2779 = vmatpush1.bf16.msra.mxu0 %v2442
      %2780 = vmatprep.subr.bf16.mxu0 %v2450
      %2781 = vmatpush1.bf16.msra.mxu0 %v2449
      %2782 = vmatprep.subr.bf16.mxu0 %v2457
      %2783 = vmatpush1.bf16.msra.mxu0 %v2456
      %2784 = vmatprep.subr.bf16.mxu0 %v2464
      %2785 = vmatpush1.bf16.msra.mxu0 %v2463
      %2786 = vmatprep.subr.bf16.mxu0 %v2471
      %2787 = vmatpush1.bf16.msra.mxu0 %v2470
      %2788 = vmatprep.subr.bf16.mxu0 %v2478
      %2789 = vmatpush1.bf16.msra.mxu0 %v2477
      %2790 = vmatprep.subr.bf16.mxu0 %v2485
      %2791 = vmatpush1.bf16.msra.mxu0 %v2484
      %2792 = vmatprep.subr.bf16.mxu0 %v2492
      %2793 = vmatpush1.bf16.msra.mxu0 %v2491
      %2794 = vmatprep.subr.bf16.mxu0 %v2499
      %2795 = vmatpush1.bf16.msra.mxu0 %v2498
      %2796 = vmatprep.subr.bf16.mxu0 %v2506
      %2797 = vmatpush1.bf16.msra.mxu0 %v2505
      %2798 = vmatprep.mubr.bf16.mxu0 %v1872
      %2799 = vmatmul.mubr.bf16.gmra.mrb[0].mxu0 %v1871
      %v2800 = vpop.f32.mrb[0].mxu0
      %v2801 = vadd.f32 %v2028, %v2800
      %v2802 = vpop.f32.mrb[0].mxu0
      %v2803 = vadd.f32 %v2032, %v2802
      %v2804 = vpop.f32.mrb[0].mxu0
      %v2805 = vadd.f32 %v2028, %v2804
      %v2806 = vpop.f32.mrb[0].mxu0
      %v2807 = vadd.f32 %v2032, %v2806
      %2808 = vmatprep.mubr.bf16.mxu0 %v1874
      %2809 = vmatmul.mubr.bf16.gmra.mrb[0].mxu0 %v1873
      %v2810 = vpop.f32.mrb[0].mxu0
      %v2811 = vadd.f32 %v2028, %v2810
      %v2812 = vpop.f32.mrb[0].mxu0
      %v2813 = vadd.f32 %v2032, %v2812
      %v2814 = vpop.f32.mrb[0].mxu0
      %v2815 = vadd.f32 %v2028, %v2814
      %v2816 = vpop.f32.mrb[0].mxu0
      %v2817 = vadd.f32 %v2032, %v2816
      %2818 = vmatprep.mubr.bf16.mxu0 %v1876
      %2819 = vmatmul.mubr.bf16.gmra.mrb[0].mxu0 %v1875
      %v2820 = vpop.f32.mrb[0].mxu0
      %v2821 = vadd.f32 %v2028, %v2820
      %v2822 = vpop.f32.mrb[0].mxu0
      %v2823 = vadd.f32 %v2032, %v2822
      %v2824 = vpop.f32.mrb[0].mxu0
      %v2825 = vadd.f32 %v2028, %v2824
      %v2826 = vpop.f32.mrb[0].mxu0
      %v2827 = vadd.f32 %v2032, %v2826
      %2828 = vmatprep.mubr.bf16.mxu0 %v1878
      %2829 = vmatmul.mubr.bf16.gmra.mrb[0].mxu0 %v1877
      %v2830 = vpop.f32.mrb[0].mxu0
      %v2831 = vadd.f32 %v2028, %v2830
      %v2832 = vpop.f32.mrb[0].mxu0
      %v2833 = vadd.f32 %v2032, %v2832
      %v2834 = vpop.f32.mrb[0].mxu0
      %v2835 = vadd.f32 %v2028, %v2834
      %v2836 = vpop.f32.mrb[0].mxu0
      %v2837 = vadd.f32 %v2032, %v2836
      %2838 = vdwg.mxu0
      %2839 = vmatprep.subr.bf16.mxu0 0
      %2840 = vmatpush1.bf16.msra.mxu0 %v2402
      %2841 = vmatprep.subr.bf16.mxu0 0
      %2842 = vmatpush1.bf16.msra.mxu0 %v2409
      %2843 = vmatprep.subr.bf16.mxu0 0
      %2844 = vmatpush1.bf16.msra.mxu0 %v2416
      %2845 = vmatprep.subr.bf16.mxu0 0
      %2846 = vmatpush1.bf16.msra.mxu0 %v2423
      %2847 = vmatprep.subr.bf16.mxu0 0
      %2848 = vmatpush1.bf16.msra.mxu0 %v2430
      %2849 = vmatprep.subr.bf16.mxu0 0
      %2850 = vmatpush1.bf16.msra.mxu0 %v2437
      %2851 = vmatprep.subr.bf16.mxu0 0
      %2852 = vmatpush1.bf16.msra.mxu0 %v2444
      %2853 = vmatprep.subr.bf16.mxu0 0
      %2854 = vmatpush1.bf16.msra.mxu0 %v2451
      %2855 = vmatprep.subr.bf16.mxu0 0
      %2856 = vmatpush1.bf16.msra.mxu0 %v2458
      %2857 = vmatprep.subr.bf16.mxu0 0
      %2858 = vmatpush1.bf16.msra.mxu0 %v2465
      %2859 = vmatprep.subr.bf16.mxu0 0
      %2860 = vmatpush1.bf16.msra.mxu0 %v2472
      %2861 = vmatprep.subr.bf16.mxu0 0
      %2862 = vmatpush1.bf16.msra.mxu0 %v2479
      %2863 = vmatprep.subr.bf16.mxu0 0
      %2864 = vmatpush1.bf16.msra.mxu0 %v2486
      %2865 = vmatprep.subr.bf16.mxu0 0
      %2866 = vmatpush1.bf16.msra.mxu0 %v2493
      %2867 = vmatprep.subr.bf16.mxu0 0
      %2868 = vmatpush1.bf16.msra.mxu0 %v2500
      %2869 = vmatprep.subr.bf16.mxu0 0
      %2870 = vmatpush1.bf16.msra.mxu0 %v2507
      %2871 = vmatprep.mubr.bf16.mxu0 %v1872
      %2872 = vmatmul.mubr.bf16.gmra.mrb[0].mxu0 %v1871
      %v2873 = vpop.f32.mrb[0].mxu0
      %v2874 = vadd.f32 %v2036, %v2873
      %v2875 = vpop.f32.mrb[0].mxu0
      %v2876 = vpop.f32.mrb[0].mxu0
      %v2877 = vadd.f32 %v2036, %v2876
      %v2878 = vpop.f32.mrb[0].mxu0
      %2879 = vmatprep.mubr.bf16.mxu0 %v1874
      %2880 = vmatmul.mubr.bf16.gmra.mrb[0].mxu0 %v1873
      %v2881 = vpop.f32.mrb[0].mxu0
      %v2882 = vadd.f32 %v2036, %v2881
      %v2883 = vpop.f32.mrb[0].mxu0
      %v2884 = vpop.f32.mrb[0].mxu0
      %v2885 = vadd.f32 %v2036, %v2884
      %v2886 = vpop.f32.mrb[0].mxu0
      %2887 = vmatprep.mubr.bf16.mxu0 %v1876
      %2888 = vmatmul.mubr.bf16.gmra.mrb[0].mxu0 %v1875
      %v2889 = vpop.f32.mrb[0].mxu0
      %v2890 = vadd.f32 %v2036, %v2889
      %v2891 = vpop.f32.mrb[0].mxu0
      %v2892 = vpop.f32.mrb[0].mxu0
      %v2893 = vadd.f32 %v2036, %v2892
      %v2894 = vpop.f32.mrb[0].mxu0
      %2895 = vmatprep.mubr.bf16.mxu0 %v1878
      %2896 = vmatmul.mubr.bf16.gmra.mrb[0].mxu0 %v1877
      %v2897 = vpop.f32.mrb[0].mxu0
      %v2898 = vadd.f32 %v2036, %v2897
      %v2899 = vpop.f32.mrb[0].mxu0
      %v2900 = vpop.f32.mrb[0].mxu0
      %v2901 = vadd.f32 %v2036, %v2900
      %v2902 = vpop.f32.mrb[0].mxu0
      %2903 = vdwg.mxu0
      %v2904 = vxor.u32 %v2655, 2147483648
      %v2905 = vxor.u32 %v2657, 2147483648
      %v2906 = vxor.u32 %v2728, 2147483648
      %v2907 = vxor.u32 %v2730, 2147483648
      %v2908 = vxor.u32 %v2801, 2147483648
      %v2909 = vxor.u32 %v2803, 2147483648
      %v2910 = vxor.u32 %v2874, 2147483648
      %v2911 = vxor.u32 %v2659, 2147483648
      %v2912 = vxor.u32 %v2661, 2147483648
      %v2913 = vxor.u32 %v2732, 2147483648
      %v2914 = vxor.u32 %v2734, 2147483648
      %v2915 = vxor.u32 %v2805, 2147483648
      %v2916 = vxor.u32 %v2807, 2147483648
      %v2917 = vxor.u32 %v2877, 2147483648
      %v2918 = vxor.u32 %v2665, 2147483648
      %v2919 = vxor.u32 %v2667, 2147483648
      %v2920 = vxor.u32 %v2738, 2147483648
      %v2921 = vxor.u32 %v2740, 2147483648
      %v2922 = vxor.u32 %v2811, 2147483648
      %v2923 = vxor.u32 %v2813, 2147483648
      %v2924 = vxor.u32 %v2882, 2147483648
      %v2925 = vxor.u32 %v2669, 2147483648
      %v2926 = vxor.u32 %v2671, 2147483648
      %v2927 = vxor.u32 %v2742, 2147483648
      %v2928 = vxor.u32 %v2744, 2147483648
      %v2929 = vxor.u32 %v2815, 2147483648
      %v2930 = vxor.u32 %v2817, 2147483648
      %v2931 = vxor.u32 %v2885, 2147483648
      %v2932 = vxor.u32 %v2675, 2147483648
      %v2933 = vxor.u32 %v2677, 2147483648
      %v2934 = vxor.u32 %v2748, 2147483648
      %v2935 = vxor.u32 %v2750, 2147483648
      %v2936 = vxor.u32 %v2821, 2147483648
      %v2937 = vxor.u32 %v2823, 2147483648
      %v2938 = vxor.u32 %v2890, 2147483648
      %v2939 = vxor.u32 %v2679, 2147483648
      %v2940 = vxor.u32 %v2681, 2147483648
      %v2941 = vxor.u32 %v2752, 2147483648
      %v2942 = vxor.u32 %v2754, 2147483648
      %v2943 = vxor.u32 %v2825, 2147483648
      %v2944 = vxor.u32 %v2827, 2147483648
      %v2945 = vxor.u32 %v2893, 2147483648
      %v2946 = vxor.u32 %v2685, 2147483648
      %v2947 = vxor.u32 %v2687, 2147483648
      %v2948 = vxor.u32 %v2758, 2147483648
      %v2949 = vxor.u32 %v2760, 2147483648
      %v2950 = vxor.u32 %v2831, 2147483648
      %v2951 = vxor.u32 %v2833, 2147483648
      %v2952 = vxor.u32 %v2898, 2147483648
      %v2953 = vxor.u32 %v2689, 2147483648
      %v2954 = vxor.u32 %v2691, 2147483648
      %v2955 = vxor.u32 %v2762, 2147483648
      %v2956 = vxor.u32 %v2764, 2147483648
      %v2957 = vxor.u32 %v2835, 2147483648
      %v2958 = vxor.u32 %v2837, 2147483648
      %v2959 = vxor.u32 %v2901, 2147483648
      %v2960 = vmul.f32 %v2904, 1.442695
      %v2961 = vpow.pop %v2960
      %v2962 = vmul.f32 %v2905, 1.442695
      %v2963 = vpow.pop %v2962
      %v2964 = vmul.f32 %v2906, 1.442695
      %v2965 = vpow.pop %v2964
      %v2966 = vmul.f32 %v2907, 1.442695
      %v2967 = vpow.pop %v2966
      %v2968 = vmul.f32 %v2908, 1.442695
      %v2969 = vpow.pop %v2968
      %v2970 = vmul.f32 %v2909, 1.442695
      %v2971 = vpow.pop %v2970
      %v2972 = vmul.f32 %v2910, 1.442695
      %v2973 = vpow.pop %v2972
      %v2974 = vmul.f32 %v2911, 1.442695
      %v2975 = vpow.pop %v2974
      %v2976 = vmul.f32 %v2912, 1.442695
      %v2977 = vpow.pop %v2976
      %v2978 = vmul.f32 %v2913, 1.442695
      %v2979 = vpow.pop %v2978
      %v2980 = vmul.f32 %v2914, 1.442695
      %v2981 = vpow.pop %v2980
      %v2982 = vmul.f32 %v2915, 1.442695
      %v2983 = vpow.pop %v2982
      %v2984 = vmul.f32 %v2916, 1.442695
      %v2985 = vpow.pop %v2984
      %v2986 = vmul.f32 %v2917, 1.442695
      %v2987 = vpow.pop %v2986
      %v2988 = vmul.f32 %v2918, 1.442695
      %v2989 = vpow.pop %v2988
      %v2990 = vmul.f32 %v2919, 1.442695
      %v2991 = vpow.pop %v2990
      %v2992 = vmul.f32 %v2920, 1.442695
      %v2993 = vpow.pop %v2992
      %v2994 = vmul.f32 %v2921, 1.442695
      %v2995 = vpow.pop %v2994
      %v2996 = vmul.f32 %v2922, 1.442695
      %v2997 = vpow.pop %v2996
      %v2998 = vmul.f32 %v2923, 1.442695
      %v2999 = vpow.pop %v2998
      %v3000 = vmul.f32 %v2924, 1.442695
      %v3001 = vpow.pop %v3000
      %v3002 = vmul.f32 %v2925, 1.442695
      %v3003 = vpow.pop %v3002
      %v3004 = vmul.f32 %v2926, 1.442695
      %v3005 = vpow.pop %v3004
      %v3006 = vmul.f32 %v2927, 1.442695
      %v3007 = vpow.pop %v3006
      %v3008 = vmul.f32 %v2928, 1.442695
      %v3009 = vpow.pop %v3008
      %v3010 = vmul.f32 %v2929, 1.442695
      %v3011 = vpow.pop %v3010
      %v3012 = vmul.f32 %v2930, 1.442695
      %v3013 = vpow.pop %v3012
      %v3014 = vmul.f32 %v2931, 1.442695
      %v3015 = vpow.pop %v3014
      %v3016 = vmul.f32 %v2932, 1.442695
      %v3017 = vpow.pop %v3016
      %v3018 = vmul.f32 %v2933, 1.442695
      %v3019 = vpow.pop %v3018
      %v3020 = vmul.f32 %v2934, 1.442695
      %v3021 = vpow.pop %v3020
      %v3022 = vmul.f32 %v2935, 1.442695
      %v3023 = vpow.pop %v3022
      %v3024 = vmul.f32 %v2936, 1.442695
      %v3025 = vpow.pop %v3024
      %v3026 = vmul.f32 %v2937, 1.442695
      %v3027 = vpow.pop %v3026
      %v3028 = vmul.f32 %v2938, 1.442695
      %v3029 = vpow.pop %v3028
      %v3030 = vmul.f32 %v2939, 1.442695
      %v3031 = vpow.pop %v3030
      %v3032 = vmul.f32 %v2940, 1.442695
      %v3033 = vpow.pop %v3032
      %v3034 = vmul.f32 %v2941, 1.442695
      %v3035 = vpow.pop %v3034
      %v3036 = vmul.f32 %v2942, 1.442695
      %v3037 = vpow.pop %v3036
      %v3038 = vmul.f32 %v2943, 1.442695
      %v3039 = vpow.pop %v3038
      %v3040 = vmul.f32 %v2944, 1.442695
      %v3041 = vpow.pop %v3040
      %v3042 = vmul.f32 %v2945, 1.442695
      %v3043 = vpow.pop %v3042
      %v3044 = vmul.f32 %v2946, 1.442695
      %v3045 = vpow.pop %v3044
      %v3046 = vmul.f32 %v2947, 1.442695
      %v3047 = vpow.pop %v3046
      %v3048 = vmul.f32 %v2948, 1.442695
      %v3049 = vpow.pop %v3048
      %v3050 = vmul.f32 %v2949, 1.442695
      %v3051 = vpow.pop %v3050
      %v3052 = vmul.f32 %v2950, 1.442695
      %v3053 = vpow.pop %v3052
      %v3054 = vmul.f32 %v2951, 1.442695
      %v3055 = vpow.pop %v3054
      %v3056 = vmul.f32 %v2952, 1.442695
      %v3057 = vpow.pop %v3056
      %v3058 = vmul.f32 %v2953, 1.442695
      %v3059 = vpow.pop %v3058
      %v3060 = vmul.f32 %v2954, 1.442695
      %v3061 = vpow.pop %v3060
      %v3062 = vmul.f32 %v2955, 1.442695
      %v3063 = vpow.pop %v3062
      %v3064 = vmul.f32 %v2956, 1.442695
      %v3065 = vpow.pop %v3064
      %v3066 = vmul.f32 %v2957, 1.442695
      %v3067 = vpow.pop %v3066
      %v3068 = vmul.f32 %v2958, 1.442695
      %v3069 = vpow.pop %v3068
      %v3070 = vmul.f32 %v2959, 1.442695
      %v3071 = vpow.pop %v3070
      %v3072 = vadd.f32 %v2961, 1.0
      %v3073 = vadd.f32 %v2963, 1.0
      %v3074 = vadd.f32 %v2965, 1.0
      %v3075 = vadd.f32 %v2967, 1.0
      %v3076 = vadd.f32 %v2969, 1.0
      %v3077 = vadd.f32 %v2971, 1.0
      %v3078 = vadd.f32 %v2973, 1.0
      %v3079 = vadd.f32 %v2975, 1.0
      %v3080 = vadd.f32 %v2977, 1.0
      %v3081 = vadd.f32 %v2979, 1.0
      %v3082 = vadd.f32 %v2981, 1.0
      %v3083 = vadd.f32 %v2983, 1.0
      %v3084 = vadd.f32 %v2985, 1.0
      %v3085 = vadd.f32 %v2987, 1.0
      %v3086 = vadd.f32 %v2989, 1.0
      %v3087 = vadd.f32 %v2991, 1.0
      %v3088 = vadd.f32 %v2993, 1.0
      %v3089 = vadd.f32 %v2995, 1.0
      %v3090 = vadd.f32 %v2997, 1.0
      %v3091 = vadd.f32 %v2999, 1.0
      %v3092 = vadd.f32 %v3001, 1.0
      %v3093 = vadd.f32 %v3003, 1.0
      %v3094 = vadd.f32 %v3005, 1.0
      %v3095 = vadd.f32 %v3007, 1.0
      %v3096 = vadd.f32 %v3009, 1.0
      %v3097 = vadd.f32 %v3011, 1.0
      %v3098 = vadd.f32 %v3013, 1.0
      %v3099 = vadd.f32 %v3015, 1.0
      %v3100 = vadd.f32 %v3017, 1.0
      %v3101 = vadd.f32 %v3019, 1.0
      %v3102 = vadd.f32 %v3021, 1.0
      %v3103 = vadd.f32 %v3023, 1.0
      %v3104 = vadd.f32 %v3025, 1.0
      %v3105 = vadd.f32 %v3027, 1.0
      %v3106 = vadd.f32 %v3029, 1.0
      %v3107 = vadd.f32 %v3031, 1.0
      %v3108 = vadd.f32 %v3033, 1.0
      %v3109 = vadd.f32 %v3035, 1.0
      %v3110 = vadd.f32 %v3037, 1.0
      %v3111 = vadd.f32 %v3039, 1.0
      %v3112 = vadd.f32 %v3041, 1.0
      %v3113 = vadd.f32 %v3043, 1.0
      %v3114 = vadd.f32 %v3045, 1.0
      %v3115 = vadd.f32 %v3047, 1.0
      %v3116 = vadd.f32 %v3049, 1.0
      %v3117 = vadd.f32 %v3051, 1.0
      %v3118 = vadd.f32 %v3053, 1.0
      %v3119 = vadd.f32 %v3055, 1.0
      %v3120 = vadd.f32 %v3057, 1.0
      %v3121 = vadd.f32 %v3059, 1.0
      %v3122 = vadd.f32 %v3061, 1.0
      %v3123 = vadd.f32 %v3063, 1.0
      %v3124 = vadd.f32 %v3065, 1.0
      %v3125 = vadd.f32 %v3067, 1.0
      %v3126 = vadd.f32 %v3069, 1.0
      %v3127 = vadd.f32 %v3071, 1.0
      %v3128 = vrcp.pop %v3072
      %v3129 = vmul.f32 1.0, %v3128
      %v3130 = vrcp.pop %v3073
      %v3131 = vmul.f32 1.0, %v3130
      %v3132 = vrcp.pop %v3074
      %v3133 = vmul.f32 1.0, %v3132
      %v3134 = vrcp.pop %v3075
      %v3135 = vmul.f32 1.0, %v3134
      %v3136 = vrcp.pop %v3076
      %v3137 = vmul.f32 1.0, %v3136
      %v3138 = vrcp.pop %v3077
      %v3139 = vmul.f32 1.0, %v3138
      %v3140 = vrcp.pop %v3078
      %v3141 = vmul.f32 1.0, %v3140
      %v3142 = vrcp.pop %v3079
      %v3143 = vmul.f32 1.0, %v3142
      %v3144 = vrcp.pop %v3080
      %v3145 = vmul.f32 1.0, %v3144
      %v3146 = vrcp.pop %v3081
      %v3147 = vmul.f32 1.0, %v3146
      %v3148 = vrcp.pop %v3082
      %v3149 = vmul.f32 1.0, %v3148
      %v3150 = vrcp.pop %v3083
      %v3151 = vmul.f32 1.0, %v3150
      %v3152 = vrcp.pop %v3084
      %v3153 = vmul.f32 1.0, %v3152
      %v3154 = vrcp.pop %v3085
      %v3155 = vmul.f32 1.0, %v3154
      %v3156 = vrcp.pop %v3086
      %v3157 = vmul.f32 1.0, %v3156
      %v3158 = vrcp.pop %v3087
      %v3159 = vmul.f32 1.0, %v3158
      %v3160 = vrcp.pop %v3088
      %v3161 = vmul.f32 1.0, %v3160
      %v3162 = vrcp.pop %v3089
      %v3163 = vmul.f32 1.0, %v3162
      %v3164 = vrcp.pop %v3090
      %v3165 = vmul.f32 1.0, %v3164
      %v3166 = vrcp.pop %v3091
      %v3167 = vmul.f32 1.0, %v3166
      %v3168 = vrcp.pop %v3092
      %v3169 = vmul.f32 1.0, %v3168
      %v3170 = vrcp.pop %v3093
      %v3171 = vmul.f32 1.0, %v3170
      %v3172 = vrcp.pop %v3094
      %v3173 = vmul.f32 1.0, %v3172
      %v3174 = vrcp.pop %v3095
      %v3175 = vmul.f32 1.0, %v3174
      %v3176 = vrcp.pop %v3096
      %v3177 = vmul.f32 1.0, %v3176
      %v3178 = vrcp.pop %v3097
      %v3179 = vmul.f32 1.0, %v3178
      %v3180 = vrcp.pop %v3098
      %v3181 = vmul.f32 1.0, %v3180
      %v3182 = vrcp.pop %v3099
      %v3183 = vmul.f32 1.0, %v3182
      %v3184 = vrcp.pop %v3100
      %v3185 = vmul.f32 1.0, %v3184
      %v3186 = vrcp.pop %v3101
      %v3187 = vmul.f32 1.0, %v3186
      %v3188 = vrcp.pop %v3102
      %v3189 = vmul.f32 1.0, %v3188
      %v3190 = vrcp.pop %v3103
      %v3191 = vmul.f32 1.0, %v3190
      %v3192 = vrcp.pop %v3104
      %v3193 = vmul.f32 1.0, %v3192
      %v3194 = vrcp.pop %v3105
      %v3195 = vmul.f32 1.0, %v3194
      %v3196 = vrcp.pop %v3106
      %v3197 = vmul.f32 1.0, %v3196
      %v3198 = vrcp.pop %v3107
      %v3199 = vmul.f32 1.0, %v3198
      %v3200 = vrcp.pop %v3108
      %v3201 = vmul.f32 1.0, %v3200
      %v3202 = vrcp.pop %v3109
      %v3203 = vmul.f32 1.0, %v3202
      %v3204 = vrcp.pop %v3110
      %v3205 = vmul.f32 1.0, %v3204
      %v3206 = vrcp.pop %v3111
      %v3207 = vmul.f32 1.0, %v3206
      %v3208 = vrcp.pop %v3112
      %v3209 = vmul.f32 1.0, %v3208
      %v3210 = vrcp.pop %v3113
      %v3211 = vmul.f32 1.0, %v3210
      %v3212 = vrcp.pop %v3114
      %v3213 = vmul.f32 1.0, %v3212
      %v3214 = vrcp.pop %v3115
      %v3215 = vmul.f32 1.0, %v3214
      %v3216 = vrcp.pop %v3116
      %v3217 = vmul.f32 1.0, %v3216
      %v3218 = vrcp.pop %v3117
      %v3219 = vmul.f32 1.0, %v3218
      %v3220 = vrcp.pop %v3118
      %v3221 = vmul.f32 1.0, %v3220
      %v3222 = vrcp.pop %v3119
      %v3223 = vmul.f32 1.0, %v3222
      %v3224 = vrcp.pop %v3120
      %v3225 = vmul.f32 1.0, %v3224
      %v3226 = vrcp.pop %v3121
      %v3227 = vmul.f32 1.0, %v3226
      %v3228 = vrcp.pop %v3122
      %v3229 = vmul.f32 1.0, %v3228
      %v3230 = vrcp.pop %v3123
      %v3231 = vmul.f32 1.0, %v3230
      %v3232 = vrcp.pop %v3124
      %v3233 = vmul.f32 1.0, %v3232
      %v3234 = vrcp.pop %v3125
      %v3235 = vmul.f32 1.0, %v3234
      %v3236 = vrcp.pop %v3126
      %v3237 = vmul.f32 1.0, %v3236
      %v3238 = vrcp.pop %v3127
      %v3239 = vmul.f32 1.0, %v3238
      %v3240 = vpack.c.bf16 %v3143, %v3129
      %v3241 = vpack.c.bf16 %v3145, %v3131
      %v3242 = vpack.c.bf16 %v3147, %v3133
      %v3243 = vpack.c.bf16 %v3149, %v3135
      %v3244 = vpack.c.bf16 %v3151, %v3137
      %v3245 = vpack.c.bf16 %v3153, %v3139
      %v3246 = vpack.c.bf16 %v3155, %v3141
      %v3247 = vpack.c.bf16 %v3171, %v3157
      %v3248 = vpack.c.bf16 %v3173, %v3159
      %v3249 = vpack.c.bf16 %v3175, %v3161
      %v3250 = vpack.c.bf16 %v3177, %v3163
      %v3251 = vpack.c.bf16 %v3179, %v3165
      %v3252 = vpack.c.bf16 %v3181, %v3167
      %v3253 = vpack.c.bf16 %v3183, %v3169
      %v3254 = vpack.c.bf16 %v3199, %v3185
      %v3255 = vpack.c.bf16 %v3201, %v3187
      %v3256 = vpack.c.bf16 %v3203, %v3189
      %v3257 = vpack.c.bf16 %v3205, %v3191
      %v3258 = vpack.c.bf16 %v3207, %v3193
      %v3259 = vpack.c.bf16 %v3209, %v3195
      %v3260 = vpack.c.bf16 %v3211, %v3197
      %v3261 = vpack.c.bf16 %v3227, %v3213
      %v3262 = vpack.c.bf16 %v3229, %v3215
      %v3263 = vpack.c.bf16 %v3231, %v3217
      %v3264 = vpack.c.bf16 %v3233, %v3219
      %v3265 = vpack.c.bf16 %v3235, %v3221
      %v3266 = vpack.c.bf16 %v3237, %v3223
      %v3267 = vpack.c.bf16 %v3239, %v3225
      %v3296 = vunpack.c.l.b16 %v3240
      %v3297 = vunpack.c.l.b16 %v3241
      %v3298 = vunpack.c.l.b16 %v3242
      %v3299 = vunpack.c.l.b16 %v3243
      %v3300 = vunpack.c.l.b16 %v3244
      %v3301 = vunpack.c.l.b16 %v3245
      %v3302 = vunpack.c.l.b16 %v3246
      %v3303 = vunpack.c.h.b16 %v3240
      %v3304 = vunpack.c.h.b16 %v3241
      %v3305 = vunpack.c.h.b16 %v3242
      %v3306 = vunpack.c.h.b16 %v3243
      %v3307 = vunpack.c.h.b16 %v3244
      %v3308 = vunpack.c.h.b16 %v3245
      %v3309 = vunpack.c.h.b16 %v3246
      %v3310 = vunpack.c.l.b16 %v3247
      %v3311 = vunpack.c.l.b16 %v3248
      %v3312 = vunpack.c.l.b16 %v3249
      %v3313 = vunpack.c.l.b16 %v3250
      %v3314 = vunpack.c.l.b16 %v3251
      %v3315 = vunpack.c.l.b16 %v3252
      %v3316 = vunpack.c.l.b16 %v3253
      %v3317 = vunpack.c.h.b16 %v3247
      %v3318 = vunpack.c.h.b16 %v3248
      %v3319 = vunpack.c.h.b16 %v3249
      %v3320 = vunpack.c.h.b16 %v3250
      %v3321 = vunpack.c.h.b16 %v3251
      %v3322 = vunpack.c.h.b16 %v3252
      %v3323 = vunpack.c.h.b16 %v3253
      %v3324 = vunpack.c.l.b16 %v3254
      %v3325 = vunpack.c.l.b16 %v3255
      %v3326 = vunpack.c.l.b16 %v3256
      %v3327 = vunpack.c.l.b16 %v3257
      %v3328 = vunpack.c.l.b16 %v3258
      %v3329 = vunpack.c.l.b16 %v3259
      %v3330 = vunpack.c.l.b16 %v3260
      %v3331 = vunpack.c.h.b16 %v3254
      %v3332 = vunpack.c.h.b16 %v3255
      %v3333 = vunpack.c.h.b16 %v3256
      %v3334 = vunpack.c.h.b16 %v3257
      %v3335 = vunpack.c.h.b16 %v3258
      %v3336 = vunpack.c.h.b16 %v3259
      %v3337 = vunpack.c.h.b16 %v3260
      %v3338 = vunpack.c.l.b16 %v3261
      %v3339 = vunpack.c.l.b16 %v3262
      %v3340 = vunpack.c.l.b16 %v3263
      %v3341 = vunpack.c.l.b16 %v3264
      %v3342 = vunpack.c.l.b16 %v3265
      %v3343 = vunpack.c.l.b16 %v3266
      %v3344 = vunpack.c.l.b16 %v3267
      %v3345 = vunpack.c.h.b16 %v3261
      %v3346 = vunpack.c.h.b16 %v3262
      %v3347 = vunpack.c.h.b16 %v3263
      %v3348 = vunpack.c.h.b16 %v3264
      %v3349 = vunpack.c.h.b16 %v3265
      %v3350 = vunpack.c.h.b16 %v3266
      %v3351 = vunpack.c.h.b16 %v3267
      %v3352 = vpack.c.b16 %v3297, %v3296
      %v3353 = vpack.c.b16 %v3299, %v3298
      %v3354 = vpack.c.b16 %v3301, %v3300
      %v3355 = vpack.c.b16 %v3302, %v3302
      %v3356 = vpack.c.b16 %v3304, %v3303
      %v3357 = vpack.c.b16 %v3306, %v3305
      %v3358 = vpack.c.b16 %v3308, %v3307
      %v3359 = vpack.c.b16 %v3309, %v3309
      %v3360 = vpack.c.b16 %v3311, %v3310
      %v3361 = vpack.c.b16 %v3313, %v3312
      %v3362 = vpack.c.b16 %v3315, %v3314
      %v3363 = vpack.c.b16 %v3316, %v3316
      %v3364 = vpack.c.b16 %v3318, %v3317
      %v3365 = vpack.c.b16 %v3320, %v3319
      %v3366 = vpack.c.b16 %v3322, %v3321
      %v3367 = vpack.c.b16 %v3323, %v3323
      %v3368 = vpack.c.b16 %v3325, %v3324
      %v3369 = vpack.c.b16 %v3327, %v3326
      %v3370 = vpack.c.b16 %v3329, %v3328
      %v3371 = vpack.c.b16 %v3330, %v3330
      %v3372 = vpack.c.b16 %v3332, %v3331
      %v3373 = vpack.c.b16 %v3334, %v3333
      %v3374 = vpack.c.b16 %v3336, %v3335
      %v3375 = vpack.c.b16 %v3337, %v3337
      %v3376 = vpack.c.b16 %v3339, %v3338
      %v3377 = vpack.c.b16 %v3341, %v3340
      %v3378 = vpack.c.b16 %v3343, %v3342
      %v3379 = vpack.c.b16 %v3344, %v3344
      %v3380 = vpack.c.b16 %v3346, %v3345
      %v3381 = vpack.c.b16 %v3348, %v3347
      %v3382 = vpack.c.b16 %v3350, %v3349
      %v3383 = vpack.c.b16 %v3351, %v3351
      %3416 = vst [vmem:[%s393] sm:$0xff] %v3352
      %3417 = vst [vmem:[%s393 + $0x8] sm:$0xff] %v3353
      %3418 = vst [vmem:[%s393 + $0x10] sm:$0xff] %v3354
      %vm3419 = vcmask 125952
      %3420 = vst.msk [vmem:[%s393 + $0x18] sm:$0xf] %vm3419, %v3355
      %3421 = vst [vmem:[%s393 + $0x1c] sm:$0xff] %v3356
      %3422 = vst [vmem:[%s393 + $0x24] sm:$0xff] %v3357
      %3423 = vst [vmem:[%s393 + $0x2c] sm:$0xff] %v3358
      %3424 = vst.msk [vmem:[%s393 + $0x34] sm:$0xf] %vm3419, %v3359
      %3425 = vst [vmem:[%s393 + $0x38] sm:$0xff] %v3360
      %3426 = vst [vmem:[%s393 + $0x40] sm:$0xff] %v3361
      %3427 = vst [vmem:[%s393 + $0x48] sm:$0xff] %v3362
      %3428 = vst.msk [vmem:[%s393 + $0x50] sm:$0xf] %vm3419, %v3363
      %3429 = vst [vmem:[%s393 + $0x54] sm:$0xff] %v3364
      %3430 = vst [vmem:[%s393 + $0x5c] sm:$0xff] %v3365
      %3431 = vst [vmem:[%s393 + $0x64] sm:$0xff] %v3366
      %3432 = vst.msk [vmem:[%s393 + $0x6c] sm:$0xf] %vm3419, %v3367
      %3433 = vst [vmem:[%s393 + $0x70] sm:$0xff] %v3368
      %3434 = vst [vmem:[%s393 + $0x78] sm:$0xff] %v3369
      %3435 = vst [vmem:[%s393 + $0x80] sm:$0xff] %v3370
      %3436 = vst.msk [vmem:[%s393 + $0x88] sm:$0xf] %vm3419, %v3371
      %3437 = vst [vmem:[%s393 + $0x8c] sm:$0xff] %v3372
      %3438 = vst [vmem:[%s393 + $0x94] sm:$0xff] %v3373
      %3439 = vst [vmem:[%s393 + $0x9c] sm:$0xff] %v3374
      %3440 = vst.msk [vmem:[%s393 + $0xa4] sm:$0xf] %vm3419, %v3375
      %3441 = vst [vmem:[%s393 + $0xa8] sm:$0xff] %v3376
      %3442 = vst [vmem:[%s393 + $0xb0] sm:$0xff] %v3377
      %3443 = vst [vmem:[%s393 + $0xb8] sm:$0xff] %v3378
      %3444 = vst.msk [vmem:[%s393 + $0xc0] sm:$0xf] %vm3419, %v3379
      %3445 = vst [vmem:[%s393 + $0xc4] sm:$0xff] %v3380
      %3446 = vst [vmem:[%s393 + $0xcc] sm:$0xff] %v3381
      %3447 = vst [vmem:[%s393 + $0xd4] sm:$0xff] %v3382
      %3448 = vst.msk [vmem:[%s393 + $0xdc] sm:$0xf] %vm3419, %v3383
      %s3449 = smul.u32 8, %s22
      %p3450 = scmp.lt.s32.totalorder %s3449, 31
      %s3451 = scalar_select %p3450, %s3449, 31
      %s3452 = smul.addr %s3451, 7
      %s3453 = smul.addr %s3452, 4
      %s3454 = scalar_lea.vmem %s11, %s3453
      // Predicated region
      $region65: #{autoencoder_forward.1} parent=63 // pred_check
        %p3455 = pneg %p276
      $region66: #{autoencoder_forward.1} parent=63 // pred_check_branch
        %3457 = sbr.rel (%p3455) target = $region68
      $region67: #{autoencoder_forward.1} parent=63 // pred_region
        %s3458 = smul.u32 8, %s22
      $region68: #{autoencoder_forward.1} parent=63 // pred_fallthru
        _
    $region64: #{autoencoder_forward.1} parent=5 // pred_fallthru
      _
    %p3459 = scmp.le.s32.totalorder 2, %s17
    // Predicated region
    $region69: #{autoencoder_forward.1} parent=5 // pred_check
      %p3460 = pneg %p3459
    $region70: #{autoencoder_forward.1} parent=5 // pred_check_branch
      %3462 = sbr.rel (%p3460) target = $region72
    $region71: #{autoencoder_forward.1} parent=5 // pred_region
      %s3463 = ssub.s32 %s17, 2
      // Predicated region
      $region73: #{autoencoder_forward.1} parent=71 // pred_check
        %p3464 = pneg %p282
      $region74: #{autoencoder_forward.1} parent=71 // pred_check_branch
        %3466 = sbr.rel (%p3464) target = $region76
      $region75: #{autoencoder_forward.1} parent=71 // pred_region
        %s3467 = smul.u32 8, %s23
        %p3468 = scmp.lt.s32.totalorder %s3467, 31
        %s3469 = scalar_select %p3468, %s3467, 31
        %s3470 = smul.addr %s3469, 7
        %s3471 = smul.addr %s3470, 4
        %s3472 = scalar_lea.vmem %s11, %s3471
      $region76: #{autoencoder_forward.1} parent=71 // pred_fallthru
        _
    $region72: #{autoencoder_forward.1} parent=5 // pred_fallthru
      _
  $region6: #{autoencoder_forward.1} parent=0 // loop_footer
    %s21 = sadd.s32 1, %s17
  $region7: #{autoencoder_forward.1} parent=0 // loop_footer_branch
    %16 = sbr.rel target = $region3
  $region8: #{autoencoder_forward.1} parent=0 // loop_exit
    _

</llo_original>
